<compile_context>
chip_gen: v7x
topology: tpu7x:2x2x1
jax: 0.10.0
libtpu: 0.0.40
codegen_flags: <defaults>
</compile_context>

<pallas_src>
import jax
import jax.numpy as jnp
from jax import lax
from jax.experimental import pallas as pl
from jax.experimental.pallas import tpu as pltpu

_EPS = 1e-5                      # nn.InstanceNorm2d default eps
_INV_SQRT2 = 0.7071067811865475  # 1/sqrt(2) for exact GELU


def _replicate_pad(xp_ref, img):
    """Write `img` (H, W, C) into xp_ref (H+2, W+2, C) with a replicate halo."""
    H, W = img.shape[0], img.shape[1]
    xp_ref[1:H + 1, 1:W + 1, :] = img                       # interior
    xp_ref[0:1, 1:W + 1, :] = img[0:1]                      # top row
    xp_ref[H + 1:H + 2, 1:W + 1, :] = img[H - 1:H]          # bottom row
    xp_ref[:, 0:1, :] = xp_ref[:, 1:2, :]                   # left col  (+corners)
    xp_ref[:, W + 1:W + 2, :] = xp_ref[:, W:W + 1, :]       # right col (+corners)


def _conv_in_gelu(xp_ref, w_ref):
    """3x3 conv (on replicate-padded VMEM image) + InstanceNorm2d + exact GELU.

    xp_ref : (H+2, W+2, C)  padded image, f32 VMEM scratch
    w_ref  : (9*C, Cout)    weights with rows ordered (ky, kx, ci), f32
    returns (Cout, H*W) float32 — lane-dense (spatial in the lane dim).
    Note: no conv bias — it is cancelled exactly by the affine-free IN below.
    """
    Hp, Wp, C = xp_ref.shape
    H, W = Hp - 2, Wp - 2
    HW = H * W

    # im2col: 9 shifted (H*W, C) patches concatenated along the contraction
    # dim -> a single MXU matmul with K = 9*C (instead of 9 tiny K=C matmuls).
    patches = [xp_ref[ky:ky + H, kx:kx + W, :].reshape(HW, C)
               for ky in range(3) for kx in range(3)]
    p = jnp.concatenate(patches, axis=1)                                # (HW, 9C) f32
    acc = jnp.dot(p, w_ref[...], preferred_element_type=jnp.float32)   # (HW, Cout)

    # Lane-dense orientation for the normalization / activation / store.
    z = acc.T                                                           # (Cout, HW)

    # InstanceNorm2d (affine=False): one-pass moments over the spatial axis.
    inv_n = 1.0 / HW
    mean = jnp.sum(z, axis=1, keepdims=True) * inv_n
    msq = jnp.sum(z * z, axis=1, keepdims=True) * inv_n
    var = jnp.maximum(msq - mean * mean, 0.0)        # guard tiny cancellation
    y = (z - mean) * lax.rsqrt(var + _EPS)

    # exact (erf-based) GELU
    return 0.5 * y * (1.0 + lax.erf(y * _INV_SQRT2))


def _convblock_kernel(x_ref, w1_ref, w2_ref, o_ref, xp1_ref, xp2_ref):
    """Fused ConvBlock: conv->IN->GELU twice, intermediate kept in VMEM.

    x_ref  : (1, H, W, Cin)   one batch element (NHWC)
    w1_ref : (9*Cin,  C1) f32
    w2_ref : (9*C1,   C2) f32
    o_ref  : (1, C2, H*W) f32 (lane-dense output slab)
    xp1_ref: (H+2, W+2, Cin) f32 scratch (stage-1 halo)
    xp2_ref: (H+2, W+2, C1)  f32 scratch (stage-2 halo)
    """
    H, W = x_ref.shape[1], x_ref.shape[2]
    c1 = w1_ref.shape[1]

    # ---- stage 1: conv1 -> IN -> GELU ----
    _replicate_pad(xp1_ref, x_ref[0])
    a1 = _conv_in_gelu(xp1_ref, w1_ref)               # (C1, H*W) f32, stays in VMEM

    # ---- stage 2: conv2 -> IN -> GELU ----
    _replicate_pad(xp2_ref, a1.T.reshape(H, W, c1))   # re-halo the activation in VMEM
    a2 = _conv_in_gelu(xp2_ref, w2_ref)               # (C2, H*W) f32

    o_ref[...] = a2.reshape(o_ref.shape).astype(o_ref.dtype)


def convblock_forward(x_nchw, params):
    """ConvBlock.forward.  Accepts / returns PyTorch-style NCHW tensors."""
    N, Cin, H, W = x_nchw.shape
    w1, w2 = params["w1"], params["w2"]
    Cout = w1.shape[3]
    assert w1.shape == (3, 3, Cin, Cout) and w2.shape == (3, 3, Cout, Cout)

    # Layout plumbing only (not compute hoisting):
    #   NCHW -> NHWC so the in-kernel halo scratch is (H+2, W+2, C);
    #   HWIO (3,3,Ci,Co) -> (9*Ci, Co) f32, row order (ky, kx, ci) matching the
    #   kernel's patch concatenation order.
    x_nhwc = jnp.transpose(x_nchw, (0, 2, 3, 1)).astype(jnp.float32)
    w1k = w1.reshape(9 * Cin, Cout).astype(jnp.float32)
    w2k = w2.reshape(9 * Cout, Cout).astype(jnp.float32)
    # params["b1"] / params["b2"] are intentionally unused: a per-channel conv
    # bias is exactly cancelled by the affine-free InstanceNorm mean subtraction.

    Hp, Wp = H + 2, W + 2
    HW = H * W
    flops = 2 * N * HW * 9 * (Cin * Cout + Cout * Cout)
    transcendentals = 2 * N * Cout * HW                       # erf per element/stage
    bytes_accessed = (x_nhwc.size * 4 + w1k.size * 4 + w2k.size * 4
                      + N * Cout * HW * 4)

    out_flat = pl.pallas_call(
        _convblock_kernel,
        out_shape=jax.ShapeDtypeStruct((N, Cout, HW), jnp.float32),
        grid_spec=pltpu.PrefetchScalarGridSpec(
            num_scalar_prefetch=0,
            grid=(N,),                                        # one image per grid step
            in_specs=[
                pl.BlockSpec((1, H, W, Cin), lambda n: (n, 0, 0, 0)),
                # weights: constant block index -> stay VMEM-resident across steps
                pl.BlockSpec((9 * Cin, Cout), lambda n: (0, 0)),
                pl.BlockSpec((9 * Cout, Cout), lambda n: (0, 0)),
            ],
            # lane-dense output slab: last dim H*W is a multiple of 128
            out_specs=pl.BlockSpec((1, Cout, HW), lambda n: (n, 0, 0)),
            scratch_shapes=[
                pltpu.VMEM((Hp, Wp, Cin), jnp.float32),       # stage-1 halo
                pltpu.VMEM((Hp, Wp, Cout), jnp.float32),      # stage-2 halo
            ],
        ),
        compiler_params=pltpu.CompilerParams(
            dimension_semantics=("parallel",),
            vmem_limit_bytes=32 * 1024 * 1024,
        ),
        cost_estimate=pl.CostEstimate(
            flops=flops,
            transcendentals=transcendentals,
            bytes_accessed=bytes_accessed,
        ),
    )(x_nhwc, w1k, w2k)

    return out_flat.reshape(N, Cout, H, W)                    # -> NCHW


def _reference(x_nchw, params):
    """Pure-JAX reference of the same forward pass (all f32)."""
    def stage(x_nhwc, w, b):
        xp = jnp.pad(x_nhwc, ((0, 0), (1, 1), (1, 1), (0, 0)), mode="edge")
        y = lax.conv_general_dilated(
            xp.astype(jnp.float32), w.astype(jnp.float32),
            window_strides=(1, 1), padding="VALID",
            dimension_numbers=("NHWC", "HWIO", "NHWC"),
            preferred_element_type=jnp.float32)
        y = y + b.reshape(1, 1, 1, -1)                        # cancelled by IN below
        mean = jnp.mean(y, axis=(1, 2), keepdims=True)
        var = jnp.mean((y - mean) ** 2, axis=(1, 2), keepdims=True)
        y = (y - mean) * lax.rsqrt(var + _EPS)
        return 0.5 * y * (1.0 + lax.erf(y * _INV_SQRT2))

    x = jnp.transpose(x_nchw, (0, 2, 3, 1))
    x = stage(x, params["w1"], params["b1"])
    x = stage(x, params["w2"], params["b2"])
    return jnp.transpose(x, (0, 3, 1, 2))


if __name__ == "__main__":
    N, Cin, Cout, H, W = 2, 4, 8, 16, 16
    key = jax.random.PRNGKey(0)
    kx, k1, k2, k3, k4 = jax.random.split(key, 5)

    x = jax.random.normal(kx, (N, Cin, H, W), jnp.float32)    # NCHW, like PyTorch
    params = {
        "w1": 0.2 * jax.random.normal(k1, (3, 3, Cin, Cout), jnp.float32),
        "b1": 0.1 * jax.random.normal(k2, (Cout,), jnp.float32),
        "w2": 0.2 * jax.random.normal(k3, (3, 3, Cout, Cout), jnp.float32),
        "b2": 0.1 * jax.random.normal(k4, (Cout,), jnp.float32),
    }

    out = jax.block_until_ready(convblock_forward(x, params))
    assert out.shape == (N, Cout, H, W), out.shape

    ref = jax.block_until_ready(_reference(x, params))
    err = float(jnp.max(jnp.abs(out - ref)))
    # All-f32 matmuls in both the kernel and the reference: disagreement is
    # only accumulation-order rounding (~1e-5); layout / indexing bugs would
    # produce O(1) errors and are still caught.
    assert err < 2e-4, f"max abs error too large: {err}"

    print("KERNEL_OK")
</pallas_src>

<mosaic_0001>
module attributes {stable_mosaic.version = 11 : i64} {
  func.func @_convblock_kernel(%arg0: i32, %arg1: memref<1x16x16x4xf32, #tpu.memory_space<vmem>>, %arg2: memref<36x8xf32, #tpu.memory_space<vmem>>, %arg3: memref<72x8xf32, #tpu.memory_space<vmem>>, %arg4: memref<1x8x256xf32, #tpu.memory_space<vmem>>, %arg5: memref<18x18x4xf32, #tpu.memory_space<vmem>>, %arg6: memref<18x18x8xf32, #tpu.memory_space<vmem>>) attributes {dimension_semantics = [#tpu.dimension_semantics<parallel>], iteration_bounds = array<i64: 2>, scalar_prefetch = 0 : i64, scratch_operands = 2 : i64, tpu.core_type = #tpu.core_type<tc>, window_params = [{transform_indices = @transform_0, window_bounds = array<i64: 1, 16, 16, 4>}, {pipeline_mode = #tpu.pipeline_mode<synchronous>, transform_indices = @transform_1, window_bounds = array<i64: 36, 8>}, {pipeline_mode = #tpu.pipeline_mode<synchronous>, transform_indices = @transform_2, window_bounds = array<i64: 72, 8>}, {transform_indices = @transform_3, window_bounds = array<i64: 1, 8, 256>}]} {
    %c0 = arith.constant 0 : index
    %c0_0 = arith.constant 0 : index
    %c0_1 = arith.constant 0 : index
    %c0_2 = arith.constant 0 : index
    %0 = vector.load %arg1[%c0, %c0_0, %c0_1, %c0_2] : memref<1x16x16x4xf32, #tpu.memory_space<vmem>>, vector<1x16x16x4xf32>
    %1 = vector.shape_cast %0 : vector<1x16x16x4xf32> to vector<16x16x4xf32>
    %c1 = arith.constant 1 : index
    %c1_3 = arith.constant 1 : index
    %c0_4 = arith.constant 0 : index
    %2 = vector.load %arg5[%c1, %c1_3, %c0_4] : memref<18x18x4xf32, #tpu.memory_space<vmem>>, vector<16x16x4xf32>
    tpu.vector_store %arg5[%c1, %c1_3, %c0_4], %1 {strides = array<i32>} : memref<18x18x4xf32, #tpu.memory_space<vmem>>, vector<16x16x4xf32>,
    %3 = vector.extract_strided_slice %1 {offsets = [0, 0, 0], sizes = [1, 16, 4], strides = [1, 1, 1]} : vector<16x16x4xf32> to vector<1x16x4xf32>
    %c0_5 = arith.constant 0 : index
    %c1_6 = arith.constant 1 : index
    %c0_7 = arith.constant 0 : index
    %4 = vector.load %arg5[%c0_5, %c1_6, %c0_7] : memref<18x18x4xf32, #tpu.memory_space<vmem>>, vector<1x16x4xf32>
    tpu.vector_store %arg5[%c0_5, %c1_6, %c0_7], %3 {strides = array<i32>} : memref<18x18x4xf32, #tpu.memory_space<vmem>>, vector<1x16x4xf32>,
    %5 = vector.extract_strided_slice %1 {offsets = [15, 0, 0], sizes = [1, 16, 4], strides = [1, 1, 1]} : vector<16x16x4xf32> to vector<1x16x4xf32>
    %c17 = arith.constant 17 : index
    %c1_8 = arith.constant 1 : index
    %c0_9 = arith.constant 0 : index
    %6 = vector.load %arg5[%c17, %c1_8, %c0_9] : memref<18x18x4xf32, #tpu.memory_space<vmem>>, vector<1x16x4xf32>
    tpu.vector_store %arg5[%c17, %c1_8, %c0_9], %5 {strides = array<i32>} : memref<18x18x4xf32, #tpu.memory_space<vmem>>, vector<1x16x4xf32>,
    %c0_10 = arith.constant 0 : index
    %c1_11 = arith.constant 1 : index
    %c0_12 = arith.constant 0 : index
    %7 = vector.load %arg5[%c0_10, %c1_11, %c0_12] : memref<18x18x4xf32, #tpu.memory_space<vmem>>, vector<18x1x4xf32>
    %c0_13 = arith.constant 0 : index
    %c0_14 = arith.constant 0 : index
    %c0_15 = arith.constant 0 : index
    %8 = vector.load %arg5[%c0_13, %c0_14, %c0_15] : memref<18x18x4xf32, #tpu.memory_space<vmem>>, vector<18x1x4xf32>
    tpu.vector_store %arg5[%c0_13, %c0_14, %c0_15], %7 {strides = array<i32>} : memref<18x18x4xf32, #tpu.memory_space<vmem>>, vector<18x1x4xf32>,
    %c0_16 = arith.constant 0 : index
    %c16 = arith.constant 16 : index
    %c0_17 = arith.constant 0 : index
    %9 = vector.load %arg5[%c0_16, %c16, %c0_17] : memref<18x18x4xf32, #tpu.memory_space<vmem>>, vector<18x1x4xf32>
    %c0_18 = arith.constant 0 : index
    %c17_19 = arith.constant 17 : index
    %c0_20 = arith.constant 0 : index
    %10 = vector.load %arg5[%c0_18, %c17_19, %c0_20] : memref<18x18x4xf32, #tpu.memory_space<vmem>>, vector<18x1x4xf32>
    tpu.vector_store %arg5[%c0_18, %c17_19, %c0_20], %9 {strides = array<i32>} : memref<18x18x4xf32, #tpu.memory_space<vmem>>, vector<18x1x4xf32>,
    %c0_21 = arith.constant 0 : index
    %c0_22 = arith.constant 0 : index
    %c0_23 = arith.constant 0 : index
    %11 = vector.load %arg5[%c0_21, %c0_22, %c0_23] : memref<18x18x4xf32, #tpu.memory_space<vmem>>, vector<16x16x4xf32>
    %12 = vector.shape_cast %11 : vector<16x16x4xf32> to vector<256x4xf32>
    %c0_24 = arith.constant 0 : index
    %c1_25 = arith.constant 1 : index
    %c0_26 = arith.constant 0 : index
    %13 = vector.load %arg5[%c0_24, %c1_25, %c0_26] : memref<18x18x4xf32, #tpu.memory_space<vmem>>, vector<16x16x4xf32>
    %14 = vector.shape_cast %13 : vector<16x16x4xf32> to vector<256x4xf32>
    %c0_27 = arith.constant 0 : index
    %c2 = arith.constant 2 : index
    %c0_28 = arith.constant 0 : index
    %15 = vector.load %arg5[%c0_27, %c2, %c0_28] : memref<18x18x4xf32, #tpu.memory_space<vmem>>, vector<16x16x4xf32>
    %16 = vector.shape_cast %15 : vector<16x16x4xf32> to vector<256x4xf32>
    %c1_29 = arith.constant 1 : index
    %c0_30 = arith.constant 0 : index
    %c0_31 = arith.constant 0 : index
    %17 = vector.load %arg5[%c1_29, %c0_30, %c0_31] : memref<18x18x4xf32, #tpu.memory_space<vmem>>, vector<16x16x4xf32>
    %18 = vector.shape_cast %17 : vector<16x16x4xf32> to vector<256x4xf32>
    %c1_32 = arith.constant 1 : index
    %c1_33 = arith.constant 1 : index
    %c0_34 = arith.constant 0 : index
    %19 = vector.load %arg5[%c1_32, %c1_33, %c0_34] : memref<18x18x4xf32, #tpu.memory_space<vmem>>, vector<16x16x4xf32>
    %20 = vector.shape_cast %19 : vector<16x16x4xf32> to vector<256x4xf32>
    %c1_35 = arith.constant 1 : index
    %c2_36 = arith.constant 2 : index
    %c0_37 = arith.constant 0 : index
    %21 = vector.load %arg5[%c1_35, %c2_36, %c0_37] : memref<18x18x4xf32, #tpu.memory_space<vmem>>, vector<16x16x4xf32>
    %22 = vector.shape_cast %21 : vector<16x16x4xf32> to vector<256x4xf32>
    %c2_38 = arith.constant 2 : index
    %c0_39 = arith.constant 0 : index
    %c0_40 = arith.constant 0 : index
    %23 = vector.load %arg5[%c2_38, %c0_39, %c0_40] : memref<18x18x4xf32, #tpu.memory_space<vmem>>, vector<16x16x4xf32>
    %24 = vector.shape_cast %23 : vector<16x16x4xf32> to vector<256x4xf32>
    %c2_41 = arith.constant 2 : index
    %c1_42 = arith.constant 1 : index
    %c0_43 = arith.constant 0 : index
    %25 = vector.load %arg5[%c2_41, %c1_42, %c0_43] : memref<18x18x4xf32, #tpu.memory_space<vmem>>, vector<16x16x4xf32>
    %26 = vector.shape_cast %25 : vector<16x16x4xf32> to vector<256x4xf32>
    %c2_44 = arith.constant 2 : index
    %c2_45 = arith.constant 2 : index
    %c0_46 = arith.constant 0 : index
    %27 = vector.load %arg5[%c2_44, %c2_45, %c0_46] : memref<18x18x4xf32, #tpu.memory_space<vmem>>, vector<16x16x4xf32>
    %28 = vector.shape_cast %27 : vector<16x16x4xf32> to vector<256x4xf32>
    %29 = tpu.concatenate %12, %14, %16, %18, %20, %22, %24, %26, %28 in 1 : vector<256x4xf32>, vector<256x4xf32>, vector<256x4xf32>, vector<256x4xf32>, vector<256x4xf32>, vector<256x4xf32>, vector<256x4xf32>, vector<256x4xf32>, vector<256x4xf32> -> vector<256x36xf32>
    %c0_47 = arith.constant 0 : index
    %c0_48 = arith.constant 0 : index
    %30 = vector.load %arg2[%c0_47, %c0_48] : memref<36x8xf32, #tpu.memory_space<vmem>>, vector<36x8xf32>
    %cst = arith.constant dense<0.000000e+00> : vector<256x8xf32>
    %31 = tpu.matmul %29, %30, %cst {dimension_numbers = #tpu.dot_dimension_numbers<[1], [0], [0], [1], [0, 0, 1, 1], [], []>} : vector<256x36xf32>, vector<36x8xf32>, vector<256x8xf32> -> vector<256x8xf32>
    %32 = tpu.transpose %31, [1, 0] : vector<256x8xf32> -> vector<8x256xf32>
    %cst_49 = arith.constant dense<0.000000e+00> : vector<8xf32>
    %33 = vector.multi_reduction <add>, %32, %cst_49 [1] : vector<8x256xf32> to vector<8xf32>
    %34 = vector.shape_cast %33 : vector<8xf32> to vector<8x1xf32>
    %cst_50 = arith.constant 3.906250e-03 : f32
    %35 = vector.broadcast %cst_50 : f32 to vector<8x1xf32>
    %36 = arith.mulf %34, %35 : vector<8x1xf32>
    %37 = arith.mulf %32, %32 : vector<8x256xf32>
    %cst_51 = arith.constant dense<0.000000e+00> : vector<8xf32>
    %38 = vector.multi_reduction <add>, %37, %cst_51 [1] : vector<8x256xf32> to vector<8xf32>
    %39 = vector.shape_cast %38 : vector<8xf32> to vector<8x1xf32>
    %cst_52 = arith.constant 3.906250e-03 : f32
    %40 = vector.broadcast %cst_52 : f32 to vector<8x1xf32>
    %41 = arith.mulf %39, %40 : vector<8x1xf32>
    %42 = arith.mulf %36, %36 : vector<8x1xf32>
    %43 = arith.subf %41, %42 : vector<8x1xf32>
    %cst_53 = arith.constant 0.000000e+00 : f32
    %44 = vector.broadcast %cst_53 : f32 to vector<8x1xf32>
    %45 = arith.maximumf %43, %44 : vector<8x1xf32>
    %46 = vector.broadcast %36 : vector<8x1xf32> to vector<8x256xf32>
    %47 = arith.subf %32, %46 : vector<8x256xf32>
    %cst_54 = arith.constant 9.99999974E-6 : f32
    %48 = vector.broadcast %cst_54 : f32 to vector<8x1xf32>
    %49 = arith.addf %45, %48 : vector<8x1xf32>
    %50 = math.rsqrt %49 : vector<8x1xf32>
    %51 = vector.broadcast %50 : vector<8x1xf32> to vector<8x256xf32>
    %52 = arith.mulf %47, %51 : vector<8x256xf32>
    %cst_55 = arith.constant 5.000000e-01 : f32
    %53 = vector.broadcast %cst_55 : f32 to vector<8x256xf32>
    %54 = arith.mulf %53, %52 : vector<8x256xf32>
    %cst_56 = arith.constant 0.707106769 : f32
    %55 = vector.broadcast %cst_56 : f32 to vector<8x256xf32>
    %56 = arith.mulf %52, %55 : vector<8x256xf32>
    %57 = math.erf %56 : vector<8x256xf32>
    %cst_57 = arith.constant 1.000000e+00 : f32
    %58 = vector.broadcast %cst_57 : f32 to vector<8x256xf32>
    %59 = arith.addf %58, %57 : vector<8x256xf32>
    %60 = arith.mulf %54, %59 : vector<8x256xf32>
    %61 = tpu.transpose %60, [1, 0] : vector<8x256xf32> -> vector<256x8xf32>
    %62 = vector.shape_cast %61 : vector<256x8xf32> to vector<16x16x8xf32>
    %c1_58 = arith.constant 1 : index
    %c1_59 = arith.constant 1 : index
    %c0_60 = arith.constant 0 : index
    %63 = vector.load %arg6[%c1_58, %c1_59, %c0_60] : memref<18x18x8xf32, #tpu.memory_space<vmem>>, vector<16x16x8xf32>
    tpu.vector_store %arg6[%c1_58, %c1_59, %c0_60], %62 {strides = array<i32>} : memref<18x18x8xf32, #tpu.memory_space<vmem>>, vector<16x16x8xf32>,
    %64 = vector.extract_strided_slice %62 {offsets = [0, 0, 0], sizes = [1, 16, 8], strides = [1, 1, 1]} : vector<16x16x8xf32> to vector<1x16x8xf32>
    %c0_61 = arith.constant 0 : index
    %c1_62 = arith.constant 1 : index
    %c0_63 = arith.constant 0 : index
    %65 = vector.load %arg6[%c0_61, %c1_62, %c0_63] : memref<18x18x8xf32, #tpu.memory_space<vmem>>, vector<1x16x8xf32>
    tpu.vector_store %arg6[%c0_61, %c1_62, %c0_63], %64 {strides = array<i32>} : memref<18x18x8xf32, #tpu.memory_space<vmem>>, vector<1x16x8xf32>,
    %66 = vector.extract_strided_slice %62 {offsets = [15, 0, 0], sizes = [1, 16, 8], strides = [1, 1, 1]} : vector<16x16x8xf32> to vector<1x16x8xf32>
    %c17_64 = arith.constant 17 : index
    %c1_65 = arith.constant 1 : index
    %c0_66 = arith.constant 0 : index
    %67 = vector.load %arg6[%c17_64, %c1_65, %c0_66] : memref<18x18x8xf32, #tpu.memory_space<vmem>>, vector<1x16x8xf32>
    tpu.vector_store %arg6[%c17_64, %c1_65, %c0_66], %66 {strides = array<i32>} : memref<18x18x8xf32, #tpu.memory_space<vmem>>, vector<1x16x8xf32>,
    %c0_67 = arith.constant 0 : index
    %c1_68 = arith.constant 1 : index
    %c0_69 = arith.constant 0 : index
    %68 = vector.load %arg6[%c0_67, %c1_68, %c0_69] : memref<18x18x8xf32, #tpu.memory_space<vmem>>, vector<18x1x8xf32>
    %c0_70 = arith.constant 0 : index
    %c0_71 = arith.constant 0 : index
    %c0_72 = arith.constant 0 : index
    %69 = vector.load %arg6[%c0_70, %c0_71, %c0_72] : memref<18x18x8xf32, #tpu.memory_space<vmem>>, vector<18x1x8xf32>
    tpu.vector_store %arg6[%c0_70, %c0_71, %c0_72], %68 {strides = array<i32>} : memref<18x18x8xf32, #tpu.memory_space<vmem>>, vector<18x1x8xf32>,
    %c0_73 = arith.constant 0 : index
    %c16_74 = arith.constant 16 : index
    %c0_75 = arith.constant 0 : index
    %70 = vector.load %arg6[%c0_73, %c16_74, %c0_75] : memref<18x18x8xf32, #tpu.memory_space<vmem>>, vector<18x1x8xf32>
    %c0_76 = arith.constant 0 : index
    %c17_77 = arith.constant 17 : index
    %c0_78 = arith.constant 0 : index
    %71 = vector.load %arg6[%c0_76, %c17_77, %c0_78] : memref<18x18x8xf32, #tpu.memory_space<vmem>>, vector<18x1x8xf32>
    tpu.vector_store %arg6[%c0_76, %c17_77, %c0_78], %70 {strides = array<i32>} : memref<18x18x8xf32, #tpu.memory_space<vmem>>, vector<18x1x8xf32>,
    %c0_79 = arith.constant 0 : index
    %c0_80 = arith.constant 0 : index
    %c0_81 = arith.constant 0 : index
    %72 = vector.load %arg6[%c0_79, %c0_80, %c0_81] : memref<18x18x8xf32, #tpu.memory_space<vmem>>, vector<16x16x8xf32>
    %73 = vector.shape_cast %72 : vector<16x16x8xf32> to vector<256x8xf32>
    %c0_82 = arith.constant 0 : index
    %c1_83 = arith.constant 1 : index
    %c0_84 = arith.constant 0 : index
    %74 = vector.load %arg6[%c0_82, %c1_83, %c0_84] : memref<18x18x8xf32, #tpu.memory_space<vmem>>, vector<16x16x8xf32>
    %75 = vector.shape_cast %74 : vector<16x16x8xf32> to vector<256x8xf32>
    %c0_85 = arith.constant 0 : index
    %c2_86 = arith.constant 2 : index
    %c0_87 = arith.constant 0 : index
    %76 = vector.load %arg6[%c0_85, %c2_86, %c0_87] : memref<18x18x8xf32, #tpu.memory_space<vmem>>, vector<16x16x8xf32>
    %77 = vector.shape_cast %76 : vector<16x16x8xf32> to vector<256x8xf32>
    %c1_88 = arith.constant 1 : index
    %c0_89 = arith.constant 0 : index
    %c0_90 = arith.constant 0 : index
    %78 = vector.load %arg6[%c1_88, %c0_89, %c0_90] : memref<18x18x8xf32, #tpu.memory_space<vmem>>, vector<16x16x8xf32>
    %79 = vector.shape_cast %78 : vector<16x16x8xf32> to vector<256x8xf32>
    %c1_91 = arith.constant 1 : index
    %c1_92 = arith.constant 1 : index
    %c0_93 = arith.constant 0 : index
    %80 = vector.load %arg6[%c1_91, %c1_92, %c0_93] : memref<18x18x8xf32, #tpu.memory_space<vmem>>, vector<16x16x8xf32>
    %81 = vector.shape_cast %80 : vector<16x16x8xf32> to vector<256x8xf32>
    %c1_94 = arith.constant 1 : index
    %c2_95 = arith.constant 2 : index
    %c0_96 = arith.constant 0 : index
    %82 = vector.load %arg6[%c1_94, %c2_95, %c0_96] : memref<18x18x8xf32, #tpu.memory_space<vmem>>, vector<16x16x8xf32>
    %83 = vector.shape_cast %82 : vector<16x16x8xf32> to vector<256x8xf32>
    %c2_97 = arith.constant 2 : index
    %c0_98 = arith.constant 0 : index
    %c0_99 = arith.constant 0 : index
    %84 = vector.load %arg6[%c2_97, %c0_98, %c0_99] : memref<18x18x8xf32, #tpu.memory_space<vmem>>, vector<16x16x8xf32>
    %85 = vector.shape_cast %84 : vector<16x16x8xf32> to vector<256x8xf32>
    %c2_100 = arith.constant 2 : index
    %c1_101 = arith.constant 1 : index
    %c0_102 = arith.constant 0 : index
    %86 = vector.load %arg6[%c2_100, %c1_101, %c0_102] : memref<18x18x8xf32, #tpu.memory_space<vmem>>, vector<16x16x8xf32>
    %87 = vector.shape_cast %86 : vector<16x16x8xf32> to vector<256x8xf32>
    %c2_103 = arith.constant 2 : index
    %c2_104 = arith.constant 2 : index
    %c0_105 = arith.constant 0 : index
    %88 = vector.load %arg6[%c2_103, %c2_104, %c0_105] : memref<18x18x8xf32, #tpu.memory_space<vmem>>, vector<16x16x8xf32>
    %89 = vector.shape_cast %88 : vector<16x16x8xf32> to vector<256x8xf32>
    %90 = tpu.concatenate %73, %75, %77, %79, %81, %83, %85, %87, %89 in 1 : vector<256x8xf32>, vector<256x8xf32>, vector<256x8xf32>, vector<256x8xf32>, vector<256x8xf32>, vector<256x8xf32>, vector<256x8xf32>, vector<256x8xf32>, vector<256x8xf32> -> vector<256x72xf32>
    %c0_106 = arith.constant 0 : index
    %c0_107 = arith.constant 0 : index
    %91 = vector.load %arg3[%c0_106, %c0_107] : memref<72x8xf32, #tpu.memory_space<vmem>>, vector<72x8xf32>
    %cst_108 = arith.constant dense<0.000000e+00> : vector<256x8xf32>
    %92 = tpu.matmul %90, %91, %cst_108 {dimension_numbers = #tpu.dot_dimension_numbers<[1], [0], [0], [1], [0, 0, 1, 1], [], []>} : vector<256x72xf32>, vector<72x8xf32>, vector<256x8xf32> -> vector<256x8xf32>
    %93 = tpu.transpose %92, [1, 0] : vector<256x8xf32> -> vector<8x256xf32>
    %cst_109 = arith.constant dense<0.000000e+00> : vector<8xf32>
    %94 = vector.multi_reduction <add>, %93, %cst_109 [1] : vector<8x256xf32> to vector<8xf32>
    %95 = vector.shape_cast %94 : vector<8xf32> to vector<8x1xf32>
    %cst_110 = arith.constant 3.906250e-03 : f32
    %96 = vector.broadcast %cst_110 : f32 to vector<8x1xf32>
    %97 = arith.mulf %95, %96 : vector<8x1xf32>
    %98 = arith.mulf %93, %93 : vector<8x256xf32>
    %cst_111 = arith.constant dense<0.000000e+00> : vector<8xf32>
    %99 = vector.multi_reduction <add>, %98, %cst_111 [1] : vector<8x256xf32> to vector<8xf32>
    %100 = vector.shape_cast %99 : vector<8xf32> to vector<8x1xf32>
    %cst_112 = arith.constant 3.906250e-03 : f32
    %101 = vector.broadcast %cst_112 : f32 to vector<8x1xf32>
    %102 = arith.mulf %100, %101 : vector<8x1xf32>
    %103 = arith.mulf %97, %97 : vector<8x1xf32>
    %104 = arith.subf %102, %103 : vector<8x1xf32>
    %cst_113 = arith.constant 0.000000e+00 : f32
    %105 = vector.broadcast %cst_113 : f32 to vector<8x1xf32>
    %106 = arith.maximumf %104, %105 : vector<8x1xf32>
    %107 = vector.broadcast %97 : vector<8x1xf32> to vector<8x256xf32>
    %108 = arith.subf %93, %107 : vector<8x256xf32>
    %cst_114 = arith.constant 9.99999974E-6 : f32
    %109 = vector.broadcast %cst_114 : f32 to vector<8x1xf32>
    %110 = arith.addf %106, %109 : vector<8x1xf32>
    %111 = math.rsqrt %110 : vector<8x1xf32>
    %112 = vector.broadcast %111 : vector<8x1xf32> to vector<8x256xf32>
    %113 = arith.mulf %108, %112 : vector<8x256xf32>
    %cst_115 = arith.constant 5.000000e-01 : f32
    %114 = vector.broadcast %cst_115 : f32 to vector<8x256xf32>
    %115 = arith.mulf %114, %113 : vector<8x256xf32>
    %cst_116 = arith.constant 0.707106769 : f32
    %116 = vector.broadcast %cst_116 : f32 to vector<8x256xf32>
    %117 = arith.mulf %113, %116 : vector<8x256xf32>
    %118 = math.erf %117 : vector<8x256xf32>
    %cst_117 = arith.constant 1.000000e+00 : f32
    %119 = vector.broadcast %cst_117 : f32 to vector<8x256xf32>
    %120 = arith.addf %119, %118 : vector<8x256xf32>
    %121 = arith.mulf %115, %120 : vector<8x256xf32>
    %122 = vector.shape_cast %121 : vector<8x256xf32> to vector<1x8x256xf32>
    %c0_118 = arith.constant 0 : index
    %c0_119 = arith.constant 0 : index
    %c0_120 = arith.constant 0 : index
    %123 = vector.load %arg4[%c0_118, %c0_119, %c0_120] : memref<1x8x256xf32, #tpu.memory_space<vmem>>, vector<1x8x256xf32>
    tpu.vector_store %arg4[%c0_118, %c0_119, %c0_120], %122 {strides = array<i32>} : memref<1x8x256xf32, #tpu.memory_space<vmem>>, vector<1x8x256xf32>,
    return
  }
  func.func @transform_0(%arg0: i32) -> (i32, i32, i32, i32) {
    %c0_i32 = arith.constant 0 : i32
    %c0_i32_0 = arith.constant 0 : i32
    %c0_i32_1 = arith.constant 0 : i32
    %c0_i32_2 = arith.constant 0 : i32
    return %arg0, %c0_i32, %c0_i32_0, %c0_i32_1 : i32, i32, i32, i32
  }
  func.func @transform_1(%arg0: i32) -> (i32, i32) {
    %c0_i32 = arith.constant 0 : i32
    %c0_i32_0 = arith.constant 0 : i32
    %c0_i32_1 = arith.constant 0 : i32
    return %c0_i32, %c0_i32_0 : i32, i32
  }
  func.func @transform_2(%arg0: i32) -> (i32, i32) {
    %c0_i32 = arith.constant 0 : i32
    %c0_i32_0 = arith.constant 0 : i32
    %c0_i32_1 = arith.constant 0 : i32
    return %c0_i32, %c0_i32_0 : i32, i32
  }
  func.func @transform_3(%arg0: i32) -> (i32, i32, i32) {
    %c0_i32 = arith.constant 0 : i32
    %c0_i32_0 = arith.constant 0 : i32
    %c0_i32_1 = arith.constant 0 : i32
    return %arg0, %c0_i32, %c0_i32_0 : i32, i32, i32
  }
}

</mosaic_0001>

<llo_original>
// kernel: tpu_custom_call.1
$region0: #{tpu_custom_call.1}
  #allocation0 [shape = 'u32[]', space=smem, size = 0x4, offset = 0x4, fixed_abs, tag = 'smem constant byte address 0x4 - core index']
  #allocation1 [shape = 'u32[144,128]{1,0:T(1,128)}', space=vmem, size = 0x12000, scoped, tag = 'internal scratch']
  #allocation2 [shape = 'f32[18,18,4]{2,1,0:T(8,128)}', space=vmem, size = 0x36000, scoped, tag = 'scratch operand']
  #allocation3 [shape = 'f32[18,18,8]{2,1,0:T(8,128)}', space=vmem, size = 0x36000, scoped, tag = 'scratch operand']
  %s0 = inlined_call_operand.vmem [shape: f32[2,16,16,4], index: 0, kind: input, shape index: {}]
  %s1 = inlined_call_operand.vmem [shape: f32[36,8], index: 1, kind: input, shape index: {}]
  %s2 = inlined_call_operand.vmem [shape: f32[72,8], index: 2, kind: input, shape index: {}]
  %s3 = inlined_call_operand.hbm [shape: f32[2,8,256], index: 3, kind: output, shape index: {}]
  %s4 = sld [smem:[#allocation0]]
  $region45: #{tpu_custom_call.1} parent=0
    _
  %s6 = ssub.s32 1, %s4
  %s7 = scalar_select 0, %s6, %s4
  $region1: #{tpu_custom_call.1} parent=0
    #allocation4 [shape = 'u8[16384]{0}', space=vmem, size = 0x4000, scoped, tag = 'output window, operand 0']
    #allocation5 [shape = 's32[2]{0}', space=sflag, size = 0x8, scoped, tag = 'scoped memory for tpu_custom_call.1']
    %8 = vsyncpa [#allocation5], 0
    %s9 = scalar_lea.sflag [#allocation5], 1
    %10 = vsyncpa %s9, 0
    loop: start=0, step=1, limit=4
    $region2: #{tpu_custom_call.1} parent=1 // loop_pre_header
      _
    $region3: #{tpu_custom_call.1} parent=1 // loop_header
      %s12 = sphi 0, %s16
      %p13 = scmp.ge.s32.totalorder %s12, 4
      %s22 = sphi 0, %s24
      %s25 = sphi 0, %s22
      %s26 = sphi 0, %s25
      %s42 = sphi 0, %s26
      %s46 = sphi 0, %s46
      %s48 = sphi 0, %s46
      %s49 = sphi 0, %s48
      %s63 = sphi 0, %s49
      %s67 = sphi 0, %s67
      %s69 = sphi 0, %s67
      %s70 = sphi 0, %s69
      %s84 = sphi 0, %s70
      %s90 = sphi 0, %s92
      %s93 = sphi 0, %s90
      %s94 = sphi 0, %s93
      %s110 = sphi 0, %s94
    $region4: #{tpu_custom_call.1} parent=1 // loop_header_branch
      %15 = sbr.rel (%p13) target = $region8
    $region5: #{tpu_custom_call.1} parent=1 // loop_body
      %s17 = ssub.s32 %s12, 1
      %s18 = ssub.s32 %s12, 2
      %s19 = sadd.s32 %s12, 1
      %s20 = ssub.s32 %s12, %s19
      %p21 = scmp.eq.s32.totalorder %s20, 0
      %s23 = sadd.s32 %s22, 1
      %s24 = scalar_select %p21, %s22, %s23
      %p27 = pneg %p21
      %p28 = scmp.eq.s32.totalorder %s12, 1
      %p29 = por %p27, %p28
      %p30 = scmp.ne.s32.totalorder %s22, %s25
      %p31 = scmp.eq.s32.totalorder %s12, 0
      %p32 = por %p30, %p31
      %p33 = scmp.ne.s32.totalorder %s22, %s25
      %p34 = scmp.eq.s32.totalorder %s17, 1
      %p35 = por %p33, %p34
      %p36 = scmp.ne.s32.totalorder %s25, %s26
      %p37 = scmp.eq.s32.totalorder %s17, 0
      %p38 = por %p36, %p37
      %p39 = scmp.ne.s32.totalorder %s25, %s26
      %p40 = scmp.eq.s32.totalorder %s18, 1
      %p41 = por %p39, %p40
      %p43 = scmp.ne.s32.totalorder %s26, %s42
      %p44 = scmp.eq.s32.totalorder %s18, 0
      %p45 = por %p43, %p44
      %s47 = sadd.s32 %s46, 1
      %p50 = scmp.eq.s32.totalorder %s12, 1
      %p51 = scmp.ne.s32.totalorder %s46, %s48
      %p52 = scmp.eq.s32.totalorder %s12, 0
      %p53 = por %p51, %p52
      %p54 = scmp.ne.s32.totalorder %s46, %s48
      %p55 = scmp.eq.s32.totalorder %s17, 1
      %p56 = por %p54, %p55
      %p57 = scmp.ne.s32.totalorder %s48, %s49
      %p58 = scmp.eq.s32.totalorder %s17, 0
      %p59 = por %p57, %p58
      %p60 = scmp.ne.s32.totalorder %s48, %s49
      %p61 = scmp.eq.s32.totalorder %s18, 1
      %p62 = por %p60, %p61
      %p64 = scmp.ne.s32.totalorder %s49, %s63
      %p65 = scmp.eq.s32.totalorder %s18, 0
      %p66 = por %p64, %p65
      %s68 = sadd.s32 %s67, 1
      %p71 = scmp.eq.s32.totalorder %s12, 1
      %p72 = scmp.ne.s32.totalorder %s67, %s69
      %p73 = scmp.eq.s32.totalorder %s12, 0
      %p74 = por %p72, %p73
      %p75 = scmp.ne.s32.totalorder %s67, %s69
      %p76 = scmp.eq.s32.totalorder %s17, 1
      %p77 = por %p75, %p76
      %p78 = scmp.ne.s32.totalorder %s69, %s70
      %p79 = scmp.eq.s32.totalorder %s17, 0
      %p80 = por %p78, %p79
      %p81 = scmp.ne.s32.totalorder %s69, %s70
      %p82 = scmp.eq.s32.totalorder %s18, 1
      %p83 = por %p81, %p82
      %p85 = scmp.ne.s32.totalorder %s70, %s84
      %p86 = scmp.eq.s32.totalorder %s18, 0
      %p87 = por %p85, %p86
      %s88 = ssub.s32 %s12, %s19
      %p89 = scmp.eq.s32.totalorder %s88, 0
      %s91 = sadd.s32 %s90, 1
      %s92 = scalar_select %p89, %s90, %s91
      %p95 = pneg %p89
      %p96 = scmp.eq.s32.totalorder %s12, 1
      %p97 = por %p95, %p96
      %p98 = scmp.ne.s32.totalorder %s90, %s93
      %p99 = scmp.eq.s32.totalorder %s12, 0
      %p100 = por %p98, %p99
      %p101 = scmp.ne.s32.totalorder %s90, %s93
      %p102 = scmp.eq.s32.totalorder %s17, 1
      %p103 = por %p101, %p102
      %p104 = scmp.ne.s32.totalorder %s93, %s94
      %p105 = scmp.eq.s32.totalorder %s17, 0
      %p106 = por %p104, %p105
      %p107 = scmp.ne.s32.totalorder %s93, %s94
      %p108 = scmp.eq.s32.totalorder %s18, 1
      %p109 = por %p107, %p108
      %p111 = scmp.ne.s32.totalorder %s94, %s110
      %p112 = scmp.eq.s32.totalorder %s18, 0
      %p113 = por %p111, %p112
      %p114 = scmp.le.s32.totalorder 1, %s12
      %p115 = scmp.lt.s32.totalorder %s12, 3
      %p116 = pnand %p114, %p115
      %p117 = pneg %p116
      // Predicated region
      $region9: #{tpu_custom_call.1} parent=5 // pred_check
        _
      $region10: #{tpu_custom_call.1} parent=5 // pred_check_branch
        %119 = sbr.rel (%p116) target = $region12
      $region11: #{tpu_custom_call.1} parent=5 // pred_region
        %s120 = ssub.s32 %s12, 1
        // Predicated region
        $region13: #{tpu_custom_call.1} parent=11 // pred_check
          %p121 = pneg %p59
        $region14: #{tpu_custom_call.1} parent=11 // pred_check_branch
          %123 = sbr.rel (%p121) target = $region16
        $region15: #{tpu_custom_call.1} parent=11 // pred_region
          _
        $region16: #{tpu_custom_call.1} parent=11 // pred_fallthru
          _
        // Predicated region
        $region17: #{tpu_custom_call.1} parent=11 // pred_check
          %p124 = pneg %p80
        $region18: #{tpu_custom_call.1} parent=11 // pred_check_branch
          %126 = sbr.rel (%p124) target = $region20
        $region19: #{tpu_custom_call.1} parent=11 // pred_region
          _
        $region20: #{tpu_custom_call.1} parent=11 // pred_fallthru
          _
      $region12: #{tpu_custom_call.1} parent=5 // pred_fallthru
        _
      %p127 = scmp.lt.s32.totalorder %s12, 2
      // Predicated region
      $region21: #{tpu_custom_call.1} parent=5 // pred_check
        %p128 = pneg %p127
      $region22: #{tpu_custom_call.1} parent=5 // pred_check_branch
        %130 = sbr.rel (%p128) target = $region24
      $region23: #{tpu_custom_call.1} parent=5 // pred_region
        // Predicated region
        $region25: #{tpu_custom_call.1} parent=23 // pred_check
          %p131 = pneg %p32
        $region26: #{tpu_custom_call.1} parent=23 // pred_check_branch
          %133 = sbr.rel (%p131) target = $region28
        $region27: #{tpu_custom_call.1} parent=23 // pred_region
          %p134 = scmp.lt.s32.totalorder %s12, 1
          %s135 = scalar_select %p134, %s12, 1
          %s136 = smul.addr %s135, 32
          %s137 = smul.addr %s136, 8
          %s138 = scalar_lea.vmem %s0, %s137
        $region28: #{tpu_custom_call.1} parent=23 // pred_fallthru
          _
      $region24: #{tpu_custom_call.1} parent=5 // pred_fallthru
        _
      %p139 = scmp.le.s32.totalorder 1, %s12
      %p140 = scmp.lt.s32.totalorder %s12, 3
      %p141 = pnand %p139, %p140
      %p142 = pneg %p141
      // Predicated region
      $region29: #{tpu_custom_call.1} parent=5 // pred_check
        _
      $region30: #{tpu_custom_call.1} parent=5 // pred_check_branch
        %144 = sbr.rel (%p141) target = $region32
      $region31: #{tpu_custom_call.1} parent=5 // pred_region
        %s145 = ssub.s32 %s12, 1
        %p146 = scmp.lt.s32.totalorder %s17, 1
        %s147 = scalar_select %p146, %s17, 1
        %s148 = smul.addr %s147, 32
        %s149 = smul.addr %s148, 8
        %s150 = scalar_lea.vmem %s0, %s149
        %p151 = pneg %p38
        %p152 = pneg %p35
        %p153 = pneg %p59
        %p154 = pneg %p56
        %p155 = pneg %p80
        %p156 = pneg %p77
        %p157 = pneg %p106
        %p158 = pneg %p103
        %s159 = sand.u32 %s93, 1
        %s160 = scalar_lea.sflag [#allocation5], %s159
        %s161 = sand.u32 %s93, 1
        %s162 = smul.addr %s161, 16
        %s163 = scalar_lea.vmem [#allocation4], %s162
        %p164 = scmp.lt.s32.totalorder %s17, 1
        %s165 = scalar_select %p164, %s17, 1
        %s166 = smul.addr %s165, 32
        %s167 = smul.addr %s166, 8
        %s168 = scalar_lea.vmem %s0, %s167
        %v169 = vld [vmem:[%s168] sm:$0xff]
        %v170 = vld [vmem:[%s168 + $0x8] sm:$0xff]
        %v171 = vld [vmem:[%s168 + $0x10] sm:$0xff]
        %v172 = vld [vmem:[%s168 + $0x18] sm:$0xff]
        %v173 = vld [vmem:[%s168 + $0x20] sm:$0xff]
        %v174 = vld [vmem:[%s168 + $0x28] sm:$0xff]
        %v175 = vld [vmem:[%s168 + $0x30] sm:$0xff]
        %v176 = vld [vmem:[%s168 + $0x38] sm:$0xff]
        %v177 = vld [vmem:[%s168 + $0x40] sm:$0xff]
        %v178 = vld [vmem:[%s168 + $0x48] sm:$0xff]
        %v179 = vld [vmem:[%s168 + $0x50] sm:$0xff]
        %v180 = vld [vmem:[%s168 + $0x58] sm:$0xff]
        %v181 = vld [vmem:[%s168 + $0x60] sm:$0xff]
        %v182 = vld [vmem:[%s168 + $0x68] sm:$0xff]
        %v183 = vld [vmem:[%s168 + $0x70] sm:$0xff]
        %v184 = vld [vmem:[%s168 + $0x78] sm:$0xff]
        %v185 = vld [vmem:[%s168 + $0x80] sm:$0xff]
        %v186 = vld [vmem:[%s168 + $0x88] sm:$0xff]
        %v187 = vld [vmem:[%s168 + $0x90] sm:$0xff]
        %v188 = vld [vmem:[%s168 + $0x98] sm:$0xff]
        %v189 = vld [vmem:[%s168 + $0xa0] sm:$0xff]
        %v190 = vld [vmem:[%s168 + $0xa8] sm:$0xff]
        %v191 = vld [vmem:[%s168 + $0xb0] sm:$0xff]
        %v192 = vld [vmem:[%s168 + $0xb8] sm:$0xff]
        %v193 = vld [vmem:[%s168 + $0xc0] sm:$0xff]
        %v194 = vld [vmem:[%s168 + $0xc8] sm:$0xff]
        %v195 = vld [vmem:[%s168 + $0xd0] sm:$0xff]
        %v196 = vld [vmem:[%s168 + $0xd8] sm:$0xff]
        %v197 = vld [vmem:[%s168 + $0xe0] sm:$0xff]
        %v198 = vld [vmem:[%s168 + $0xe8] sm:$0xff]
        %v199 = vld [vmem:[%s168 + $0xf0] sm:$0xff]
        %v200 = vld [vmem:[%s168 + $0xf8] sm:$0xff]
        %s201 = scalar_lea.vmem [#allocation2], 24
        %vm202 = vcmask 31744
        %203 = vst.msk [vmem:[%s201 + $0x1] sm:$0xff] %vm202, %v169
        %204 = vst.msk [vmem:[%s201 + $0x9] sm:$0xff] %vm202, %v170
        %205 = vst.msk [vmem:[%s201 + $0x19] sm:$0xff] %vm202, %v171
        %206 = vst.msk [vmem:[%s201 + $0x21] sm:$0xff] %vm202, %v172
        %207 = vst.msk [vmem:[%s201 + $0x31] sm:$0xff] %vm202, %v173
        %208 = vst.msk [vmem:[%s201 + $0x39] sm:$0xff] %vm202, %v174
        %209 = vst.msk [vmem:[%s201 + $0x49] sm:$0xff] %vm202, %v175
        %210 = vst.msk [vmem:[%s201 + $0x51] sm:$0xff] %vm202, %v176
        %211 = vst.msk [vmem:[%s201 + $0x61] sm:$0xff] %vm202, %v177
        %212 = vst.msk [vmem:[%s201 + $0x69] sm:$0xff] %vm202, %v178
        %213 = vst.msk [vmem:[%s201 + $0x79] sm:$0xff] %vm202, %v179
        %214 = vst.msk [vmem:[%s201 + $0x81] sm:$0xff] %vm202, %v180
        %215 = vst.msk [vmem:[%s201 + $0x91] sm:$0xff] %vm202, %v181
        %216 = vst.msk [vmem:[%s201 + $0x99] sm:$0xff] %vm202, %v182
        %217 = vst.msk [vmem:[%s201 + $0xa9] sm:$0xff] %vm202, %v183
        %218 = vst.msk [vmem:[%s201 + $0xb1] sm:$0xff] %vm202, %v184
        %219 = vst.msk [vmem:[%s201 + $0xc1] sm:$0xff] %vm202, %v185
        %220 = vst.msk [vmem:[%s201 + $0xc9] sm:$0xff] %vm202, %v186
        %221 = vst.msk [vmem:[%s201 + $0xd9] sm:$0xff] %vm202, %v187
        %222 = vst.msk [vmem:[%s201 + $0xe1] sm:$0xff] %vm202, %v188
        %223 = vst.msk [vmem:[%s201 + $0xf1] sm:$0xff] %vm202, %v189
        %224 = vst.msk [vmem:[%s201 + $0xf9] sm:$0xff] %vm202, %v190
        %225 = vst.msk [vmem:[%s201 + $0x109] sm:$0xff] %vm202, %v191
        %226 = vst.msk [vmem:[%s201 + $0x111] sm:$0xff] %vm202, %v192
        %227 = vst.msk [vmem:[%s201 + $0x121] sm:$0xff] %vm202, %v193
        %228 = vst.msk [vmem:[%s201 + $0x129] sm:$0xff] %vm202, %v194
        %229 = vst.msk [vmem:[%s201 + $0x139] sm:$0xff] %vm202, %v195
        %230 = vst.msk [vmem:[%s201 + $0x141] sm:$0xff] %vm202, %v196
        %231 = vst.msk [vmem:[%s201 + $0x151] sm:$0xff] %vm202, %v197
        %232 = vst.msk [vmem:[%s201 + $0x159] sm:$0xff] %vm202, %v198
        %233 = vst.msk [vmem:[%s201 + $0x169] sm:$0xff] %vm202, %v199
        %234 = vst.msk [vmem:[%s201 + $0x171] sm:$0xff] %vm202, %v200
        %235 = vst.msk [vmem:[#allocation2 + $0x1] sm:$0xff] %vm202, %v169
        %236 = vst.msk [vmem:[#allocation2 + $0x9] sm:$0xff] %vm202, %v170
        %s237 = scalar_lea.vmem [#allocation2], 408
        %238 = vst.msk [vmem:[%s237 + $0x1] sm:$0xff] %vm202, %v199
        %239 = vst.msk [vmem:[%s237 + $0x9] sm:$0xff] %vm202, %v200
        %v240 = vld [vmem:[#allocation2 + $0x1] sm:$0x1]
        %v241 = vld [vmem:[#allocation2 + $0x19] sm:$0x1]
        %v242 = vld [vmem:[#allocation2 + $0x31] sm:$0x1]
        %v243 = vld [vmem:[#allocation2 + $0x49] sm:$0x1]
        %v244 = vld [vmem:[#allocation2 + $0x61] sm:$0x1]
        %v245 = vld [vmem:[#allocation2 + $0x79] sm:$0x1]
        %v246 = vld [vmem:[#allocation2 + $0x91] sm:$0x1]
        %v247 = vld [vmem:[#allocation2 + $0xa9] sm:$0x1]
        %v248 = vld [vmem:[#allocation2 + $0xc1] sm:$0x1]
        %v249 = vld [vmem:[#allocation2 + $0xd9] sm:$0x1]
        %v250 = vld [vmem:[#allocation2 + $0xf1] sm:$0x1]
        %v251 = vld [vmem:[#allocation2 + $0x109] sm:$0x1]
        %v252 = vld [vmem:[#allocation2 + $0x121] sm:$0x1]
        %v253 = vld [vmem:[#allocation2 + $0x139] sm:$0x1]
        %v254 = vld [vmem:[#allocation2 + $0x151] sm:$0x1]
        %v255 = vld [vmem:[#allocation2 + $0x169] sm:$0x1]
        %v256 = vld [vmem:[#allocation2 + $0x181] sm:$0x1]
        %v257 = vld [vmem:[#allocation2 + $0x199] sm:$0x1]
        %vm258 = vcmask 24576
        %259 = vst.msk [vmem:[#allocation2] sm:$0x1] %vm258, %v240
        %260 = vst.msk [vmem:[#allocation2 + $0x18] sm:$0x1] %vm258, %v241
        %261 = vst.msk [vmem:[#allocation2 + $0x30] sm:$0x1] %vm258, %v242
        %262 = vst.msk [vmem:[#allocation2 + $0x48] sm:$0x1] %vm258, %v243
        %263 = vst.msk [vmem:[#allocation2 + $0x60] sm:$0x1] %vm258, %v244
        %264 = vst.msk [vmem:[#allocation2 + $0x78] sm:$0x1] %vm258, %v245
        %265 = vst.msk [vmem:[#allocation2 + $0x90] sm:$0x1] %vm258, %v246
        %266 = vst.msk [vmem:[#allocation2 + $0xa8] sm:$0x1] %vm258, %v247
        %267 = vst.msk [vmem:[#allocation2 + $0xc0] sm:$0x1] %vm258, %v248
        %268 = vst.msk [vmem:[#allocation2 + $0xd8] sm:$0x1] %vm258, %v249
        %269 = vst.msk [vmem:[#allocation2 + $0xf0] sm:$0x1] %vm258, %v250
        %270 = vst.msk [vmem:[#allocation2 + $0x108] sm:$0x1] %vm258, %v251
        %271 = vst.msk [vmem:[#allocation2 + $0x120] sm:$0x1] %vm258, %v252
        %272 = vst.msk [vmem:[#allocation2 + $0x138] sm:$0x1] %vm258, %v253
        %273 = vst.msk [vmem:[#allocation2 + $0x150] sm:$0x1] %vm258, %v254
        %274 = vst.msk [vmem:[#allocation2 + $0x168] sm:$0x1] %vm258, %v255
        %275 = vst.msk [vmem:[#allocation2 + $0x180] sm:$0x1] %vm258, %v256
        %276 = vst.msk [vmem:[#allocation2 + $0x198] sm:$0x1] %vm258, %v257
        %v277 = vld [vmem:[#allocation2 + $0x10] sm:$0x1]
        %v278 = vld [vmem:[#allocation2 + $0x28] sm:$0x1]
        %v279 = vld [vmem:[#allocation2 + $0x40] sm:$0x1]
        %v280 = vld [vmem:[#allocation2 + $0x58] sm:$0x1]
        %v281 = vld [vmem:[#allocation2 + $0x70] sm:$0x1]
        %v282 = vld [vmem:[#allocation2 + $0x88] sm:$0x1]
        %v283 = vld [vmem:[#allocation2 + $0xa0] sm:$0x1]
        %v284 = vld [vmem:[#allocation2 + $0xb8] sm:$0x1]
        %v285 = vld [vmem:[#allocation2 + $0xd0] sm:$0x1]
        %v286 = vld [vmem:[#allocation2 + $0xe8] sm:$0x1]
        %v287 = vld [vmem:[#allocation2 + $0x100] sm:$0x1]
        %v288 = vld [vmem:[#allocation2 + $0x118] sm:$0x1]
        %v289 = vld [vmem:[#allocation2 + $0x130] sm:$0x1]
        %v290 = vld [vmem:[#allocation2 + $0x148] sm:$0x1]
        %v291 = vld [vmem:[#allocation2 + $0x160] sm:$0x1]
        %v292 = vld [vmem:[#allocation2 + $0x178] sm:$0x1]
        %v293 = vld [vmem:[#allocation2 + $0x190] sm:$0x1]
        %v294 = vld [vmem:[#allocation2 + $0x1a8] sm:$0x1]
        %295 = vst.msk [vmem:[#allocation2 + $0x11] sm:$0x1] %vm258, %v277
        %296 = vst.msk [vmem:[#allocation2 + $0x29] sm:$0x1] %vm258, %v278
        %297 = vst.msk [vmem:[#allocation2 + $0x41] sm:$0x1] %vm258, %v279
        %298 = vst.msk [vmem:[#allocation2 + $0x59] sm:$0x1] %vm258, %v280
        %299 = vst.msk [vmem:[#allocation2 + $0x71] sm:$0x1] %vm258, %v281
        %300 = vst.msk [vmem:[#allocation2 + $0x89] sm:$0x1] %vm258, %v282
        %301 = vst.msk [vmem:[#allocation2 + $0xa1] sm:$0x1] %vm258, %v283
        %302 = vst.msk [vmem:[#allocation2 + $0xb9] sm:$0x1] %vm258, %v284
        %303 = vst.msk [vmem:[#allocation2 + $0xd1] sm:$0x1] %vm258, %v285
        %304 = vst.msk [vmem:[#allocation2 + $0xe9] sm:$0x1] %vm258, %v286
        %305 = vst.msk [vmem:[#allocation2 + $0x101] sm:$0x1] %vm258, %v287
        %306 = vst.msk [vmem:[#allocation2 + $0x119] sm:$0x1] %vm258, %v288
        %307 = vst.msk [vmem:[#allocation2 + $0x131] sm:$0x1] %vm258, %v289
        %308 = vst.msk [vmem:[#allocation2 + $0x149] sm:$0x1] %vm258, %v290
        %309 = vst.msk [vmem:[#allocation2 + $0x161] sm:$0x1] %vm258, %v291
        %310 = vst.msk [vmem:[#allocation2 + $0x179] sm:$0x1] %vm258, %v292
        %311 = vst.msk [vmem:[#allocation2 + $0x191] sm:$0x1] %vm258, %v293
        %312 = vst.msk [vmem:[#allocation2 + $0x1a9] sm:$0x1] %vm258, %v294
        %v313 = vld [vmem:[#allocation2] sm:$0xff]
        %v314 = vld [vmem:[#allocation2 + $0x8] sm:$0xff]
        %v315 = vld [vmem:[#allocation2 + $0x18] sm:$0xff]
        %v316 = vld [vmem:[#allocation2 + $0x20] sm:$0xff]
        %v317 = vld [vmem:[#allocation2 + $0x30] sm:$0xff]
        %v318 = vld [vmem:[#allocation2 + $0x38] sm:$0xff]
        %v319 = vld [vmem:[#allocation2 + $0x48] sm:$0xff]
        %v320 = vld [vmem:[#allocation2 + $0x50] sm:$0xff]
        %v321 = vld [vmem:[#allocation2 + $0x60] sm:$0xff]
        %v322 = vld [vmem:[#allocation2 + $0x68] sm:$0xff]
        %v323 = vld [vmem:[#allocation2 + $0x78] sm:$0xff]
        %v324 = vld [vmem:[#allocation2 + $0x80] sm:$0xff]
        %v325 = vld [vmem:[#allocation2 + $0x90] sm:$0xff]
        %v326 = vld [vmem:[#allocation2 + $0x98] sm:$0xff]
        %v327 = vld [vmem:[#allocation2 + $0xa8] sm:$0xff]
        %v328 = vld [vmem:[#allocation2 + $0xb0] sm:$0xff]
        %v329 = vld [vmem:[#allocation2 + $0xc0] sm:$0xff]
        %v330 = vld [vmem:[#allocation2 + $0xc8] sm:$0xff]
        %v331 = vld [vmem:[#allocation2 + $0xd8] sm:$0xff]
        %v332 = vld [vmem:[#allocation2 + $0xe0] sm:$0xff]
        %v333 = vld [vmem:[#allocation2 + $0xf0] sm:$0xff]
        %v334 = vld [vmem:[#allocation2 + $0xf8] sm:$0xff]
        %v335 = vld [vmem:[#allocation2 + $0x108] sm:$0xff]
        %v336 = vld [vmem:[#allocation2 + $0x110] sm:$0xff]
        %v337 = vld [vmem:[#allocation2 + $0x120] sm:$0xff]
        %v338 = vld [vmem:[#allocation2 + $0x128] sm:$0xff]
        %v339 = vld [vmem:[#allocation2 + $0x138] sm:$0xff]
        %v340 = vld [vmem:[#allocation2 + $0x140] sm:$0xff]
        %v341 = vld [vmem:[#allocation2 + $0x150] sm:$0xff]
        %v342 = vld [vmem:[#allocation2 + $0x158] sm:$0xff]
        %v343 = vld [vmem:[#allocation2 + $0x168] sm:$0xff]
        %v344 = vld [vmem:[#allocation2 + $0x170] sm:$0xff]
        %v345 = vld [vmem:[#allocation2 + $0x1] sm:$0xff]
        %v346 = vld [vmem:[#allocation2 + $0x9] sm:$0xff]
        %v347 = vld [vmem:[#allocation2 + $0x19] sm:$0xff]
        %v348 = vld [vmem:[#allocation2 + $0x21] sm:$0xff]
        %v349 = vld [vmem:[#allocation2 + $0x31] sm:$0xff]
        %v350 = vld [vmem:[#allocation2 + $0x39] sm:$0xff]
        %v351 = vld [vmem:[#allocation2 + $0x49] sm:$0xff]
        %v352 = vld [vmem:[#allocation2 + $0x51] sm:$0xff]
        %v353 = vld [vmem:[#allocation2 + $0x61] sm:$0xff]
        %v354 = vld [vmem:[#allocation2 + $0x69] sm:$0xff]
        %v355 = vld [vmem:[#allocation2 + $0x79] sm:$0xff]
        %v356 = vld [vmem:[#allocation2 + $0x81] sm:$0xff]
        %v357 = vld [vmem:[#allocation2 + $0x91] sm:$0xff]
        %v358 = vld [vmem:[#allocation2 + $0x99] sm:$0xff]
        %v359 = vld [vmem:[#allocation2 + $0xa9] sm:$0xff]
        %v360 = vld [vmem:[#allocation2 + $0xb1] sm:$0xff]
        %v361 = vld [vmem:[#allocation2 + $0xc1] sm:$0xff]
        %v362 = vld [vmem:[#allocation2 + $0xc9] sm:$0xff]
        %v363 = vld [vmem:[#allocation2 + $0xd9] sm:$0xff]
        %v364 = vld [vmem:[#allocation2 + $0xe1] sm:$0xff]
        %v365 = vld [vmem:[#allocation2 + $0xf1] sm:$0xff]
        %v366 = vld [vmem:[#allocation2 + $0xf9] sm:$0xff]
        %v367 = vld [vmem:[#allocation2 + $0x109] sm:$0xff]
        %v368 = vld [vmem:[#allocation2 + $0x111] sm:$0xff]
        %v369 = vld [vmem:[#allocation2 + $0x121] sm:$0xff]
        %v370 = vld [vmem:[#allocation2 + $0x129] sm:$0xff]
        %v371 = vld [vmem:[#allocation2 + $0x139] sm:$0xff]
        %v372 = vld [vmem:[#allocation2 + $0x141] sm:$0xff]
        %v373 = vld [vmem:[#allocation2 + $0x151] sm:$0xff]
        %v374 = vld [vmem:[#allocation2 + $0x159] sm:$0xff]
        %v375 = vld [vmem:[#allocation2 + $0x169] sm:$0xff]
        %v376 = vld [vmem:[#allocation2 + $0x171] sm:$0xff]
        %v377 = vld [vmem:[#allocation2 + $0x2] sm:$0xff]
        %v378 = vld [vmem:[#allocation2 + $0xa] sm:$0xff]
        %v379 = vld [vmem:[#allocation2 + $0x1a] sm:$0xff]
        %v380 = vld [vmem:[#allocation2 + $0x22] sm:$0xff]
        %v381 = vld [vmem:[#allocation2 + $0x32] sm:$0xff]
        %v382 = vld [vmem:[#allocation2 + $0x3a] sm:$0xff]
        %v383 = vld [vmem:[#allocation2 + $0x4a] sm:$0xff]
        %v384 = vld [vmem:[#allocation2 + $0x52] sm:$0xff]
        %v385 = vld [vmem:[#allocation2 + $0x62] sm:$0xff]
        %v386 = vld [vmem:[#allocation2 + $0x6a] sm:$0xff]
        %v387 = vld [vmem:[#allocation2 + $0x7a] sm:$0xff]
        %v388 = vld [vmem:[#allocation2 + $0x82] sm:$0xff]
        %v389 = vld [vmem:[#allocation2 + $0x92] sm:$0xff]
        %v390 = vld [vmem:[#allocation2 + $0x9a] sm:$0xff]
        %v391 = vld [vmem:[#allocation2 + $0xaa] sm:$0xff]
        %v392 = vld [vmem:[#allocation2 + $0xb2] sm:$0xff]
        %v393 = vld [vmem:[#allocation2 + $0xc2] sm:$0xff]
        %v394 = vld [vmem:[#allocation2 + $0xca] sm:$0xff]
        %v395 = vld [vmem:[#allocation2 + $0xda] sm:$0xff]
        %v396 = vld [vmem:[#allocation2 + $0xe2] sm:$0xff]
        %v397 = vld [vmem:[#allocation2 + $0xf2] sm:$0xff]
        %v398 = vld [vmem:[#allocation2 + $0xfa] sm:$0xff]
        %v399 = vld [vmem:[#allocation2 + $0x10a] sm:$0xff]
        %v400 = vld [vmem:[#allocation2 + $0x112] sm:$0xff]
        %v401 = vld [vmem:[#allocation2 + $0x122] sm:$0xff]
        %v402 = vld [vmem:[#allocation2 + $0x12a] sm:$0xff]
        %v403 = vld [vmem:[#allocation2 + $0x13a] sm:$0xff]
        %v404 = vld [vmem:[#allocation2 + $0x142] sm:$0xff]
        %v405 = vld [vmem:[#allocation2 + $0x152] sm:$0xff]
        %v406 = vld [vmem:[#allocation2 + $0x15a] sm:$0xff]
        %v407 = vld [vmem:[#allocation2 + $0x16a] sm:$0xff]
        %v408 = vld [vmem:[#allocation2 + $0x172] sm:$0xff]
        %v409 = vld [vmem:[%s201] sm:$0xff]
        %v410 = vld [vmem:[%s201 + $0x8] sm:$0xff]
        %v411 = vld [vmem:[%s201 + $0x18] sm:$0xff]
        %v412 = vld [vmem:[%s201 + $0x20] sm:$0xff]
        %v413 = vld [vmem:[%s201 + $0x30] sm:$0xff]
        %v414 = vld [vmem:[%s201 + $0x38] sm:$0xff]
        %v415 = vld [vmem:[%s201 + $0x48] sm:$0xff]
        %v416 = vld [vmem:[%s201 + $0x50] sm:$0xff]
        %v417 = vld [vmem:[%s201 + $0x60] sm:$0xff]
        %v418 = vld [vmem:[%s201 + $0x68] sm:$0xff]
        %v419 = vld [vmem:[%s201 + $0x78] sm:$0xff]
        %v420 = vld [vmem:[%s201 + $0x80] sm:$0xff]
        %v421 = vld [vmem:[%s201 + $0x90] sm:$0xff]
        %v422 = vld [vmem:[%s201 + $0x98] sm:$0xff]
        %v423 = vld [vmem:[%s201 + $0xa8] sm:$0xff]
        %v424 = vld [vmem:[%s201 + $0xb0] sm:$0xff]
        %v425 = vld [vmem:[%s201 + $0xc0] sm:$0xff]
        %v426 = vld [vmem:[%s201 + $0xc8] sm:$0xff]
        %v427 = vld [vmem:[%s201 + $0xd8] sm:$0xff]
        %v428 = vld [vmem:[%s201 + $0xe0] sm:$0xff]
        %v429 = vld [vmem:[%s201 + $0xf0] sm:$0xff]
        %v430 = vld [vmem:[%s201 + $0xf8] sm:$0xff]
        %v431 = vld [vmem:[%s201 + $0x108] sm:$0xff]
        %v432 = vld [vmem:[%s201 + $0x110] sm:$0xff]
        %v433 = vld [vmem:[%s201 + $0x120] sm:$0xff]
        %v434 = vld [vmem:[%s201 + $0x128] sm:$0xff]
        %v435 = vld [vmem:[%s201 + $0x138] sm:$0xff]
        %v436 = vld [vmem:[%s201 + $0x140] sm:$0xff]
        %v437 = vld [vmem:[%s201 + $0x150] sm:$0xff]
        %v438 = vld [vmem:[%s201 + $0x158] sm:$0xff]
        %v439 = vld [vmem:[%s201 + $0x168] sm:$0xff]
        %v440 = vld [vmem:[%s201 + $0x170] sm:$0xff]
        %v441 = vld [vmem:[%s201 + $0x1] sm:$0xff]
        %v442 = vld [vmem:[%s201 + $0x9] sm:$0xff]
        %v443 = vld [vmem:[%s201 + $0x19] sm:$0xff]
        %v444 = vld [vmem:[%s201 + $0x21] sm:$0xff]
        %v445 = vld [vmem:[%s201 + $0x31] sm:$0xff]
        %v446 = vld [vmem:[%s201 + $0x39] sm:$0xff]
        %v447 = vld [vmem:[%s201 + $0x49] sm:$0xff]
        %v448 = vld [vmem:[%s201 + $0x51] sm:$0xff]
        %v449 = vld [vmem:[%s201 + $0x61] sm:$0xff]
        %v450 = vld [vmem:[%s201 + $0x69] sm:$0xff]
        %v451 = vld [vmem:[%s201 + $0x79] sm:$0xff]
        %v452 = vld [vmem:[%s201 + $0x81] sm:$0xff]
        %v453 = vld [vmem:[%s201 + $0x91] sm:$0xff]
        %v454 = vld [vmem:[%s201 + $0x99] sm:$0xff]
        %v455 = vld [vmem:[%s201 + $0xa9] sm:$0xff]
        %v456 = vld [vmem:[%s201 + $0xb1] sm:$0xff]
        %v457 = vld [vmem:[%s201 + $0xc1] sm:$0xff]
        %v458 = vld [vmem:[%s201 + $0xc9] sm:$0xff]
        %v459 = vld [vmem:[%s201 + $0xd9] sm:$0xff]
        %v460 = vld [vmem:[%s201 + $0xe1] sm:$0xff]
        %v461 = vld [vmem:[%s201 + $0xf1] sm:$0xff]
        %v462 = vld [vmem:[%s201 + $0xf9] sm:$0xff]
        %v463 = vld [vmem:[%s201 + $0x109] sm:$0xff]
        %v464 = vld [vmem:[%s201 + $0x111] sm:$0xff]
        %v465 = vld [vmem:[%s201 + $0x121] sm:$0xff]
        %v466 = vld [vmem:[%s201 + $0x129] sm:$0xff]
        %v467 = vld [vmem:[%s201 + $0x139] sm:$0xff]
        %v468 = vld [vmem:[%s201 + $0x141] sm:$0xff]
        %v469 = vld [vmem:[%s201 + $0x151] sm:$0xff]
        %v470 = vld [vmem:[%s201 + $0x159] sm:$0xff]
        %v471 = vld [vmem:[%s201 + $0x169] sm:$0xff]
        %v472 = vld [vmem:[%s201 + $0x171] sm:$0xff]
        %v473 = vld [vmem:[%s201 + $0x2] sm:$0xff]
        %v474 = vld [vmem:[%s201 + $0xa] sm:$0xff]
        %v475 = vld [vmem:[%s201 + $0x1a] sm:$0xff]
        %v476 = vld [vmem:[%s201 + $0x22] sm:$0xff]
        %v477 = vld [vmem:[%s201 + $0x32] sm:$0xff]
        %v478 = vld [vmem:[%s201 + $0x3a] sm:$0xff]
        %v479 = vld [vmem:[%s201 + $0x4a] sm:$0xff]
        %v480 = vld [vmem:[%s201 + $0x52] sm:$0xff]
        %v481 = vld [vmem:[%s201 + $0x62] sm:$0xff]
        %v482 = vld [vmem:[%s201 + $0x6a] sm:$0xff]
        %v483 = vld [vmem:[%s201 + $0x7a] sm:$0xff]
        %v484 = vld [vmem:[%s201 + $0x82] sm:$0xff]
        %v485 = vld [vmem:[%s201 + $0x92] sm:$0xff]
        %v486 = vld [vmem:[%s201 + $0x9a] sm:$0xff]
        %v487 = vld [vmem:[%s201 + $0xaa] sm:$0xff]
        %v488 = vld [vmem:[%s201 + $0xb2] sm:$0xff]
        %v489 = vld [vmem:[%s201 + $0xc2] sm:$0xff]
        %v490 = vld [vmem:[%s201 + $0xca] sm:$0xff]
        %v491 = vld [vmem:[%s201 + $0xda] sm:$0xff]
        %v492 = vld [vmem:[%s201 + $0xe2] sm:$0xff]
        %v493 = vld [vmem:[%s201 + $0xf2] sm:$0xff]
        %v494 = vld [vmem:[%s201 + $0xfa] sm:$0xff]
        %v495 = vld [vmem:[%s201 + $0x10a] sm:$0xff]
        %v496 = vld [vmem:[%s201 + $0x112] sm:$0xff]
        %v497 = vld [vmem:[%s201 + $0x122] sm:$0xff]
        %v498 = vld [vmem:[%s201 + $0x12a] sm:$0xff]
        %v499 = vld [vmem:[%s201 + $0x13a] sm:$0xff]
        %v500 = vld [vmem:[%s201 + $0x142] sm:$0xff]
        %v501 = vld [vmem:[%s201 + $0x152] sm:$0xff]
        %v502 = vld [vmem:[%s201 + $0x15a] sm:$0xff]
        %v503 = vld [vmem:[%s201 + $0x16a] sm:$0xff]
        %v504 = vld [vmem:[%s201 + $0x172] sm:$0xff]
        %s505 = scalar_lea.vmem [#allocation2], 48
        %v506 = vld [vmem:[%s505] sm:$0xff]
        %v507 = vld [vmem:[%s505 + $0x8] sm:$0xff]
        %v508 = vld [vmem:[%s505 + $0x18] sm:$0xff]
        %v509 = vld [vmem:[%s505 + $0x20] sm:$0xff]
        %v510 = vld [vmem:[%s505 + $0x30] sm:$0xff]
        %v511 = vld [vmem:[%s505 + $0x38] sm:$0xff]
        %v512 = vld [vmem:[%s505 + $0x48] sm:$0xff]
        %v513 = vld [vmem:[%s505 + $0x50] sm:$0xff]
        %v514 = vld [vmem:[%s505 + $0x60] sm:$0xff]
        %v515 = vld [vmem:[%s505 + $0x68] sm:$0xff]
        %v516 = vld [vmem:[%s505 + $0x78] sm:$0xff]
        %v517 = vld [vmem:[%s505 + $0x80] sm:$0xff]
        %v518 = vld [vmem:[%s505 + $0x90] sm:$0xff]
        %v519 = vld [vmem:[%s505 + $0x98] sm:$0xff]
        %v520 = vld [vmem:[%s505 + $0xa8] sm:$0xff]
        %v521 = vld [vmem:[%s505 + $0xb0] sm:$0xff]
        %v522 = vld [vmem:[%s505 + $0xc0] sm:$0xff]
        %v523 = vld [vmem:[%s505 + $0xc8] sm:$0xff]
        %v524 = vld [vmem:[%s505 + $0xd8] sm:$0xff]
        %v525 = vld [vmem:[%s505 + $0xe0] sm:$0xff]
        %v526 = vld [vmem:[%s505 + $0xf0] sm:$0xff]
        %v527 = vld [vmem:[%s505 + $0xf8] sm:$0xff]
        %v528 = vld [vmem:[%s505 + $0x108] sm:$0xff]
        %v529 = vld [vmem:[%s505 + $0x110] sm:$0xff]
        %v530 = vld [vmem:[%s505 + $0x120] sm:$0xff]
        %v531 = vld [vmem:[%s505 + $0x128] sm:$0xff]
        %v532 = vld [vmem:[%s505 + $0x138] sm:$0xff]
        %v533 = vld [vmem:[%s505 + $0x140] sm:$0xff]
        %v534 = vld [vmem:[%s505 + $0x150] sm:$0xff]
        %v535 = vld [vmem:[%s505 + $0x158] sm:$0xff]
        %v536 = vld [vmem:[%s505 + $0x168] sm:$0xff]
        %v537 = vld [vmem:[%s505 + $0x170] sm:$0xff]
        %v538 = vld [vmem:[%s505 + $0x1] sm:$0xff]
        %v539 = vld [vmem:[%s505 + $0x9] sm:$0xff]
        %v540 = vld [vmem:[%s505 + $0x19] sm:$0xff]
        %v541 = vld [vmem:[%s505 + $0x21] sm:$0xff]
        %v542 = vld [vmem:[%s505 + $0x31] sm:$0xff]
        %v543 = vld [vmem:[%s505 + $0x39] sm:$0xff]
        %v544 = vld [vmem:[%s505 + $0x49] sm:$0xff]
        %v545 = vld [vmem:[%s505 + $0x51] sm:$0xff]
        %v546 = vld [vmem:[%s505 + $0x61] sm:$0xff]
        %v547 = vld [vmem:[%s505 + $0x69] sm:$0xff]
        %v548 = vld [vmem:[%s505 + $0x79] sm:$0xff]
        %v549 = vld [vmem:[%s505 + $0x81] sm:$0xff]
        %v550 = vld [vmem:[%s505 + $0x91] sm:$0xff]
        %v551 = vld [vmem:[%s505 + $0x99] sm:$0xff]
        %v552 = vld [vmem:[%s505 + $0xa9] sm:$0xff]
        %v553 = vld [vmem:[%s505 + $0xb1] sm:$0xff]
        %v554 = vld [vmem:[%s505 + $0xc1] sm:$0xff]
        %v555 = vld [vmem:[%s505 + $0xc9] sm:$0xff]
        %v556 = vld [vmem:[%s505 + $0xd9] sm:$0xff]
        %v557 = vld [vmem:[%s505 + $0xe1] sm:$0xff]
        %v558 = vld [vmem:[%s505 + $0xf1] sm:$0xff]
        %v559 = vld [vmem:[%s505 + $0xf9] sm:$0xff]
        %v560 = vld [vmem:[%s505 + $0x109] sm:$0xff]
        %v561 = vld [vmem:[%s505 + $0x111] sm:$0xff]
        %v562 = vld [vmem:[%s505 + $0x121] sm:$0xff]
        %v563 = vld [vmem:[%s505 + $0x129] sm:$0xff]
        %v564 = vld [vmem:[%s505 + $0x139] sm:$0xff]
        %v565 = vld [vmem:[%s505 + $0x141] sm:$0xff]
        %v566 = vld [vmem:[%s505 + $0x151] sm:$0xff]
        %v567 = vld [vmem:[%s505 + $0x159] sm:$0xff]
        %v568 = vld [vmem:[%s505 + $0x169] sm:$0xff]
        %v569 = vld [vmem:[%s505 + $0x171] sm:$0xff]
        %v570 = vld [vmem:[%s505 + $0x2] sm:$0xff]
        %v571 = vld [vmem:[%s505 + $0xa] sm:$0xff]
        %v572 = vld [vmem:[%s505 + $0x1a] sm:$0xff]
        %v573 = vld [vmem:[%s505 + $0x22] sm:$0xff]
        %v574 = vld [vmem:[%s505 + $0x32] sm:$0xff]
        %v575 = vld [vmem:[%s505 + $0x3a] sm:$0xff]
        %v576 = vld [vmem:[%s505 + $0x4a] sm:$0xff]
        %v577 = vld [vmem:[%s505 + $0x52] sm:$0xff]
        %v578 = vld [vmem:[%s505 + $0x62] sm:$0xff]
        %v579 = vld [vmem:[%s505 + $0x6a] sm:$0xff]
        %v580 = vld [vmem:[%s505 + $0x7a] sm:$0xff]
        %v581 = vld [vmem:[%s505 + $0x82] sm:$0xff]
        %v582 = vld [vmem:[%s505 + $0x92] sm:$0xff]
        %v583 = vld [vmem:[%s505 + $0x9a] sm:$0xff]
        %v584 = vld [vmem:[%s505 + $0xaa] sm:$0xff]
        %v585 = vld [vmem:[%s505 + $0xb2] sm:$0xff]
        %v586 = vld [vmem:[%s505 + $0xc2] sm:$0xff]
        %v587 = vld [vmem:[%s505 + $0xca] sm:$0xff]
        %v588 = vld [vmem:[%s505 + $0xda] sm:$0xff]
        %v589 = vld [vmem:[%s505 + $0xe2] sm:$0xff]
        %v590 = vld [vmem:[%s505 + $0xf2] sm:$0xff]
        %v591 = vld [vmem:[%s505 + $0xfa] sm:$0xff]
        %v592 = vld [vmem:[%s505 + $0x10a] sm:$0xff]
        %v593 = vld [vmem:[%s505 + $0x112] sm:$0xff]
        %v594 = vld [vmem:[%s505 + $0x122] sm:$0xff]
        %v595 = vld [vmem:[%s505 + $0x12a] sm:$0xff]
        %v596 = vld [vmem:[%s505 + $0x13a] sm:$0xff]
        %v597 = vld [vmem:[%s505 + $0x142] sm:$0xff]
        %v598 = vld [vmem:[%s505 + $0x152] sm:$0xff]
        %v599 = vld [vmem:[%s505 + $0x15a] sm:$0xff]
        %v600 = vld [vmem:[%s505 + $0x16a] sm:$0xff]
        %v601 = vld [vmem:[%s505 + $0x172] sm:$0xff]
        %634 = vrot.lane.b32.xlu0 %v345, 4
        %v635 = vpop.permute.xlu0 %634
        %636 = vrot.lane.b32.xlu0 %v346, 4
        %v637 = vpop.permute.xlu0 %636
        %638 = vrot.lane.b32.xlu0 %v347, 4
        %v639 = vpop.permute.xlu0 %638
        %640 = vrot.lane.b32.xlu0 %v348, 4
        %v641 = vpop.permute.xlu0 %640
        %642 = vrot.lane.b32.xlu0 %v349, 4
        %v643 = vpop.permute.xlu0 %642
        %644 = vrot.lane.b32.xlu0 %v350, 4
        %v645 = vpop.permute.xlu0 %644
        %646 = vrot.lane.b32.xlu0 %v351, 4
        %v647 = vpop.permute.xlu0 %646
        %648 = vrot.lane.b32.xlu0 %v352, 4
        %v649 = vpop.permute.xlu0 %648
        %650 = vrot.lane.b32.xlu0 %v353, 4
        %v651 = vpop.permute.xlu0 %650
        %652 = vrot.lane.b32.xlu0 %v354, 4
        %v653 = vpop.permute.xlu0 %652
        %654 = vrot.lane.b32.xlu0 %v355, 4
        %v655 = vpop.permute.xlu0 %654
        %656 = vrot.lane.b32.xlu0 %v356, 4
        %v657 = vpop.permute.xlu0 %656
        %658 = vrot.lane.b32.xlu0 %v357, 4
        %v659 = vpop.permute.xlu0 %658
        %660 = vrot.lane.b32.xlu0 %v358, 4
        %v661 = vpop.permute.xlu0 %660
        %662 = vrot.lane.b32.xlu0 %v359, 4
        %v663 = vpop.permute.xlu0 %662
        %664 = vrot.lane.b32.xlu0 %v360, 4
        %v665 = vpop.permute.xlu0 %664
        %666 = vrot.lane.b32.xlu0 %v361, 4
        %v667 = vpop.permute.xlu0 %666
        %668 = vrot.lane.b32.xlu0 %v362, 4
        %v669 = vpop.permute.xlu0 %668
        %670 = vrot.lane.b32.xlu0 %v363, 4
        %v671 = vpop.permute.xlu0 %670
        %672 = vrot.lane.b32.xlu0 %v364, 4
        %v673 = vpop.permute.xlu0 %672
        %674 = vrot.lane.b32.xlu0 %v365, 4
        %v675 = vpop.permute.xlu0 %674
        %676 = vrot.lane.b32.xlu0 %v366, 4
        %v677 = vpop.permute.xlu0 %676
        %678 = vrot.lane.b32.xlu0 %v367, 4
        %v679 = vpop.permute.xlu0 %678
        %680 = vrot.lane.b32.xlu0 %v368, 4
        %v681 = vpop.permute.xlu0 %680
        %682 = vrot.lane.b32.xlu0 %v369, 4
        %v683 = vpop.permute.xlu0 %682
        %684 = vrot.lane.b32.xlu0 %v370, 4
        %v685 = vpop.permute.xlu0 %684
        %686 = vrot.lane.b32.xlu0 %v371, 4
        %v687 = vpop.permute.xlu0 %686
        %688 = vrot.lane.b32.xlu0 %v372, 4
        %v689 = vpop.permute.xlu0 %688
        %690 = vrot.lane.b32.xlu0 %v373, 4
        %v691 = vpop.permute.xlu0 %690
        %692 = vrot.lane.b32.xlu0 %v374, 4
        %v693 = vpop.permute.xlu0 %692
        %694 = vrot.lane.b32.xlu0 %v375, 4
        %v695 = vpop.permute.xlu0 %694
        %696 = vrot.lane.b32.xlu0 %v376, 4
        %v697 = vpop.permute.xlu0 %696
        %762 = vrot.lane.b32.xlu0 %v377, 8
        %v763 = vpop.permute.xlu0 %762
        %764 = vrot.lane.b32.xlu0 %v378, 8
        %v765 = vpop.permute.xlu0 %764
        %766 = vrot.lane.b32.xlu0 %v379, 8
        %v767 = vpop.permute.xlu0 %766
        %768 = vrot.lane.b32.xlu0 %v380, 8
        %v769 = vpop.permute.xlu0 %768
        %770 = vrot.lane.b32.xlu0 %v381, 8
        %v771 = vpop.permute.xlu0 %770
        %772 = vrot.lane.b32.xlu0 %v382, 8
        %v773 = vpop.permute.xlu0 %772
        %774 = vrot.lane.b32.xlu0 %v383, 8
        %v775 = vpop.permute.xlu0 %774
        %776 = vrot.lane.b32.xlu0 %v384, 8
        %v777 = vpop.permute.xlu0 %776
        %778 = vrot.lane.b32.xlu0 %v385, 8
        %v779 = vpop.permute.xlu0 %778
        %780 = vrot.lane.b32.xlu0 %v386, 8
        %v781 = vpop.permute.xlu0 %780
        %782 = vrot.lane.b32.xlu0 %v387, 8
        %v783 = vpop.permute.xlu0 %782
        %784 = vrot.lane.b32.xlu0 %v388, 8
        %v785 = vpop.permute.xlu0 %784
        %786 = vrot.lane.b32.xlu0 %v389, 8
        %v787 = vpop.permute.xlu0 %786
        %788 = vrot.lane.b32.xlu0 %v390, 8
        %v789 = vpop.permute.xlu0 %788
        %790 = vrot.lane.b32.xlu0 %v391, 8
        %v791 = vpop.permute.xlu0 %790
        %792 = vrot.lane.b32.xlu0 %v392, 8
        %v793 = vpop.permute.xlu0 %792
        %794 = vrot.lane.b32.xlu0 %v393, 8
        %v795 = vpop.permute.xlu0 %794
        %796 = vrot.lane.b32.xlu0 %v394, 8
        %v797 = vpop.permute.xlu0 %796
        %798 = vrot.lane.b32.xlu0 %v395, 8
        %v799 = vpop.permute.xlu0 %798
        %800 = vrot.lane.b32.xlu0 %v396, 8
        %v801 = vpop.permute.xlu0 %800
        %802 = vrot.lane.b32.xlu0 %v397, 8
        %v803 = vpop.permute.xlu0 %802
        %804 = vrot.lane.b32.xlu0 %v398, 8
        %v805 = vpop.permute.xlu0 %804
        %806 = vrot.lane.b32.xlu0 %v399, 8
        %v807 = vpop.permute.xlu0 %806
        %808 = vrot.lane.b32.xlu0 %v400, 8
        %v809 = vpop.permute.xlu0 %808
        %810 = vrot.lane.b32.xlu0 %v401, 8
        %v811 = vpop.permute.xlu0 %810
        %812 = vrot.lane.b32.xlu0 %v402, 8
        %v813 = vpop.permute.xlu0 %812
        %814 = vrot.lane.b32.xlu0 %v403, 8
        %v815 = vpop.permute.xlu0 %814
        %816 = vrot.lane.b32.xlu0 %v404, 8
        %v817 = vpop.permute.xlu0 %816
        %818 = vrot.lane.b32.xlu0 %v405, 8
        %v819 = vpop.permute.xlu0 %818
        %820 = vrot.lane.b32.xlu0 %v406, 8
        %v821 = vpop.permute.xlu0 %820
        %822 = vrot.lane.b32.xlu0 %v407, 8
        %v823 = vpop.permute.xlu0 %822
        %824 = vrot.lane.b32.xlu0 %v408, 8
        %v825 = vpop.permute.xlu0 %824
        %890 = vrot.lane.b32.xlu0 %v409, 12
        %v891 = vpop.permute.xlu0 %890
        %892 = vrot.lane.b32.xlu0 %v410, 12
        %v893 = vpop.permute.xlu0 %892
        %894 = vrot.lane.b32.xlu0 %v411, 12
        %v895 = vpop.permute.xlu0 %894
        %896 = vrot.lane.b32.xlu0 %v412, 12
        %v897 = vpop.permute.xlu0 %896
        %898 = vrot.lane.b32.xlu0 %v413, 12
        %v899 = vpop.permute.xlu0 %898
        %900 = vrot.lane.b32.xlu0 %v414, 12
        %v901 = vpop.permute.xlu0 %900
        %902 = vrot.lane.b32.xlu0 %v415, 12
        %v903 = vpop.permute.xlu0 %902
        %904 = vrot.lane.b32.xlu0 %v416, 12
        %v905 = vpop.permute.xlu0 %904
        %906 = vrot.lane.b32.xlu0 %v417, 12
        %v907 = vpop.permute.xlu0 %906
        %908 = vrot.lane.b32.xlu0 %v418, 12
        %v909 = vpop.permute.xlu0 %908
        %910 = vrot.lane.b32.xlu0 %v419, 12
        %v911 = vpop.permute.xlu0 %910
        %912 = vrot.lane.b32.xlu0 %v420, 12
        %v913 = vpop.permute.xlu0 %912
        %914 = vrot.lane.b32.xlu0 %v421, 12
        %v915 = vpop.permute.xlu0 %914
        %916 = vrot.lane.b32.xlu0 %v422, 12
        %v917 = vpop.permute.xlu0 %916
        %918 = vrot.lane.b32.xlu0 %v423, 12
        %v919 = vpop.permute.xlu0 %918
        %920 = vrot.lane.b32.xlu0 %v424, 12
        %v921 = vpop.permute.xlu0 %920
        %922 = vrot.lane.b32.xlu0 %v425, 12
        %v923 = vpop.permute.xlu0 %922
        %924 = vrot.lane.b32.xlu0 %v426, 12
        %v925 = vpop.permute.xlu0 %924
        %926 = vrot.lane.b32.xlu0 %v427, 12
        %v927 = vpop.permute.xlu0 %926
        %928 = vrot.lane.b32.xlu0 %v428, 12
        %v929 = vpop.permute.xlu0 %928
        %930 = vrot.lane.b32.xlu0 %v429, 12
        %v931 = vpop.permute.xlu0 %930
        %932 = vrot.lane.b32.xlu0 %v430, 12
        %v933 = vpop.permute.xlu0 %932
        %934 = vrot.lane.b32.xlu0 %v431, 12
        %v935 = vpop.permute.xlu0 %934
        %936 = vrot.lane.b32.xlu0 %v432, 12
        %v937 = vpop.permute.xlu0 %936
        %938 = vrot.lane.b32.xlu0 %v433, 12
        %v939 = vpop.permute.xlu0 %938
        %940 = vrot.lane.b32.xlu0 %v434, 12
        %v941 = vpop.permute.xlu0 %940
        %942 = vrot.lane.b32.xlu0 %v435, 12
        %v943 = vpop.permute.xlu0 %942
        %944 = vrot.lane.b32.xlu0 %v436, 12
        %v945 = vpop.permute.xlu0 %944
        %946 = vrot.lane.b32.xlu0 %v437, 12
        %v947 = vpop.permute.xlu0 %946
        %948 = vrot.lane.b32.xlu0 %v438, 12
        %v949 = vpop.permute.xlu0 %948
        %950 = vrot.lane.b32.xlu0 %v439, 12
        %v951 = vpop.permute.xlu0 %950
        %952 = vrot.lane.b32.xlu0 %v440, 12
        %v953 = vpop.permute.xlu0 %952
        %1018 = vrot.lane.b32.xlu0 %v441, 16
        %v1019 = vpop.permute.xlu0 %1018
        %1020 = vrot.lane.b32.xlu0 %v442, 16
        %v1021 = vpop.permute.xlu0 %1020
        %1022 = vrot.lane.b32.xlu0 %v443, 16
        %v1023 = vpop.permute.xlu0 %1022
        %1024 = vrot.lane.b32.xlu0 %v444, 16
        %v1025 = vpop.permute.xlu0 %1024
        %1026 = vrot.lane.b32.xlu0 %v445, 16
        %v1027 = vpop.permute.xlu0 %1026
        %1028 = vrot.lane.b32.xlu0 %v446, 16
        %v1029 = vpop.permute.xlu0 %1028
        %1030 = vrot.lane.b32.xlu0 %v447, 16
        %v1031 = vpop.permute.xlu0 %1030
        %1032 = vrot.lane.b32.xlu0 %v448, 16
        %v1033 = vpop.permute.xlu0 %1032
        %1034 = vrot.lane.b32.xlu0 %v449, 16
        %v1035 = vpop.permute.xlu0 %1034
        %1036 = vrot.lane.b32.xlu0 %v450, 16
        %v1037 = vpop.permute.xlu0 %1036
        %1038 = vrot.lane.b32.xlu0 %v451, 16
        %v1039 = vpop.permute.xlu0 %1038
        %1040 = vrot.lane.b32.xlu0 %v452, 16
        %v1041 = vpop.permute.xlu0 %1040
        %1042 = vrot.lane.b32.xlu0 %v453, 16
        %v1043 = vpop.permute.xlu0 %1042
        %1044 = vrot.lane.b32.xlu0 %v454, 16
        %v1045 = vpop.permute.xlu0 %1044
        %1046 = vrot.lane.b32.xlu0 %v455, 16
        %v1047 = vpop.permute.xlu0 %1046
        %1048 = vrot.lane.b32.xlu0 %v456, 16
        %v1049 = vpop.permute.xlu0 %1048
        %1050 = vrot.lane.b32.xlu0 %v457, 16
        %v1051 = vpop.permute.xlu0 %1050
        %1052 = vrot.lane.b32.xlu0 %v458, 16
        %v1053 = vpop.permute.xlu0 %1052
        %1054 = vrot.lane.b32.xlu0 %v459, 16
        %v1055 = vpop.permute.xlu0 %1054
        %1056 = vrot.lane.b32.xlu0 %v460, 16
        %v1057 = vpop.permute.xlu0 %1056
        %1058 = vrot.lane.b32.xlu0 %v461, 16
        %v1059 = vpop.permute.xlu0 %1058
        %1060 = vrot.lane.b32.xlu0 %v462, 16
        %v1061 = vpop.permute.xlu0 %1060
        %1062 = vrot.lane.b32.xlu0 %v463, 16
        %v1063 = vpop.permute.xlu0 %1062
        %1064 = vrot.lane.b32.xlu0 %v464, 16
        %v1065 = vpop.permute.xlu0 %1064
        %1066 = vrot.lane.b32.xlu0 %v465, 16
        %v1067 = vpop.permute.xlu0 %1066
        %1068 = vrot.lane.b32.xlu0 %v466, 16
        %v1069 = vpop.permute.xlu0 %1068
        %1070 = vrot.lane.b32.xlu0 %v467, 16
        %v1071 = vpop.permute.xlu0 %1070
        %1072 = vrot.lane.b32.xlu0 %v468, 16
        %v1073 = vpop.permute.xlu0 %1072
        %1074 = vrot.lane.b32.xlu0 %v469, 16
        %v1075 = vpop.permute.xlu0 %1074
        %1076 = vrot.lane.b32.xlu0 %v470, 16
        %v1077 = vpop.permute.xlu0 %1076
        %1078 = vrot.lane.b32.xlu0 %v471, 16
        %v1079 = vpop.permute.xlu0 %1078
        %1080 = vrot.lane.b32.xlu0 %v472, 16
        %v1081 = vpop.permute.xlu0 %1080
        %1146 = vrot.lane.b32.xlu0 %v473, 20
        %v1147 = vpop.permute.xlu0 %1146
        %1148 = vrot.lane.b32.xlu0 %v474, 20
        %v1149 = vpop.permute.xlu0 %1148
        %1150 = vrot.lane.b32.xlu0 %v475, 20
        %v1151 = vpop.permute.xlu0 %1150
        %1152 = vrot.lane.b32.xlu0 %v476, 20
        %v1153 = vpop.permute.xlu0 %1152
        %1154 = vrot.lane.b32.xlu0 %v477, 20
        %v1155 = vpop.permute.xlu0 %1154
        %1156 = vrot.lane.b32.xlu0 %v478, 20
        %v1157 = vpop.permute.xlu0 %1156
        %1158 = vrot.lane.b32.xlu0 %v479, 20
        %v1159 = vpop.permute.xlu0 %1158
        %1160 = vrot.lane.b32.xlu0 %v480, 20
        %v1161 = vpop.permute.xlu0 %1160
        %1162 = vrot.lane.b32.xlu0 %v481, 20
        %v1163 = vpop.permute.xlu0 %1162
        %1164 = vrot.lane.b32.xlu0 %v482, 20
        %v1165 = vpop.permute.xlu0 %1164
        %1166 = vrot.lane.b32.xlu0 %v483, 20
        %v1167 = vpop.permute.xlu0 %1166
        %1168 = vrot.lane.b32.xlu0 %v484, 20
        %v1169 = vpop.permute.xlu0 %1168
        %1170 = vrot.lane.b32.xlu0 %v485, 20
        %v1171 = vpop.permute.xlu0 %1170
        %1172 = vrot.lane.b32.xlu0 %v486, 20
        %v1173 = vpop.permute.xlu0 %1172
        %1174 = vrot.lane.b32.xlu0 %v487, 20
        %v1175 = vpop.permute.xlu0 %1174
        %1176 = vrot.lane.b32.xlu0 %v488, 20
        %v1177 = vpop.permute.xlu0 %1176
        %1178 = vrot.lane.b32.xlu0 %v489, 20
        %v1179 = vpop.permute.xlu0 %1178
        %1180 = vrot.lane.b32.xlu0 %v490, 20
        %v1181 = vpop.permute.xlu0 %1180
        %1182 = vrot.lane.b32.xlu0 %v491, 20
        %v1183 = vpop.permute.xlu0 %1182
        %1184 = vrot.lane.b32.xlu0 %v492, 20
        %v1185 = vpop.permute.xlu0 %1184
        %1186 = vrot.lane.b32.xlu0 %v493, 20
        %v1187 = vpop.permute.xlu0 %1186
        %1188 = vrot.lane.b32.xlu0 %v494, 20
        %v1189 = vpop.permute.xlu0 %1188
        %1190 = vrot.lane.b32.xlu0 %v495, 20
        %v1191 = vpop.permute.xlu0 %1190
        %1192 = vrot.lane.b32.xlu0 %v496, 20
        %v1193 = vpop.permute.xlu0 %1192
        %1194 = vrot.lane.b32.xlu0 %v497, 20
        %v1195 = vpop.permute.xlu0 %1194
        %1196 = vrot.lane.b32.xlu0 %v498, 20
        %v1197 = vpop.permute.xlu0 %1196
        %1198 = vrot.lane.b32.xlu0 %v499, 20
        %v1199 = vpop.permute.xlu0 %1198
        %1200 = vrot.lane.b32.xlu0 %v500, 20
        %v1201 = vpop.permute.xlu0 %1200
        %1202 = vrot.lane.b32.xlu0 %v501, 20
        %v1203 = vpop.permute.xlu0 %1202
        %1204 = vrot.lane.b32.xlu0 %v502, 20
        %v1205 = vpop.permute.xlu0 %1204
        %1206 = vrot.lane.b32.xlu0 %v503, 20
        %v1207 = vpop.permute.xlu0 %1206
        %1208 = vrot.lane.b32.xlu0 %v504, 20
        %v1209 = vpop.permute.xlu0 %1208
        %1274 = vrot.lane.b32.xlu0 %v506, 24
        %v1275 = vpop.permute.xlu0 %1274
        %1276 = vrot.lane.b32.xlu0 %v507, 24
        %v1277 = vpop.permute.xlu0 %1276
        %1278 = vrot.lane.b32.xlu0 %v508, 24
        %v1279 = vpop.permute.xlu0 %1278
        %1280 = vrot.lane.b32.xlu0 %v509, 24
        %v1281 = vpop.permute.xlu0 %1280
        %1282 = vrot.lane.b32.xlu0 %v510, 24
        %v1283 = vpop.permute.xlu0 %1282
        %1284 = vrot.lane.b32.xlu0 %v511, 24
        %v1285 = vpop.permute.xlu0 %1284
        %1286 = vrot.lane.b32.xlu0 %v512, 24
        %v1287 = vpop.permute.xlu0 %1286
        %1288 = vrot.lane.b32.xlu0 %v513, 24
        %v1289 = vpop.permute.xlu0 %1288
        %1290 = vrot.lane.b32.xlu0 %v514, 24
        %v1291 = vpop.permute.xlu0 %1290
        %1292 = vrot.lane.b32.xlu0 %v515, 24
        %v1293 = vpop.permute.xlu0 %1292
        %1294 = vrot.lane.b32.xlu0 %v516, 24
        %v1295 = vpop.permute.xlu0 %1294
        %1296 = vrot.lane.b32.xlu0 %v517, 24
        %v1297 = vpop.permute.xlu0 %1296
        %1298 = vrot.lane.b32.xlu0 %v518, 24
        %v1299 = vpop.permute.xlu0 %1298
        %1300 = vrot.lane.b32.xlu0 %v519, 24
        %v1301 = vpop.permute.xlu0 %1300
        %1302 = vrot.lane.b32.xlu0 %v520, 24
        %v1303 = vpop.permute.xlu0 %1302
        %1304 = vrot.lane.b32.xlu0 %v521, 24
        %v1305 = vpop.permute.xlu0 %1304
        %1306 = vrot.lane.b32.xlu0 %v522, 24
        %v1307 = vpop.permute.xlu0 %1306
        %1308 = vrot.lane.b32.xlu0 %v523, 24
        %v1309 = vpop.permute.xlu0 %1308
        %1310 = vrot.lane.b32.xlu0 %v524, 24
        %v1311 = vpop.permute.xlu0 %1310
        %1312 = vrot.lane.b32.xlu0 %v525, 24
        %v1313 = vpop.permute.xlu0 %1312
        %1314 = vrot.lane.b32.xlu0 %v526, 24
        %v1315 = vpop.permute.xlu0 %1314
        %1316 = vrot.lane.b32.xlu0 %v527, 24
        %v1317 = vpop.permute.xlu0 %1316
        %1318 = vrot.lane.b32.xlu0 %v528, 24
        %v1319 = vpop.permute.xlu0 %1318
        %1320 = vrot.lane.b32.xlu0 %v529, 24
        %v1321 = vpop.permute.xlu0 %1320
        %1322 = vrot.lane.b32.xlu0 %v530, 24
        %v1323 = vpop.permute.xlu0 %1322
        %1324 = vrot.lane.b32.xlu0 %v531, 24
        %v1325 = vpop.permute.xlu0 %1324
        %1326 = vrot.lane.b32.xlu0 %v532, 24
        %v1327 = vpop.permute.xlu0 %1326
        %1328 = vrot.lane.b32.xlu0 %v533, 24
        %v1329 = vpop.permute.xlu0 %1328
        %1330 = vrot.lane.b32.xlu0 %v534, 24
        %v1331 = vpop.permute.xlu0 %1330
        %1332 = vrot.lane.b32.xlu0 %v535, 24
        %v1333 = vpop.permute.xlu0 %1332
        %1334 = vrot.lane.b32.xlu0 %v536, 24
        %v1335 = vpop.permute.xlu0 %1334
        %1336 = vrot.lane.b32.xlu0 %v537, 24
        %v1337 = vpop.permute.xlu0 %1336
        %1402 = vrot.lane.b32.xlu0 %v538, 28
        %v1403 = vpop.permute.xlu0 %1402
        %1404 = vrot.lane.b32.xlu0 %v539, 28
        %v1405 = vpop.permute.xlu0 %1404
        %1406 = vrot.lane.b32.xlu0 %v540, 28
        %v1407 = vpop.permute.xlu0 %1406
        %1408 = vrot.lane.b32.xlu0 %v541, 28
        %v1409 = vpop.permute.xlu0 %1408
        %1410 = vrot.lane.b32.xlu0 %v542, 28
        %v1411 = vpop.permute.xlu0 %1410
        %1412 = vrot.lane.b32.xlu0 %v543, 28
        %v1413 = vpop.permute.xlu0 %1412
        %1414 = vrot.lane.b32.xlu0 %v544, 28
        %v1415 = vpop.permute.xlu0 %1414
        %1416 = vrot.lane.b32.xlu0 %v545, 28
        %v1417 = vpop.permute.xlu0 %1416
        %1418 = vrot.lane.b32.xlu0 %v546, 28
        %v1419 = vpop.permute.xlu0 %1418
        %1420 = vrot.lane.b32.xlu0 %v547, 28
        %v1421 = vpop.permute.xlu0 %1420
        %1422 = vrot.lane.b32.xlu0 %v548, 28
        %v1423 = vpop.permute.xlu0 %1422
        %1424 = vrot.lane.b32.xlu0 %v549, 28
        %v1425 = vpop.permute.xlu0 %1424
        %1426 = vrot.lane.b32.xlu0 %v550, 28
        %v1427 = vpop.permute.xlu0 %1426
        %1428 = vrot.lane.b32.xlu0 %v551, 28
        %v1429 = vpop.permute.xlu0 %1428
        %1430 = vrot.lane.b32.xlu0 %v552, 28
        %v1431 = vpop.permute.xlu0 %1430
        %1432 = vrot.lane.b32.xlu0 %v553, 28
        %v1433 = vpop.permute.xlu0 %1432
        %1434 = vrot.lane.b32.xlu0 %v554, 28
        %v1435 = vpop.permute.xlu0 %1434
        %1436 = vrot.lane.b32.xlu0 %v555, 28
        %v1437 = vpop.permute.xlu0 %1436
        %1438 = vrot.lane.b32.xlu0 %v556, 28
        %v1439 = vpop.permute.xlu0 %1438
        %1440 = vrot.lane.b32.xlu0 %v557, 28
        %v1441 = vpop.permute.xlu0 %1440
        %1442 = vrot.lane.b32.xlu0 %v558, 28
        %v1443 = vpop.permute.xlu0 %1442
        %1444 = vrot.lane.b32.xlu0 %v559, 28
        %v1445 = vpop.permute.xlu0 %1444
        %1446 = vrot.lane.b32.xlu0 %v560, 28
        %v1447 = vpop.permute.xlu0 %1446
        %1448 = vrot.lane.b32.xlu0 %v561, 28
        %v1449 = vpop.permute.xlu0 %1448
        %1450 = vrot.lane.b32.xlu0 %v562, 28
        %v1451 = vpop.permute.xlu0 %1450
        %1452 = vrot.lane.b32.xlu0 %v563, 28
        %v1453 = vpop.permute.xlu0 %1452
        %1454 = vrot.lane.b32.xlu0 %v564, 28
        %v1455 = vpop.permute.xlu0 %1454
        %1456 = vrot.lane.b32.xlu0 %v565, 28
        %v1457 = vpop.permute.xlu0 %1456
        %1458 = vrot.lane.b32.xlu0 %v566, 28
        %v1459 = vpop.permute.xlu0 %1458
        %1460 = vrot.lane.b32.xlu0 %v567, 28
        %v1461 = vpop.permute.xlu0 %1460
        %1462 = vrot.lane.b32.xlu0 %v568, 28
        %v1463 = vpop.permute.xlu0 %1462
        %1464 = vrot.lane.b32.xlu0 %v569, 28
        %v1465 = vpop.permute.xlu0 %1464
        %1530 = vrot.lane.b32.xlu0 %v570, 32
        %v1531 = vpop.permute.xlu0 %1530
        %1532 = vrot.lane.b32.xlu0 %v571, 32
        %v1533 = vpop.permute.xlu0 %1532
        %1534 = vrot.lane.b32.xlu0 %v572, 32
        %v1535 = vpop.permute.xlu0 %1534
        %1536 = vrot.lane.b32.xlu0 %v573, 32
        %v1537 = vpop.permute.xlu0 %1536
        %1538 = vrot.lane.b32.xlu0 %v574, 32
        %v1539 = vpop.permute.xlu0 %1538
        %1540 = vrot.lane.b32.xlu0 %v575, 32
        %v1541 = vpop.permute.xlu0 %1540
        %1542 = vrot.lane.b32.xlu0 %v576, 32
        %v1543 = vpop.permute.xlu0 %1542
        %1544 = vrot.lane.b32.xlu0 %v577, 32
        %v1545 = vpop.permute.xlu0 %1544
        %1546 = vrot.lane.b32.xlu0 %v578, 32
        %v1547 = vpop.permute.xlu0 %1546
        %1548 = vrot.lane.b32.xlu0 %v579, 32
        %v1549 = vpop.permute.xlu0 %1548
        %1550 = vrot.lane.b32.xlu0 %v580, 32
        %v1551 = vpop.permute.xlu0 %1550
        %1552 = vrot.lane.b32.xlu0 %v581, 32
        %v1553 = vpop.permute.xlu0 %1552
        %1554 = vrot.lane.b32.xlu0 %v582, 32
        %v1555 = vpop.permute.xlu0 %1554
        %1556 = vrot.lane.b32.xlu0 %v583, 32
        %v1557 = vpop.permute.xlu0 %1556
        %1558 = vrot.lane.b32.xlu0 %v584, 32
        %v1559 = vpop.permute.xlu0 %1558
        %1560 = vrot.lane.b32.xlu0 %v585, 32
        %v1561 = vpop.permute.xlu0 %1560
        %1562 = vrot.lane.b32.xlu0 %v586, 32
        %v1563 = vpop.permute.xlu0 %1562
        %1564 = vrot.lane.b32.xlu0 %v587, 32
        %v1565 = vpop.permute.xlu0 %1564
        %1566 = vrot.lane.b32.xlu0 %v588, 32
        %v1567 = vpop.permute.xlu0 %1566
        %1568 = vrot.lane.b32.xlu0 %v589, 32
        %v1569 = vpop.permute.xlu0 %1568
        %1570 = vrot.lane.b32.xlu0 %v590, 32
        %v1571 = vpop.permute.xlu0 %1570
        %1572 = vrot.lane.b32.xlu0 %v591, 32
        %v1573 = vpop.permute.xlu0 %1572
        %1574 = vrot.lane.b32.xlu0 %v592, 32
        %v1575 = vpop.permute.xlu0 %1574
        %1576 = vrot.lane.b32.xlu0 %v593, 32
        %v1577 = vpop.permute.xlu0 %1576
        %1578 = vrot.lane.b32.xlu0 %v594, 32
        %v1579 = vpop.permute.xlu0 %1578
        %1580 = vrot.lane.b32.xlu0 %v595, 32
        %v1581 = vpop.permute.xlu0 %1580
        %1582 = vrot.lane.b32.xlu0 %v596, 32
        %v1583 = vpop.permute.xlu0 %1582
        %1584 = vrot.lane.b32.xlu0 %v597, 32
        %v1585 = vpop.permute.xlu0 %1584
        %1586 = vrot.lane.b32.xlu0 %v598, 32
        %v1587 = vpop.permute.xlu0 %1586
        %1588 = vrot.lane.b32.xlu0 %v599, 32
        %v1589 = vpop.permute.xlu0 %1588
        %1590 = vrot.lane.b32.xlu0 %v600, 32
        %v1591 = vpop.permute.xlu0 %1590
        %1592 = vrot.lane.b32.xlu0 %v601, 32
        %v1593 = vpop.permute.xlu0 %1592
        %v1626 = vsel %vm202, %v313, %v635
        %v1627 = vsel %vm202, %v314, %v637
        %v1628 = vsel %vm202, %v315, %v639
        %v1629 = vsel %vm202, %v316, %v641
        %v1630 = vsel %vm202, %v317, %v643
        %v1631 = vsel %vm202, %v318, %v645
        %v1632 = vsel %vm202, %v319, %v647
        %v1633 = vsel %vm202, %v320, %v649
        %v1634 = vsel %vm202, %v321, %v651
        %v1635 = vsel %vm202, %v322, %v653
        %v1636 = vsel %vm202, %v323, %v655
        %v1637 = vsel %vm202, %v324, %v657
        %v1638 = vsel %vm202, %v325, %v659
        %v1639 = vsel %vm202, %v326, %v661
        %v1640 = vsel %vm202, %v327, %v663
        %v1641 = vsel %vm202, %v328, %v665
        %v1642 = vsel %vm202, %v329, %v667
        %v1643 = vsel %vm202, %v330, %v669
        %v1644 = vsel %vm202, %v331, %v671
        %v1645 = vsel %vm202, %v332, %v673
        %v1646 = vsel %vm202, %v333, %v675
        %v1647 = vsel %vm202, %v334, %v677
        %v1648 = vsel %vm202, %v335, %v679
        %v1649 = vsel %vm202, %v336, %v681
        %v1650 = vsel %vm202, %v337, %v683
        %v1651 = vsel %vm202, %v338, %v685
        %v1652 = vsel %vm202, %v339, %v687
        %v1653 = vsel %vm202, %v340, %v689
        %v1654 = vsel %vm202, %v341, %v691
        %v1655 = vsel %vm202, %v342, %v693
        %v1656 = vsel %vm202, %v343, %v695
        %v1657 = vsel %vm202, %v344, %v697
        %vm1658 = vcmask 64512
        %v1659 = vsel %vm1658, %v1626, %v763
        %v1660 = vsel %vm1658, %v1627, %v765
        %v1661 = vsel %vm1658, %v1628, %v767
        %v1662 = vsel %vm1658, %v1629, %v769
        %v1663 = vsel %vm1658, %v1630, %v771
        %v1664 = vsel %vm1658, %v1631, %v773
        %v1665 = vsel %vm1658, %v1632, %v775
        %v1666 = vsel %vm1658, %v1633, %v777
        %v1667 = vsel %vm1658, %v1634, %v779
        %v1668 = vsel %vm1658, %v1635, %v781
        %v1669 = vsel %vm1658, %v1636, %v783
        %v1670 = vsel %vm1658, %v1637, %v785
        %v1671 = vsel %vm1658, %v1638, %v787
        %v1672 = vsel %vm1658, %v1639, %v789
        %v1673 = vsel %vm1658, %v1640, %v791
        %v1674 = vsel %vm1658, %v1641, %v793
        %v1675 = vsel %vm1658, %v1642, %v795
        %v1676 = vsel %vm1658, %v1643, %v797
        %v1677 = vsel %vm1658, %v1644, %v799
        %v1678 = vsel %vm1658, %v1645, %v801
        %v1679 = vsel %vm1658, %v1646, %v803
        %v1680 = vsel %vm1658, %v1647, %v805
        %v1681 = vsel %vm1658, %v1648, %v807
        %v1682 = vsel %vm1658, %v1649, %v809
        %v1683 = vsel %vm1658, %v1650, %v811
        %v1684 = vsel %vm1658, %v1651, %v813
        %v1685 = vsel %vm1658, %v1652, %v815
        %v1686 = vsel %vm1658, %v1653, %v817
        %v1687 = vsel %vm1658, %v1654, %v819
        %v1688 = vsel %vm1658, %v1655, %v821
        %v1689 = vsel %vm1658, %v1656, %v823
        %v1690 = vsel %vm1658, %v1657, %v825
        %vm1691 = vcmask 97280
        %v1692 = vsel %vm1691, %v1659, %v891
        %v1693 = vsel %vm1691, %v1660, %v893
        %v1694 = vsel %vm1691, %v1661, %v895
        %v1695 = vsel %vm1691, %v1662, %v897
        %v1696 = vsel %vm1691, %v1663, %v899
        %v1697 = vsel %vm1691, %v1664, %v901
        %v1698 = vsel %vm1691, %v1665, %v903
        %v1699 = vsel %vm1691, %v1666, %v905
        %v1700 = vsel %vm1691, %v1667, %v907
        %v1701 = vsel %vm1691, %v1668, %v909
        %v1702 = vsel %vm1691, %v1669, %v911
        %v1703 = vsel %vm1691, %v1670, %v913
        %v1704 = vsel %vm1691, %v1671, %v915
        %v1705 = vsel %vm1691, %v1672, %v917
        %v1706 = vsel %vm1691, %v1673, %v919
        %v1707 = vsel %vm1691, %v1674, %v921
        %v1708 = vsel %vm1691, %v1675, %v923
        %v1709 = vsel %vm1691, %v1676, %v925
        %v1710 = vsel %vm1691, %v1677, %v927
        %v1711 = vsel %vm1691, %v1678, %v929
        %v1712 = vsel %vm1691, %v1679, %v931
        %v1713 = vsel %vm1691, %v1680, %v933
        %v1714 = vsel %vm1691, %v1681, %v935
        %v1715 = vsel %vm1691, %v1682, %v937
        %v1716 = vsel %vm1691, %v1683, %v939
        %v1717 = vsel %vm1691, %v1684, %v941
        %v1718 = vsel %vm1691, %v1685, %v943
        %v1719 = vsel %vm1691, %v1686, %v945
        %v1720 = vsel %vm1691, %v1687, %v947
        %v1721 = vsel %vm1691, %v1688, %v949
        %v1722 = vsel %vm1691, %v1689, %v951
        %v1723 = vsel %vm1691, %v1690, %v953
        %vm1724 = vcmask 130048
        %v1725 = vsel %vm1724, %v1692, %v1019
        %v1726 = vsel %vm1724, %v1693, %v1021
        %v1727 = vsel %vm1724, %v1694, %v1023
        %v1728 = vsel %vm1724, %v1695, %v1025
        %v1729 = vsel %vm1724, %v1696, %v1027
        %v1730 = vsel %vm1724, %v1697, %v1029
        %v1731 = vsel %vm1724, %v1698, %v1031
        %v1732 = vsel %vm1724, %v1699, %v1033
        %v1733 = vsel %vm1724, %v1700, %v1035
        %v1734 = vsel %vm1724, %v1701, %v1037
        %v1735 = vsel %vm1724, %v1702, %v1039
        %v1736 = vsel %vm1724, %v1703, %v1041
        %v1737 = vsel %vm1724, %v1704, %v1043
        %v1738 = vsel %vm1724, %v1705, %v1045
        %v1739 = vsel %vm1724, %v1706, %v1047
        %v1740 = vsel %vm1724, %v1707, %v1049
        %v1741 = vsel %vm1724, %v1708, %v1051
        %v1742 = vsel %vm1724, %v1709, %v1053
        %v1743 = vsel %vm1724, %v1710, %v1055
        %v1744 = vsel %vm1724, %v1711, %v1057
        %v1745 = vsel %vm1724, %v1712, %v1059
        %v1746 = vsel %vm1724, %v1713, %v1061
        %v1747 = vsel %vm1724, %v1714, %v1063
        %v1748 = vsel %vm1724, %v1715, %v1065
        %v1749 = vsel %vm1724, %v1716, %v1067
        %v1750 = vsel %vm1724, %v1717, %v1069
        %v1751 = vsel %vm1724, %v1718, %v1071
        %v1752 = vsel %vm1724, %v1719, %v1073
        %v1753 = vsel %vm1724, %v1720, %v1075
        %v1754 = vsel %vm1724, %v1721, %v1077
        %v1755 = vsel %vm1724, %v1722, %v1079
        %v1756 = vsel %vm1724, %v1723, %v1081
        %vm1757 = vcmask 162816
        %v1758 = vsel %vm1757, %v1725, %v1147
        %v1759 = vsel %vm1757, %v1726, %v1149
        %v1760 = vsel %vm1757, %v1727, %v1151
        %v1761 = vsel %vm1757, %v1728, %v1153
        %v1762 = vsel %vm1757, %v1729, %v1155
        %v1763 = vsel %vm1757, %v1730, %v1157
        %v1764 = vsel %vm1757, %v1731, %v1159
        %v1765 = vsel %vm1757, %v1732, %v1161
        %v1766 = vsel %vm1757, %v1733, %v1163
        %v1767 = vsel %vm1757, %v1734, %v1165
        %v1768 = vsel %vm1757, %v1735, %v1167
        %v1769 = vsel %vm1757, %v1736, %v1169
        %v1770 = vsel %vm1757, %v1737, %v1171
        %v1771 = vsel %vm1757, %v1738, %v1173
        %v1772 = vsel %vm1757, %v1739, %v1175
        %v1773 = vsel %vm1757, %v1740, %v1177
        %v1774 = vsel %vm1757, %v1741, %v1179
        %v1775 = vsel %vm1757, %v1742, %v1181
        %v1776 = vsel %vm1757, %v1743, %v1183
        %v1777 = vsel %vm1757, %v1744, %v1185
        %v1778 = vsel %vm1757, %v1745, %v1187
        %v1779 = vsel %vm1757, %v1746, %v1189
        %v1780 = vsel %vm1757, %v1747, %v1191
        %v1781 = vsel %vm1757, %v1748, %v1193
        %v1782 = vsel %vm1757, %v1749, %v1195
        %v1783 = vsel %vm1757, %v1750, %v1197
        %v1784 = vsel %vm1757, %v1751, %v1199
        %v1785 = vsel %vm1757, %v1752, %v1201
        %v1786 = vsel %vm1757, %v1753, %v1203
        %v1787 = vsel %vm1757, %v1754, %v1205
        %v1788 = vsel %vm1757, %v1755, %v1207
        %v1789 = vsel %vm1757, %v1756, %v1209
        %vm1790 = vcmask 195584
        %v1791 = vsel %vm1790, %v1758, %v1275
        %v1792 = vsel %vm1790, %v1759, %v1277
        %v1793 = vsel %vm1790, %v1760, %v1279
        %v1794 = vsel %vm1790, %v1761, %v1281
        %v1795 = vsel %vm1790, %v1762, %v1283
        %v1796 = vsel %vm1790, %v1763, %v1285
        %v1797 = vsel %vm1790, %v1764, %v1287
        %v1798 = vsel %vm1790, %v1765, %v1289
        %v1799 = vsel %vm1790, %v1766, %v1291
        %v1800 = vsel %vm1790, %v1767, %v1293
        %v1801 = vsel %vm1790, %v1768, %v1295
        %v1802 = vsel %vm1790, %v1769, %v1297
        %v1803 = vsel %vm1790, %v1770, %v1299
        %v1804 = vsel %vm1790, %v1771, %v1301
        %v1805 = vsel %vm1790, %v1772, %v1303
        %v1806 = vsel %vm1790, %v1773, %v1305
        %v1807 = vsel %vm1790, %v1774, %v1307
        %v1808 = vsel %vm1790, %v1775, %v1309
        %v1809 = vsel %vm1790, %v1776, %v1311
        %v1810 = vsel %vm1790, %v1777, %v1313
        %v1811 = vsel %vm1790, %v1778, %v1315
        %v1812 = vsel %vm1790, %v1779, %v1317
        %v1813 = vsel %vm1790, %v1780, %v1319
        %v1814 = vsel %vm1790, %v1781, %v1321
        %v1815 = vsel %vm1790, %v1782, %v1323
        %v1816 = vsel %vm1790, %v1783, %v1325
        %v1817 = vsel %vm1790, %v1784, %v1327
        %v1818 = vsel %vm1790, %v1785, %v1329
        %v1819 = vsel %vm1790, %v1786, %v1331
        %v1820 = vsel %vm1790, %v1787, %v1333
        %v1821 = vsel %vm1790, %v1788, %v1335
        %v1822 = vsel %vm1790, %v1789, %v1337
        %vm1823 = vcmask 228352
        %v1824 = vsel %vm1823, %v1791, %v1403
        %v1825 = vsel %vm1823, %v1792, %v1405
        %v1826 = vsel %vm1823, %v1793, %v1407
        %v1827 = vsel %vm1823, %v1794, %v1409
        %v1828 = vsel %vm1823, %v1795, %v1411
        %v1829 = vsel %vm1823, %v1796, %v1413
        %v1830 = vsel %vm1823, %v1797, %v1415
        %v1831 = vsel %vm1823, %v1798, %v1417
        %v1832 = vsel %vm1823, %v1799, %v1419
        %v1833 = vsel %vm1823, %v1800, %v1421
        %v1834 = vsel %vm1823, %v1801, %v1423
        %v1835 = vsel %vm1823, %v1802, %v1425
        %v1836 = vsel %vm1823, %v1803, %v1427
        %v1837 = vsel %vm1823, %v1804, %v1429
        %v1838 = vsel %vm1823, %v1805, %v1431
        %v1839 = vsel %vm1823, %v1806, %v1433
        %v1840 = vsel %vm1823, %v1807, %v1435
        %v1841 = vsel %vm1823, %v1808, %v1437
        %v1842 = vsel %vm1823, %v1809, %v1439
        %v1843 = vsel %vm1823, %v1810, %v1441
        %v1844 = vsel %vm1823, %v1811, %v1443
        %v1845 = vsel %vm1823, %v1812, %v1445
        %v1846 = vsel %vm1823, %v1813, %v1447
        %v1847 = vsel %vm1823, %v1814, %v1449
        %v1848 = vsel %vm1823, %v1815, %v1451
        %v1849 = vsel %vm1823, %v1816, %v1453
        %v1850 = vsel %vm1823, %v1817, %v1455
        %v1851 = vsel %vm1823, %v1818, %v1457
        %v1852 = vsel %vm1823, %v1819, %v1459
        %v1853 = vsel %vm1823, %v1820, %v1461
        %v1854 = vsel %vm1823, %v1821, %v1463
        %v1855 = vsel %vm1823, %v1822, %v1465
        %vm1856 = vcmask 261120
        %v1857 = vsel %vm1856, %v1824, %v1531
        %v1858 = vsel %vm1856, %v1825, %v1533
        %v1859 = vsel %vm1856, %v1826, %v1535
        %v1860 = vsel %vm1856, %v1827, %v1537
        %v1861 = vsel %vm1856, %v1828, %v1539
        %v1862 = vsel %vm1856, %v1829, %v1541
        %v1863 = vsel %vm1856, %v1830, %v1543
        %v1864 = vsel %vm1856, %v1831, %v1545
        %v1865 = vsel %vm1856, %v1832, %v1547
        %v1866 = vsel %vm1856, %v1833, %v1549
        %v1867 = vsel %vm1856, %v1834, %v1551
        %v1868 = vsel %vm1856, %v1835, %v1553
        %v1869 = vsel %vm1856, %v1836, %v1555
        %v1870 = vsel %vm1856, %v1837, %v1557
        %v1871 = vsel %vm1856, %v1838, %v1559
        %v1872 = vsel %vm1856, %v1839, %v1561
        %v1873 = vsel %vm1856, %v1840, %v1563
        %v1874 = vsel %vm1856, %v1841, %v1565
        %v1875 = vsel %vm1856, %v1842, %v1567
        %v1876 = vsel %vm1856, %v1843, %v1569
        %v1877 = vsel %vm1856, %v1844, %v1571
        %v1878 = vsel %vm1856, %v1845, %v1573
        %v1879 = vsel %vm1856, %v1846, %v1575
        %v1880 = vsel %vm1856, %v1847, %v1577
        %v1881 = vsel %vm1856, %v1848, %v1579
        %v1882 = vsel %vm1856, %v1849, %v1581
        %v1883 = vsel %vm1856, %v1850, %v1583
        %v1884 = vsel %vm1856, %v1851, %v1585
        %v1885 = vsel %vm1856, %v1852, %v1587
        %v1886 = vsel %vm1856, %v1853, %v1589
        %v1887 = vsel %vm1856, %v1854, %v1591
        %v1888 = vsel %vm1856, %v1855, %v1593
        %v1889 = vld [vmem:[%s1] sm:$0xff]
        %v1890 = vld [vmem:[%s1 + $0x8] sm:$0xff]
        %v1891 = vld [vmem:[%s1 + $0x10] sm:$0xff]
        %v1892 = vld [vmem:[%s1 + $0x18] sm:$0xff]
        %v1893 = vld [vmem:[%s1 + $0x20] sm:$0xf]
        %vm1894 = vcmask 293888
        %v1896 = vsel %vm1894, %v1857, 0
        %v1899 = vsel %vm1894, %v1858, 0
        %v1902 = vsel %vm1894, %v1859, 0
        %v1905 = vsel %vm1894, %v1860, 0
        %v1908 = vsel %vm1894, %v1861, 0
        %v1911 = vsel %vm1894, %v1862, 0
        %v1914 = vsel %vm1894, %v1863, 0
        %v1917 = vsel %vm1894, %v1864, 0
        %v1920 = vsel %vm1894, %v1865, 0
        %v1923 = vsel %vm1894, %v1866, 0
        %v1926 = vsel %vm1894, %v1867, 0
        %v1929 = vsel %vm1894, %v1868, 0
        %v1932 = vsel %vm1894, %v1869, 0
        %v1935 = vsel %vm1894, %v1870, 0
        %v1938 = vsel %vm1894, %v1871, 0
        %v1941 = vsel %vm1894, %v1872, 0
        %v1944 = vsel %vm1894, %v1873, 0
        %v1947 = vsel %vm1894, %v1874, 0
        %v1950 = vsel %vm1894, %v1875, 0
        %v1953 = vsel %vm1894, %v1876, 0
        %v1956 = vsel %vm1894, %v1877, 0
        %v1959 = vsel %vm1894, %v1878, 0
        %v1962 = vsel %vm1894, %v1879, 0
        %v1965 = vsel %vm1894, %v1880, 0
        %v1968 = vsel %vm1894, %v1881, 0
        %v1971 = vsel %vm1894, %v1882, 0
        %v1974 = vsel %vm1894, %v1883, 0
        %v1977 = vsel %vm1894, %v1884, 0
        %v1980 = vsel %vm1894, %v1885, 0
        %v1983 = vsel %vm1894, %v1886, 0
        %v1986 = vsel %vm1894, %v1887, 0
        %v1989 = vsel %vm1894, %v1888, 0
        %vm1991 = vcmask 1043456
        %v1993 = vsel %vm1991, %v1893, 0
        %1995 = vmatprep.subr.mxu0 0.0
        %1996 = vmatpush1.msra.mxu0 %v1889
        %1997 = vmatprep.subr.mxu0 0.0
        %1998 = vmatpush1.msra.mxu0 %v1890
        %1999 = vmatprep.subr.mxu0 0.0
        %2000 = vmatpush1.msra.mxu0 %v1891
        %2001 = vmatprep.subr.mxu0 0.0
        %2002 = vmatpush1.msra.mxu0 %v1892
        %2003 = vmatprep.subr.mxu0 0.0
        %2004 = vmatpush1.msra.mxu0 %v1993
        %2005 = vmatprep.subr.mxu0 0.0
        %2006 = vmatpush1.msra.mxu0 0.0
        %2007 = vmatprep.subr.mxu0 0.0
        %2008 = vmatpush1.msra.mxu0 0.0
        %2009 = vmatprep.subr.mxu0 0.0
        %2010 = vmatpush1.msra.mxu0 0.0
        %2011 = vmatprep.subr.mxu0 0.0
        %2012 = vmatpush1.msra.mxu0 0.0
        %2013 = vmatprep.subr.mxu0 0.0
        %2014 = vmatpush1.msra.mxu0 0.0
        %2015 = vmatprep.subr.mxu0 0.0
        %2016 = vmatpush1.msra.mxu0 0.0
        %2017 = vmatprep.subr.mxu0 0.0
        %2018 = vmatpush1.msra.mxu0 0.0
        %2019 = vmatprep.subr.mxu0 0.0
        %2020 = vmatpush1.msra.mxu0 0.0
        %2021 = vmatprep.subr.mxu0 0.0
        %2022 = vmatpush1.msra.mxu0 0.0
        %2023 = vmatprep.subr.mxu0 0.0
        %2024 = vmatpush1.msra.mxu0 0.0
        %2025 = vmatprep.subr.mxu0 0.0
        %2026 = vmatpush1.msra.mxu0 0.0
        %2027 = vmatprep.subr.mxu0 0.0
        %2028 = vmatpush1.msra.mxu0 0.0
        %2029 = vmatprep.subr.mxu0 0.0
        %2030 = vmatpush1.msra.mxu0 0.0
        %2031 = vmatprep.subr.mxu0 0.0
        %2032 = vmatpush1.msra.mxu0 0.0
        %2033 = vmatprep.subr.mxu0 0.0
        %2034 = vmatpush1.msra.mxu0 0.0
        %2035 = vmatprep.subr.mxu0 0.0
        %2036 = vmatpush1.msra.mxu0 0.0
        %2037 = vmatprep.subr.mxu0 0.0
        %2038 = vmatpush1.msra.mxu0 0.0
        %2039 = vmatprep.subr.mxu0 0.0
        %2040 = vmatpush1.msra.mxu0 0.0
        %2041 = vmatprep.subr.mxu0 0.0
        %2042 = vmatpush1.msra.mxu0 0.0
        %2043 = vmatprep.subr.mxu0 0.0
        %2044 = vmatpush1.msra.mxu0 0.0
        %2045 = vmatprep.subr.mxu0 0.0
        %2046 = vmatpush1.msra.mxu0 0.0
        %2047 = vmatprep.subr.mxu0 0.0
        %2048 = vmatpush1.msra.mxu0 0.0
        %2049 = vmatprep.subr.mxu0 0.0
        %2050 = vmatpush1.msra.mxu0 0.0
        %2051 = vmatprep.subr.mxu0 0.0
        %2052 = vmatpush1.msra.mxu0 0.0
        %2053 = vmatprep.subr.mxu0 0.0
        %2054 = vmatpush1.msra.mxu0 0.0
        %2055 = vmatprep.subr.mxu0 0.0
        %2056 = vmatpush1.msra.mxu0 0.0
        %2057 = vmatprep.subr.mxu0 0.0
        %2058 = vmatpush1.msra.mxu0 0.0
        %2059 = vmatprep.mubr.f32.mxu0 0.0
        %2060 = vmatmul.mubr.f32.gmra.mrb[0].mxu0 %v1896
        %v2061 = vpop.f32.mrb[0].mxu0
        %v2062 = vadd.f32 0.0, %v2061
        %v2063 = vpop.f32.mrb[0].mxu0
        %2064 = vmatprep.mubr.f32.mxu0 0.0
        %2065 = vmatmul.mubr.f32.gmra.mrb[0].mxu0 %v1899
        %v2066 = vpop.f32.mrb[0].mxu0
        %v2067 = vadd.f32 0.0, %v2066
        %v2068 = vpop.f32.mrb[0].mxu0
        %2069 = vmatprep.mubr.f32.mxu0 0.0
        %2070 = vmatmul.mubr.f32.gmra.mrb[0].mxu0 %v1902
        %v2071 = vpop.f32.mrb[0].mxu0
        %v2072 = vadd.f32 0.0, %v2071
        %v2073 = vpop.f32.mrb[0].mxu0
        %2074 = vmatprep.mubr.f32.mxu0 0.0
        %2075 = vmatmul.mubr.f32.gmra.mrb[0].mxu0 %v1905
        %v2076 = vpop.f32.mrb[0].mxu0
        %v2077 = vadd.f32 0.0, %v2076
        %v2078 = vpop.f32.mrb[0].mxu0
        %2079 = vmatprep.mubr.f32.mxu0 0.0
        %2080 = vmatmul.mubr.f32.gmra.mrb[0].mxu0 %v1908
        %v2081 = vpop.f32.mrb[0].mxu0
        %v2082 = vadd.f32 0.0, %v2081
        %v2083 = vpop.f32.mrb[0].mxu0
        %2084 = vmatprep.mubr.f32.mxu0 0.0
        %2085 = vmatmul.mubr.f32.gmra.mrb[0].mxu0 %v1911
        %v2086 = vpop.f32.mrb[0].mxu0
        %v2087 = vadd.f32 0.0, %v2086
        %v2088 = vpop.f32.mrb[0].mxu0
        %2089 = vmatprep.mubr.f32.mxu0 0.0
        %2090 = vmatmul.mubr.f32.gmra.mrb[0].mxu0 %v1914
        %v2091 = vpop.f32.mrb[0].mxu0
        %v2092 = vadd.f32 0.0, %v2091
        %v2093 = vpop.f32.mrb[0].mxu0
        %2094 = vmatprep.mubr.f32.mxu0 0.0
        %2095 = vmatmul.mubr.f32.gmra.mrb[0].mxu0 %v1917
        %v2096 = vpop.f32.mrb[0].mxu0
        %v2097 = vadd.f32 0.0, %v2096
        %v2098 = vpop.f32.mrb[0].mxu0
        %2099 = vmatprep.mubr.f32.mxu0 0.0
        %2100 = vmatmul.mubr.f32.gmra.mrb[0].mxu0 %v1920
        %v2101 = vpop.f32.mrb[0].mxu0
        %v2102 = vadd.f32 0.0, %v2101
        %v2103 = vpop.f32.mrb[0].mxu0
        %2104 = vmatprep.mubr.f32.mxu0 0.0
        %2105 = vmatmul.mubr.f32.gmra.mrb[0].mxu0 %v1923
        %v2106 = vpop.f32.mrb[0].mxu0
        %v2107 = vadd.f32 0.0, %v2106
        %v2108 = vpop.f32.mrb[0].mxu0
        %2109 = vmatprep.mubr.f32.mxu0 0.0
        %2110 = vmatmul.mubr.f32.gmra.mrb[0].mxu0 %v1926
        %v2111 = vpop.f32.mrb[0].mxu0
        %v2112 = vadd.f32 0.0, %v2111
        %v2113 = vpop.f32.mrb[0].mxu0
        %2114 = vmatprep.mubr.f32.mxu0 0.0
        %2115 = vmatmul.mubr.f32.gmra.mrb[0].mxu0 %v1929
        %v2116 = vpop.f32.mrb[0].mxu0
        %v2117 = vadd.f32 0.0, %v2116
        %v2118 = vpop.f32.mrb[0].mxu0
        %2119 = vmatprep.mubr.f32.mxu0 0.0
        %2120 = vmatmul.mubr.f32.gmra.mrb[0].mxu0 %v1932
        %v2121 = vpop.f32.mrb[0].mxu0
        %v2122 = vadd.f32 0.0, %v2121
        %v2123 = vpop.f32.mrb[0].mxu0
        %2124 = vmatprep.mubr.f32.mxu0 0.0
        %2125 = vmatmul.mubr.f32.gmra.mrb[0].mxu0 %v1935
        %v2126 = vpop.f32.mrb[0].mxu0
        %v2127 = vadd.f32 0.0, %v2126
        %v2128 = vpop.f32.mrb[0].mxu0
        %2129 = vmatprep.mubr.f32.mxu0 0.0
        %2130 = vmatmul.mubr.f32.gmra.mrb[0].mxu0 %v1938
        %v2131 = vpop.f32.mrb[0].mxu0
        %v2132 = vadd.f32 0.0, %v2131
        %v2133 = vpop.f32.mrb[0].mxu0
        %2134 = vmatprep.mubr.f32.mxu0 0.0
        %2135 = vmatmul.mubr.f32.gmra.mrb[0].mxu0 %v1941
        %v2136 = vpop.f32.mrb[0].mxu0
        %v2137 = vadd.f32 0.0, %v2136
        %v2138 = vpop.f32.mrb[0].mxu0
        %2139 = vmatprep.mubr.f32.mxu0 0.0
        %2140 = vmatmul.mubr.f32.gmra.mrb[0].mxu0 %v1944
        %v2141 = vpop.f32.mrb[0].mxu0
        %v2142 = vadd.f32 0.0, %v2141
        %v2143 = vpop.f32.mrb[0].mxu0
        %2144 = vmatprep.mubr.f32.mxu0 0.0
        %2145 = vmatmul.mubr.f32.gmra.mrb[0].mxu0 %v1947
        %v2146 = vpop.f32.mrb[0].mxu0
        %v2147 = vadd.f32 0.0, %v2146
        %v2148 = vpop.f32.mrb[0].mxu0
        %2149 = vmatprep.mubr.f32.mxu0 0.0
        %2150 = vmatmul.mubr.f32.gmra.mrb[0].mxu0 %v1950
        %v2151 = vpop.f32.mrb[0].mxu0
        %v2152 = vadd.f32 0.0, %v2151
        %v2153 = vpop.f32.mrb[0].mxu0
        %2154 = vmatprep.mubr.f32.mxu0 0.0
        %2155 = vmatmul.mubr.f32.gmra.mrb[0].mxu0 %v1953
        %v2156 = vpop.f32.mrb[0].mxu0
        %v2157 = vadd.f32 0.0, %v2156
        %v2158 = vpop.f32.mrb[0].mxu0
        %2159 = vmatprep.mubr.f32.mxu0 0.0
        %2160 = vmatmul.mubr.f32.gmra.mrb[0].mxu0 %v1956
        %v2161 = vpop.f32.mrb[0].mxu0
        %v2162 = vadd.f32 0.0, %v2161
        %v2163 = vpop.f32.mrb[0].mxu0
        %2164 = vmatprep.mubr.f32.mxu0 0.0
        %2165 = vmatmul.mubr.f32.gmra.mrb[0].mxu0 %v1959
        %v2166 = vpop.f32.mrb[0].mxu0
        %v2167 = vadd.f32 0.0, %v2166
        %v2168 = vpop.f32.mrb[0].mxu0
        %2169 = vmatprep.mubr.f32.mxu0 0.0
        %2170 = vmatmul.mubr.f32.gmra.mrb[0].mxu0 %v1962
        %v2171 = vpop.f32.mrb[0].mxu0
        %v2172 = vadd.f32 0.0, %v2171
        %v2173 = vpop.f32.mrb[0].mxu0
        %2174 = vmatprep.mubr.f32.mxu0 0.0
        %2175 = vmatmul.mubr.f32.gmra.mrb[0].mxu0 %v1965
        %v2176 = vpop.f32.mrb[0].mxu0
        %v2177 = vadd.f32 0.0, %v2176
        %v2178 = vpop.f32.mrb[0].mxu0
        %2179 = vmatprep.mubr.f32.mxu0 0.0
        %2180 = vmatmul.mubr.f32.gmra.mrb[0].mxu0 %v1968
        %v2181 = vpop.f32.mrb[0].mxu0
        %v2182 = vadd.f32 0.0, %v2181
        %v2183 = vpop.f32.mrb[0].mxu0
        %2184 = vmatprep.mubr.f32.mxu0 0.0
        %2185 = vmatmul.mubr.f32.gmra.mrb[0].mxu0 %v1971
        %v2186 = vpop.f32.mrb[0].mxu0
        %v2187 = vadd.f32 0.0, %v2186
        %v2188 = vpop.f32.mrb[0].mxu0
        %2189 = vmatprep.mubr.f32.mxu0 0.0
        %2190 = vmatmul.mubr.f32.gmra.mrb[0].mxu0 %v1974
        %v2191 = vpop.f32.mrb[0].mxu0
        %v2192 = vadd.f32 0.0, %v2191
        %v2193 = vpop.f32.mrb[0].mxu0
        %2194 = vmatprep.mubr.f32.mxu0 0.0
        %2195 = vmatmul.mubr.f32.gmra.mrb[0].mxu0 %v1977
        %v2196 = vpop.f32.mrb[0].mxu0
        %v2197 = vadd.f32 0.0, %v2196
        %v2198 = vpop.f32.mrb[0].mxu0
        %2199 = vmatprep.mubr.f32.mxu0 0.0
        %2200 = vmatmul.mubr.f32.gmra.mrb[0].mxu0 %v1980
        %v2201 = vpop.f32.mrb[0].mxu0
        %v2202 = vadd.f32 0.0, %v2201
        %v2203 = vpop.f32.mrb[0].mxu0
        %2204 = vmatprep.mubr.f32.mxu0 0.0
        %2205 = vmatmul.mubr.f32.gmra.mrb[0].mxu0 %v1983
        %v2206 = vpop.f32.mrb[0].mxu0
        %v2207 = vadd.f32 0.0, %v2206
        %v2208 = vpop.f32.mrb[0].mxu0
        %2209 = vmatprep.mubr.f32.mxu0 0.0
        %2210 = vmatmul.mubr.f32.gmra.mrb[0].mxu0 %v1986
        %v2211 = vpop.f32.mrb[0].mxu0
        %v2212 = vadd.f32 0.0, %v2211
        %v2213 = vpop.f32.mrb[0].mxu0
        %2214 = vmatprep.mubr.f32.mxu0 0.0
        %2215 = vmatmul.mubr.f32.gmra.mrb[0].mxu0 %v1989
        %v2216 = vpop.f32.mrb[0].mxu0
        %v2217 = vadd.f32 0.0, %v2216
        %v2218 = vpop.f32.mrb[0].mxu0
        %2219 = vdwg.mxu0
        %2220 = vxpose.xlu0.b32.start [1/16] %v2062, 128
        %2221 = vxpose.xlu0.b32.cont [2/16] %v2067, 128
        %2222 = vxpose.xlu0.b32.cont [3/16] %v2072, 128
        %2223 = vxpose.xlu0.b32.cont [4/16] %v2077, 128
        %2224 = vxpose.xlu0.b32.cont [5/16] %v2082, 128
        %2225 = vxpose.xlu0.b32.cont [6/16] %v2087, 128
        %2226 = vxpose.xlu0.b32.cont [7/16] %v2092, 128
        %2227 = vxpose.xlu0.b32.cont [8/16] %v2097, 128
        %2228 = vxpose.xlu0.b32.cont [9/16] %v2102, 128
        %2229 = vxpose.xlu0.b32.cont [10/16] %v2107, 128
        %2230 = vxpose.xlu0.b32.cont [11/16] %v2112, 128
        %2231 = vxpose.xlu0.b32.cont [12/16] %v2117, 128
        %2232 = vxpose.xlu0.b32.cont [13/16] %v2122, 128
        %2233 = vxpose.xlu0.b32.cont [14/16] %v2127, 128
        %2234 = vxpose.xlu0.b32.cont [15/16] %v2132, 128
        %2235 = vxpose.xlu0.b32.end [16/16] %v2137, 128
        %v2236 = vpop.trf.xlu0
        %v2237 = vpop.trf.xlu0
        %v2238 = vpop.trf.xlu0
        %v2239 = vpop.trf.xlu0
        %v2240 = vpop.trf.xlu0
        %v2241 = vpop.trf.xlu0
        %v2242 = vpop.trf.xlu0
        %v2243 = vpop.trf.xlu0
        %v2244 = vpop.trf.xlu0
        %v2245 = vpop.trf.xlu0
        %v2246 = vpop.trf.xlu0
        %v2247 = vpop.trf.xlu0
        %v2248 = vpop.trf.xlu0
        %v2249 = vpop.trf.xlu0
        %v2250 = vpop.trf.xlu0
        %v2251 = vpop.trf.xlu0
        %2252 = vxpose.xlu0.b32.start [1/16] %v2142, 128
        %2253 = vxpose.xlu0.b32.cont [2/16] %v2147, 128
        %2254 = vxpose.xlu0.b32.cont [3/16] %v2152, 128
        %2255 = vxpose.xlu0.b32.cont [4/16] %v2157, 128
        %2256 = vxpose.xlu0.b32.cont [5/16] %v2162, 128
        %2257 = vxpose.xlu0.b32.cont [6/16] %v2167, 128
        %2258 = vxpose.xlu0.b32.cont [7/16] %v2172, 128
        %2259 = vxpose.xlu0.b32.cont [8/16] %v2177, 128
        %2260 = vxpose.xlu0.b32.cont [9/16] %v2182, 128
        %2261 = vxpose.xlu0.b32.cont [10/16] %v2187, 128
        %2262 = vxpose.xlu0.b32.cont [11/16] %v2192, 128
        %2263 = vxpose.xlu0.b32.cont [12/16] %v2197, 128
        %2264 = vxpose.xlu0.b32.cont [13/16] %v2202, 128
        %2265 = vxpose.xlu0.b32.cont [14/16] %v2207, 128
        %2266 = vxpose.xlu0.b32.cont [15/16] %v2212, 128
        %2267 = vxpose.xlu0.b32.end [16/16] %v2217, 128
        %v2268 = vpop.trf.xlu0
        %v2269 = vpop.trf.xlu0
        %v2270 = vpop.trf.xlu0
        %v2271 = vpop.trf.xlu0
        %v2272 = vpop.trf.xlu0
        %v2273 = vpop.trf.xlu0
        %v2274 = vpop.trf.xlu0
        %v2275 = vpop.trf.xlu0
        %v2276 = vpop.trf.xlu0
        %v2277 = vpop.trf.xlu0
        %v2278 = vpop.trf.xlu0
        %v2279 = vpop.trf.xlu0
        %v2280 = vpop.trf.xlu0
        %v2281 = vpop.trf.xlu0
        %v2282 = vpop.trf.xlu0
        %v2283 = vpop.trf.xlu0
        %v2284 = vadd.f32 %v2236, %v2268
        %2285 = vadd.xlane.f32.xlu0 %v2284
        %v2286 = vpop.xlane.xlu0 %2285
        %v2287 = vmul.f32 %v2286, 0.00390625
        %v2288 = vmul.f32 %v2236, %v2236
        %v2289 = vmul.f32 %v2268, %v2268
        %v2290 = vadd.f32 %v2288, %v2289
        %2291 = vadd.xlane.f32.xlu0 %v2290
        %v2292 = vpop.xlane.xlu0 %2291
        %v2293 = vmul.f32 %v2292, 0.00390625
        %v2294 = vmul.f32 %v2287, %v2287
        %v2295 = vsub.f32 %v2293, %v2294
        %v2296 = vmax.f32 %v2295, 0.0
        %v2297 = vsub.f32 %v2236, %v2287
        %v2298 = vsub.f32 %v2268, %v2287
        %v2299 = vadd.f32 %v2296, 1e-05
        %v2300 = vrsqrt.pop %v2299
        %v2301 = vmul.f32 %v2297, %v2300
        %v2302 = vmul.f32 %v2298, %v2300
        %v2303 = vmul.f32 %v2301, 0.5
        %v2304 = vmul.f32 %v2302, 0.5
        %v2305 = vmul.f32 %v2301, 0.70710677
        %v2306 = vmul.f32 %v2302, 0.70710677
        %v2307 = verf.f32.pop %v2305
        %v2308 = verf.f32.pop %v2306
        %v2309 = vadd.f32 %v2307, 1.0
        %v2310 = vadd.f32 %v2308, 1.0
        %v2311 = vmul.f32 %v2303, %v2309
        %v2312 = vmul.f32 %v2304, %v2310
        %2313 = vxpose.xlu0.b32.start [1/16] %v2311, 128
        %2314 = vxpose.xlu0.b32.cont [2/16] 0.0, 128
        %2315 = vxpose.xlu0.b32.cont [3/16] 0.0, 128
        %2316 = vxpose.xlu0.b32.cont [4/16] 0.0, 128
        %2317 = vxpose.xlu0.b32.cont [5/16] 0.0, 128
        %2318 = vxpose.xlu0.b32.cont [6/16] 0.0, 128
        %2319 = vxpose.xlu0.b32.cont [7/16] 0.0, 128
        %2320 = vxpose.xlu0.b32.cont [8/16] 0.0, 128
        %2321 = vxpose.xlu0.b32.cont [9/16] 0.0, 128
        %2322 = vxpose.xlu0.b32.cont [10/16] 0.0, 128
        %2323 = vxpose.xlu0.b32.cont [11/16] 0.0, 128
        %2324 = vxpose.xlu0.b32.cont [12/16] 0.0, 128
        %2325 = vxpose.xlu0.b32.cont [13/16] 0.0, 128
        %2326 = vxpose.xlu0.b32.cont [14/16] 0.0, 128
        %2327 = vxpose.xlu0.b32.cont [15/16] 0.0, 128
        %2328 = vxpose.xlu0.b32.end [16/16] 0.0, 128
        %v2329 = vpop.trf.xlu0
        %v2330 = vpop.trf.xlu0
        %v2331 = vpop.trf.xlu0
        %v2332 = vpop.trf.xlu0
        %v2333 = vpop.trf.xlu0
        %v2334 = vpop.trf.xlu0
        %v2335 = vpop.trf.xlu0
        %v2336 = vpop.trf.xlu0
        %v2337 = vpop.trf.xlu0
        %v2338 = vpop.trf.xlu0
        %v2339 = vpop.trf.xlu0
        %v2340 = vpop.trf.xlu0
        %v2341 = vpop.trf.xlu0
        %v2342 = vpop.trf.xlu0
        %v2343 = vpop.trf.xlu0
        %v2344 = vpop.trf.xlu0
        %2345 = vxpose.xlu0.b32.start [1/16] %v2312, 128
        %2346 = vxpose.xlu0.b32.cont [2/16] 0.0, 128
        %2347 = vxpose.xlu0.b32.cont [3/16] 0.0, 128
        %2348 = vxpose.xlu0.b32.cont [4/16] 0.0, 128
        %2349 = vxpose.xlu0.b32.cont [5/16] 0.0, 128
        %2350 = vxpose.xlu0.b32.cont [6/16] 0.0, 128
        %2351 = vxpose.xlu0.b32.cont [7/16] 0.0, 128
        %2352 = vxpose.xlu0.b32.cont [8/16] 0.0, 128
        %2353 = vxpose.xlu0.b32.cont [9/16] 0.0, 128
        %2354 = vxpose.xlu0.b32.cont [10/16] 0.0, 128
        %2355 = vxpose.xlu0.b32.cont [11/16] 0.0, 128
        %2356 = vxpose.xlu0.b32.cont [12/16] 0.0, 128
        %2357 = vxpose.xlu0.b32.cont [13/16] 0.0, 128
        %2358 = vxpose.xlu0.b32.cont [14/16] 0.0, 128
        %2359 = vxpose.xlu0.b32.cont [15/16] 0.0, 128
        %2360 = vxpose.xlu0.b32.end [16/16] 0.0, 128
        %v2361 = vpop.trf.xlu0
        %v2362 = vpop.trf.xlu0
        %v2363 = vpop.trf.xlu0
        %v2364 = vpop.trf.xlu0
        %v2365 = vpop.trf.xlu0
        %v2366 = vpop.trf.xlu0
        %v2367 = vpop.trf.xlu0
        %v2368 = vpop.trf.xlu0
        %v2369 = vpop.trf.xlu0
        %v2370 = vpop.trf.xlu0
        %v2371 = vpop.trf.xlu0
        %v2372 = vpop.trf.xlu0
        %v2373 = vpop.trf.xlu0
        %v2374 = vpop.trf.xlu0
        %v2375 = vpop.trf.xlu0
        %v2376 = vpop.trf.xlu0
        %s2377 = scalar_lea.vmem [#allocation3], 24
        %2378 = vst.msk [vmem:[%s2377 + $0x1] sm:$0xff] %vm1658, %v2329
        %2379 = vst.msk [vmem:[%s2377 + $0x9] sm:$0xff] %vm1658, %v2330
        %2380 = vst.msk [vmem:[%s2377 + $0x19] sm:$0xff] %vm1658, %v2331
        %2381 = vst.msk [vmem:[%s2377 + $0x21] sm:$0xff] %vm1658, %v2332
        %2382 = vst.msk [vmem:[%s2377 + $0x31] sm:$0xff] %vm1658, %v2333
        %2383 = vst.msk [vmem:[%s2377 + $0x39] sm:$0xff] %vm1658, %v2334
        %2384 = vst.msk [vmem:[%s2377 + $0x49] sm:$0xff] %vm1658, %v2335
        %2385 = vst.msk [vmem:[%s2377 + $0x51] sm:$0xff] %vm1658, %v2336
        %2386 = vst.msk [vmem:[%s2377 + $0x61] sm:$0xff] %vm1658, %v2337
        %2387 = vst.msk [vmem:[%s2377 + $0x69] sm:$0xff] %vm1658, %v2338
        %2388 = vst.msk [vmem:[%s2377 + $0x79] sm:$0xff] %vm1658, %v2339
        %2389 = vst.msk [vmem:[%s2377 + $0x81] sm:$0xff] %vm1658, %v2340
        %2390 = vst.msk [vmem:[%s2377 + $0x91] sm:$0xff] %vm1658, %v2341
        %2391 = vst.msk [vmem:[%s2377 + $0x99] sm:$0xff] %vm1658, %v2342
        %2392 = vst.msk [vmem:[%s2377 + $0xa9] sm:$0xff] %vm1658, %v2343
        %2393 = vst.msk [vmem:[%s2377 + $0xb1] sm:$0xff] %vm1658, %v2344
        %2394 = vst.msk [vmem:[%s2377 + $0xc1] sm:$0xff] %vm1658, %v2361
        %2395 = vst.msk [vmem:[%s2377 + $0xc9] sm:$0xff] %vm1658, %v2362
        %2396 = vst.msk [vmem:[%s2377 + $0xd9] sm:$0xff] %vm1658, %v2363
        %2397 = vst.msk [vmem:[%s2377 + $0xe1] sm:$0xff] %vm1658, %v2364
        %2398 = vst.msk [vmem:[%s2377 + $0xf1] sm:$0xff] %vm1658, %v2365
        %2399 = vst.msk [vmem:[%s2377 + $0xf9] sm:$0xff] %vm1658, %v2366
        %2400 = vst.msk [vmem:[%s2377 + $0x109] sm:$0xff] %vm1658, %v2367
        %2401 = vst.msk [vmem:[%s2377 + $0x111] sm:$0xff] %vm1658, %v2368
        %2402 = vst.msk [vmem:[%s2377 + $0x121] sm:$0xff] %vm1658, %v2369
        %2403 = vst.msk [vmem:[%s2377 + $0x129] sm:$0xff] %vm1658, %v2370
        %2404 = vst.msk [vmem:[%s2377 + $0x139] sm:$0xff] %vm1658, %v2371
        %2405 = vst.msk [vmem:[%s2377 + $0x141] sm:$0xff] %vm1658, %v2372
        %2406 = vst.msk [vmem:[%s2377 + $0x151] sm:$0xff] %vm1658, %v2373
        %2407 = vst.msk [vmem:[%s2377 + $0x159] sm:$0xff] %vm1658, %v2374
        %2408 = vst.msk [vmem:[%s2377 + $0x169] sm:$0xff] %vm1658, %v2375
        %2409 = vst.msk [vmem:[%s2377 + $0x171] sm:$0xff] %vm1658, %v2376
        %2410 = vst.msk [vmem:[#allocation3 + $0x1] sm:$0xff] %vm1658, %v2329
        %2411 = vst.msk [vmem:[#allocation3 + $0x9] sm:$0xff] %vm1658, %v2330
        %s2412 = scalar_lea.vmem [#allocation3], 408
        %2413 = vst.msk [vmem:[%s2412 + $0x1] sm:$0xff] %vm1658, %v2375
        %2414 = vst.msk [vmem:[%s2412 + $0x9] sm:$0xff] %vm1658, %v2376
        %v2415 = vld [vmem:[#allocation3 + $0x1] sm:$0x1]
        %v2416 = vld [vmem:[#allocation3 + $0x19] sm:$0x1]
        %v2417 = vld [vmem:[#allocation3 + $0x31] sm:$0x1]
        %v2418 = vld [vmem:[#allocation3 + $0x49] sm:$0x1]
        %v2419 = vld [vmem:[#allocation3 + $0x61] sm:$0x1]
        %v2420 = vld [vmem:[#allocation3 + $0x79] sm:$0x1]
        %v2421 = vld [vmem:[#allocation3 + $0x91] sm:$0x1]
        %v2422 = vld [vmem:[#allocation3 + $0xa9] sm:$0x1]
        %v2423 = vld [vmem:[#allocation3 + $0xc1] sm:$0x1]
        %v2424 = vld [vmem:[#allocation3 + $0xd9] sm:$0x1]
        %v2425 = vld [vmem:[#allocation3 + $0xf1] sm:$0x1]
        %v2426 = vld [vmem:[#allocation3 + $0x109] sm:$0x1]
        %v2427 = vld [vmem:[#allocation3 + $0x121] sm:$0x1]
        %v2428 = vld [vmem:[#allocation3 + $0x139] sm:$0x1]
        %v2429 = vld [vmem:[#allocation3 + $0x151] sm:$0x1]
        %v2430 = vld [vmem:[#allocation3 + $0x169] sm:$0x1]
        %v2431 = vld [vmem:[#allocation3 + $0x181] sm:$0x1]
        %v2432 = vld [vmem:[#allocation3 + $0x199] sm:$0x1]
        %vm2433 = vcmask 57344
        %2434 = vst.msk [vmem:[#allocation3] sm:$0x1] %vm2433, %v2415
        %2435 = vst.msk [vmem:[#allocation3 + $0x18] sm:$0x1] %vm2433, %v2416
        %2436 = vst.msk [vmem:[#allocation3 + $0x30] sm:$0x1] %vm2433, %v2417
        %2437 = vst.msk [vmem:[#allocation3 + $0x48] sm:$0x1] %vm2433, %v2418
        %2438 = vst.msk [vmem:[#allocation3 + $0x60] sm:$0x1] %vm2433, %v2419
        %2439 = vst.msk [vmem:[#allocation3 + $0x78] sm:$0x1] %vm2433, %v2420
        %2440 = vst.msk [vmem:[#allocation3 + $0x90] sm:$0x1] %vm2433, %v2421
        %2441 = vst.msk [vmem:[#allocation3 + $0xa8] sm:$0x1] %vm2433, %v2422
        %2442 = vst.msk [vmem:[#allocation3 + $0xc0] sm:$0x1] %vm2433, %v2423
        %2443 = vst.msk [vmem:[#allocation3 + $0xd8] sm:$0x1] %vm2433, %v2424
        %2444 = vst.msk [vmem:[#allocation3 + $0xf0] sm:$0x1] %vm2433, %v2425
        %2445 = vst.msk [vmem:[#allocation3 + $0x108] sm:$0x1] %vm2433, %v2426
        %2446 = vst.msk [vmem:[#allocation3 + $0x120] sm:$0x1] %vm2433, %v2427
        %2447 = vst.msk [vmem:[#allocation3 + $0x138] sm:$0x1] %vm2433, %v2428
        %2448 = vst.msk [vmem:[#allocation3 + $0x150] sm:$0x1] %vm2433, %v2429
        %2449 = vst.msk [vmem:[#allocation3 + $0x168] sm:$0x1] %vm2433, %v2430
        %2450 = vst.msk [vmem:[#allocation3 + $0x180] sm:$0x1] %vm2433, %v2431
        %2451 = vst.msk [vmem:[#allocation3 + $0x198] sm:$0x1] %vm2433, %v2432
        %v2452 = vld [vmem:[#allocation3 + $0x10] sm:$0x1]
        %v2453 = vld [vmem:[#allocation3 + $0x28] sm:$0x1]
        %v2454 = vld [vmem:[#allocation3 + $0x40] sm:$0x1]
        %v2455 = vld [vmem:[#allocation3 + $0x58] sm:$0x1]
        %v2456 = vld [vmem:[#allocation3 + $0x70] sm:$0x1]
        %v2457 = vld [vmem:[#allocation3 + $0x88] sm:$0x1]
        %v2458 = vld [vmem:[#allocation3 + $0xa0] sm:$0x1]
        %v2459 = vld [vmem:[#allocation3 + $0xb8] sm:$0x1]
        %v2460 = vld [vmem:[#allocation3 + $0xd0] sm:$0x1]
        %v2461 = vld [vmem:[#allocation3 + $0xe8] sm:$0x1]
        %v2462 = vld [vmem:[#allocation3 + $0x100] sm:$0x1]
        %v2463 = vld [vmem:[#allocation3 + $0x118] sm:$0x1]
        %v2464 = vld [vmem:[#allocation3 + $0x130] sm:$0x1]
        %v2465 = vld [vmem:[#allocation3 + $0x148] sm:$0x1]
        %v2466 = vld [vmem:[#allocation3 + $0x160] sm:$0x1]
        %v2467 = vld [vmem:[#allocation3 + $0x178] sm:$0x1]
        %v2468 = vld [vmem:[#allocation3 + $0x190] sm:$0x1]
        %v2469 = vld [vmem:[#allocation3 + $0x1a8] sm:$0x1]
        %2470 = vst.msk [vmem:[#allocation3 + $0x11] sm:$0x1] %vm2433, %v2452
        %2471 = vst.msk [vmem:[#allocation3 + $0x29] sm:$0x1] %vm2433, %v2453
        %2472 = vst.msk [vmem:[#allocation3 + $0x41] sm:$0x1] %vm2433, %v2454
        %2473 = vst.msk [vmem:[#allocation3 + $0x59] sm:$0x1] %vm2433, %v2455
        %2474 = vst.msk [vmem:[#allocation3 + $0x71] sm:$0x1] %vm2433, %v2456
        %2475 = vst.msk [vmem:[#allocation3 + $0x89] sm:$0x1] %vm2433, %v2457
        %2476 = vst.msk [vmem:[#allocation3 + $0xa1] sm:$0x1] %vm2433, %v2458
        %2477 = vst.msk [vmem:[#allocation3 + $0xb9] sm:$0x1] %vm2433, %v2459
        %2478 = vst.msk [vmem:[#allocation3 + $0xd1] sm:$0x1] %vm2433, %v2460
        %2479 = vst.msk [vmem:[#allocation3 + $0xe9] sm:$0x1] %vm2433, %v2461
        %2480 = vst.msk [vmem:[#allocation3 + $0x101] sm:$0x1] %vm2433, %v2462
        %2481 = vst.msk [vmem:[#allocation3 + $0x119] sm:$0x1] %vm2433, %v2463
        %2482 = vst.msk [vmem:[#allocation3 + $0x131] sm:$0x1] %vm2433, %v2464
        %2483 = vst.msk [vmem:[#allocation3 + $0x149] sm:$0x1] %vm2433, %v2465
        %2484 = vst.msk [vmem:[#allocation3 + $0x161] sm:$0x1] %vm2433, %v2466
        %2485 = vst.msk [vmem:[#allocation3 + $0x179] sm:$0x1] %vm2433, %v2467
        %2486 = vst.msk [vmem:[#allocation3 + $0x191] sm:$0x1] %vm2433, %v2468
        %2487 = vst.msk [vmem:[#allocation3 + $0x1a9] sm:$0x1] %vm2433, %v2469
        %v2488 = vld [vmem:[#allocation3] sm:$0xff]
        %v2489 = vld [vmem:[#allocation3 + $0x8] sm:$0xff]
        %v2490 = vld [vmem:[#allocation3 + $0x18] sm:$0xff]
        %v2491 = vld [vmem:[#allocation3 + $0x20] sm:$0xff]
        %v2492 = vld [vmem:[#allocation3 + $0x30] sm:$0xff]
        %v2493 = vld [vmem:[#allocation3 + $0x38] sm:$0xff]
        %v2494 = vld [vmem:[#allocation3 + $0x48] sm:$0xff]
        %v2495 = vld [vmem:[#allocation3 + $0x50] sm:$0xff]
        %v2496 = vld [vmem:[#allocation3 + $0x60] sm:$0xff]
        %v2497 = vld [vmem:[#allocation3 + $0x68] sm:$0xff]
        %v2498 = vld [vmem:[#allocation3 + $0x78] sm:$0xff]
        %v2499 = vld [vmem:[#allocation3 + $0x80] sm:$0xff]
        %v2500 = vld [vmem:[#allocation3 + $0x90] sm:$0xff]
        %v2501 = vld [vmem:[#allocation3 + $0x98] sm:$0xff]
        %v2502 = vld [vmem:[#allocation3 + $0xa8] sm:$0xff]
        %v2503 = vld [vmem:[#allocation3 + $0xb0] sm:$0xff]
        %v2504 = vld [vmem:[#allocation3 + $0xc0] sm:$0xff]
        %v2505 = vld [vmem:[#allocation3 + $0xc8] sm:$0xff]
        %v2506 = vld [vmem:[#allocation3 + $0xd8] sm:$0xff]
        %v2507 = vld [vmem:[#allocation3 + $0xe0] sm:$0xff]
        %v2508 = vld [vmem:[#allocation3 + $0xf0] sm:$0xff]
        %v2509 = vld [vmem:[#allocation3 + $0xf8] sm:$0xff]
        %v2510 = vld [vmem:[#allocation3 + $0x108] sm:$0xff]
        %v2511 = vld [vmem:[#allocation3 + $0x110] sm:$0xff]
        %v2512 = vld [vmem:[#allocation3 + $0x120] sm:$0xff]
        %v2513 = vld [vmem:[#allocation3 + $0x128] sm:$0xff]
        %v2514 = vld [vmem:[#allocation3 + $0x138] sm:$0xff]
        %v2515 = vld [vmem:[#allocation3 + $0x140] sm:$0xff]
        %v2516 = vld [vmem:[#allocation3 + $0x150] sm:$0xff]
        %v2517 = vld [vmem:[#allocation3 + $0x158] sm:$0xff]
        %v2518 = vld [vmem:[#allocation3 + $0x168] sm:$0xff]
        %v2519 = vld [vmem:[#allocation3 + $0x170] sm:$0xff]
        %v2520 = vld [vmem:[#allocation3 + $0x1] sm:$0xff]
        %v2521 = vld [vmem:[#allocation3 + $0x9] sm:$0xff]
        %v2522 = vld [vmem:[#allocation3 + $0x19] sm:$0xff]
        %v2523 = vld [vmem:[#allocation3 + $0x21] sm:$0xff]
        %v2524 = vld [vmem:[#allocation3 + $0x31] sm:$0xff]
        %v2525 = vld [vmem:[#allocation3 + $0x39] sm:$0xff]
        %v2526 = vld [vmem:[#allocation3 + $0x49] sm:$0xff]
        %v2527 = vld [vmem:[#allocation3 + $0x51] sm:$0xff]
        %v2528 = vld [vmem:[#allocation3 + $0x61] sm:$0xff]
        %v2529 = vld [vmem:[#allocation3 + $0x69] sm:$0xff]
        %v2530 = vld [vmem:[#allocation3 + $0x79] sm:$0xff]
        %v2531 = vld [vmem:[#allocation3 + $0x81] sm:$0xff]
        %v2532 = vld [vmem:[#allocation3 + $0x91] sm:$0xff]
        %v2533 = vld [vmem:[#allocation3 + $0x99] sm:$0xff]
        %v2534 = vld [vmem:[#allocation3 + $0xa9] sm:$0xff]
        %v2535 = vld [vmem:[#allocation3 + $0xb1] sm:$0xff]
        %v2536 = vld [vmem:[#allocation3 + $0xc1] sm:$0xff]
        %v2537 = vld [vmem:[#allocation3 + $0xc9] sm:$0xff]
        %v2538 = vld [vmem:[#allocation3 + $0xd9] sm:$0xff]
        %v2539 = vld [vmem:[#allocation3 + $0xe1] sm:$0xff]
        %v2540 = vld [vmem:[#allocation3 + $0xf1] sm:$0xff]
        %v2541 = vld [vmem:[#allocation3 + $0xf9] sm:$0xff]
        %v2542 = vld [vmem:[#allocation3 + $0x109] sm:$0xff]
        %v2543 = vld [vmem:[#allocation3 + $0x111] sm:$0xff]
        %v2544 = vld [vmem:[#allocation3 + $0x121] sm:$0xff]
        %v2545 = vld [vmem:[#allocation3 + $0x129] sm:$0xff]
        %v2546 = vld [vmem:[#allocation3 + $0x139] sm:$0xff]
        %v2547 = vld [vmem:[#allocation3 + $0x141] sm:$0xff]
        %v2548 = vld [vmem:[#allocation3 + $0x151] sm:$0xff]
        %v2549 = vld [vmem:[#allocation3 + $0x159] sm:$0xff]
        %v2550 = vld [vmem:[#allocation3 + $0x169] sm:$0xff]
        %v2551 = vld [vmem:[#allocation3 + $0x171] sm:$0xff]
        %v2552 = vld [vmem:[#allocation3 + $0x2] sm:$0xff]
        %v2553 = vld [vmem:[#allocation3 + $0xa] sm:$0xff]
        %v2554 = vld [vmem:[#allocation3 + $0x1a] sm:$0xff]
        %v2555 = vld [vmem:[#allocation3 + $0x22] sm:$0xff]
        %v2556 = vld [vmem:[#allocation3 + $0x32] sm:$0xff]
        %v2557 = vld [vmem:[#allocation3 + $0x3a] sm:$0xff]
        %v2558 = vld [vmem:[#allocation3 + $0x4a] sm:$0xff]
        %v2559 = vld [vmem:[#allocation3 + $0x52] sm:$0xff]
        %v2560 = vld [vmem:[#allocation3 + $0x62] sm:$0xff]
        %v2561 = vld [vmem:[#allocation3 + $0x6a] sm:$0xff]
        %v2562 = vld [vmem:[#allocation3 + $0x7a] sm:$0xff]
        %v2563 = vld [vmem:[#allocation3 + $0x82] sm:$0xff]
        %v2564 = vld [vmem:[#allocation3 + $0x92] sm:$0xff]
        %v2565 = vld [vmem:[#allocation3 + $0x9a] sm:$0xff]
        %v2566 = vld [vmem:[#allocation3 + $0xaa] sm:$0xff]
        %v2567 = vld [vmem:[#allocation3 + $0xb2] sm:$0xff]
        %v2568 = vld [vmem:[#allocation3 + $0xc2] sm:$0xff]
        %v2569 = vld [vmem:[#allocation3 + $0xca] sm:$0xff]
        %v2570 = vld [vmem:[#allocation3 + $0xda] sm:$0xff]
        %v2571 = vld [vmem:[#allocation3 + $0xe2] sm:$0xff]
        %v2572 = vld [vmem:[#allocation3 + $0xf2] sm:$0xff]
        %v2573 = vld [vmem:[#allocation3 + $0xfa] sm:$0xff]
        %v2574 = vld [vmem:[#allocation3 + $0x10a] sm:$0xff]
        %v2575 = vld [vmem:[#allocation3 + $0x112] sm:$0xff]
        %v2576 = vld [vmem:[#allocation3 + $0x122] sm:$0xff]
        %v2577 = vld [vmem:[#allocation3 + $0x12a] sm:$0xff]
        %v2578 = vld [vmem:[#allocation3 + $0x13a] sm:$0xff]
        %v2579 = vld [vmem:[#allocation3 + $0x142] sm:$0xff]
        %v2580 = vld [vmem:[#allocation3 + $0x152] sm:$0xff]
        %v2581 = vld [vmem:[#allocation3 + $0x15a] sm:$0xff]
        %v2582 = vld [vmem:[#allocation3 + $0x16a] sm:$0xff]
        %v2583 = vld [vmem:[#allocation3 + $0x172] sm:$0xff]
        %v2584 = vld [vmem:[%s2377] sm:$0xff]
        %v2585 = vld [vmem:[%s2377 + $0x8] sm:$0xff]
        %v2586 = vld [vmem:[%s2377 + $0x18] sm:$0xff]
        %v2587 = vld [vmem:[%s2377 + $0x20] sm:$0xff]
        %v2588 = vld [vmem:[%s2377 + $0x30] sm:$0xff]
        %v2589 = vld [vmem:[%s2377 + $0x38] sm:$0xff]
        %v2590 = vld [vmem:[%s2377 + $0x48] sm:$0xff]
        %v2591 = vld [vmem:[%s2377 + $0x50] sm:$0xff]
        %v2592 = vld [vmem:[%s2377 + $0x60] sm:$0xff]
        %v2593 = vld [vmem:[%s2377 + $0x68] sm:$0xff]
        %v2594 = vld [vmem:[%s2377 + $0x78] sm:$0xff]
        %v2595 = vld [vmem:[%s2377 + $0x80] sm:$0xff]
        %v2596 = vld [vmem:[%s2377 + $0x90] sm:$0xff]
        %v2597 = vld [vmem:[%s2377 + $0x98] sm:$0xff]
        %v2598 = vld [vmem:[%s2377 + $0xa8] sm:$0xff]
        %v2599 = vld [vmem:[%s2377 + $0xb0] sm:$0xff]
        %v2600 = vld [vmem:[%s2377 + $0xc0] sm:$0xff]
        %v2601 = vld [vmem:[%s2377 + $0xc8] sm:$0xff]
        %v2602 = vld [vmem:[%s2377 + $0xd8] sm:$0xff]
        %v2603 = vld [vmem:[%s2377 + $0xe0] sm:$0xff]
        %v2604 = vld [vmem:[%s2377 + $0xf0] sm:$0xff]
        %v2605 = vld [vmem:[%s2377 + $0xf8] sm:$0xff]
        %v2606 = vld [vmem:[%s2377 + $0x108] sm:$0xff]
        %v2607 = vld [vmem:[%s2377 + $0x110] sm:$0xff]
        %v2608 = vld [vmem:[%s2377 + $0x120] sm:$0xff]
        %v2609 = vld [vmem:[%s2377 + $0x128] sm:$0xff]
        %v2610 = vld [vmem:[%s2377 + $0x138] sm:$0xff]
        %v2611 = vld [vmem:[%s2377 + $0x140] sm:$0xff]
        %v2612 = vld [vmem:[%s2377 + $0x150] sm:$0xff]
        %v2613 = vld [vmem:[%s2377 + $0x158] sm:$0xff]
        %v2614 = vld [vmem:[%s2377 + $0x168] sm:$0xff]
        %v2615 = vld [vmem:[%s2377 + $0x170] sm:$0xff]
        %v2616 = vld [vmem:[%s2377 + $0x1] sm:$0xff]
        %v2617 = vld [vmem:[%s2377 + $0x9] sm:$0xff]
        %v2618 = vld [vmem:[%s2377 + $0x19] sm:$0xff]
        %v2619 = vld [vmem:[%s2377 + $0x21] sm:$0xff]
        %v2620 = vld [vmem:[%s2377 + $0x31] sm:$0xff]
        %v2621 = vld [vmem:[%s2377 + $0x39] sm:$0xff]
        %v2622 = vld [vmem:[%s2377 + $0x49] sm:$0xff]
        %v2623 = vld [vmem:[%s2377 + $0x51] sm:$0xff]
        %v2624 = vld [vmem:[%s2377 + $0x61] sm:$0xff]
        %v2625 = vld [vmem:[%s2377 + $0x69] sm:$0xff]
        %v2626 = vld [vmem:[%s2377 + $0x79] sm:$0xff]
        %v2627 = vld [vmem:[%s2377 + $0x81] sm:$0xff]
        %v2628 = vld [vmem:[%s2377 + $0x91] sm:$0xff]
        %v2629 = vld [vmem:[%s2377 + $0x99] sm:$0xff]
        %v2630 = vld [vmem:[%s2377 + $0xa9] sm:$0xff]
        %v2631 = vld [vmem:[%s2377 + $0xb1] sm:$0xff]
        %v2632 = vld [vmem:[%s2377 + $0xc1] sm:$0xff]
        %v2633 = vld [vmem:[%s2377 + $0xc9] sm:$0xff]
        %v2634 = vld [vmem:[%s2377 + $0xd9] sm:$0xff]
        %v2635 = vld [vmem:[%s2377 + $0xe1] sm:$0xff]
        %v2636 = vld [vmem:[%s2377 + $0xf1] sm:$0xff]
        %v2637 = vld [vmem:[%s2377 + $0xf9] sm:$0xff]
        %v2638 = vld [vmem:[%s2377 + $0x109] sm:$0xff]
        %v2639 = vld [vmem:[%s2377 + $0x111] sm:$0xff]
        %v2640 = vld [vmem:[%s2377 + $0x121] sm:$0xff]
        %v2641 = vld [vmem:[%s2377 + $0x129] sm:$0xff]
        %v2642 = vld [vmem:[%s2377 + $0x139] sm:$0xff]
        %v2643 = vld [vmem:[%s2377 + $0x141] sm:$0xff]
        %v2644 = vld [vmem:[%s2377 + $0x151] sm:$0xff]
        %v2645 = vld [vmem:[%s2377 + $0x159] sm:$0xff]
        %v2646 = vld [vmem:[%s2377 + $0x169] sm:$0xff]
        %v2647 = vld [vmem:[%s2377 + $0x171] sm:$0xff]
        %v2648 = vld [vmem:[%s2377 + $0x2] sm:$0xff]
        %v2649 = vld [vmem:[%s2377 + $0xa] sm:$0xff]
        %v2650 = vld [vmem:[%s2377 + $0x1a] sm:$0xff]
        %v2651 = vld [vmem:[%s2377 + $0x22] sm:$0xff]
        %v2652 = vld [vmem:[%s2377 + $0x32] sm:$0xff]
        %v2653 = vld [vmem:[%s2377 + $0x3a] sm:$0xff]
        %v2654 = vld [vmem:[%s2377 + $0x4a] sm:$0xff]
        %v2655 = vld [vmem:[%s2377 + $0x52] sm:$0xff]
        %v2656 = vld [vmem:[%s2377 + $0x62] sm:$0xff]
        %v2657 = vld [vmem:[%s2377 + $0x6a] sm:$0xff]
        %v2658 = vld [vmem:[%s2377 + $0x7a] sm:$0xff]
        %v2659 = vld [vmem:[%s2377 + $0x82] sm:$0xff]
        %v2660 = vld [vmem:[%s2377 + $0x92] sm:$0xff]
        %v2661 = vld [vmem:[%s2377 + $0x9a] sm:$0xff]
        %v2662 = vld [vmem:[%s2377 + $0xaa] sm:$0xff]
        %v2663 = vld [vmem:[%s2377 + $0xb2] sm:$0xff]
        %v2664 = vld [vmem:[%s2377 + $0xc2] sm:$0xff]
        %v2665 = vld [vmem:[%s2377 + $0xca] sm:$0xff]
        %v2666 = vld [vmem:[%s2377 + $0xda] sm:$0xff]
        %v2667 = vld [vmem:[%s2377 + $0xe2] sm:$0xff]
        %v2668 = vld [vmem:[%s2377 + $0xf2] sm:$0xff]
        %v2669 = vld [vmem:[%s2377 + $0xfa] sm:$0xff]
        %v2670 = vld [vmem:[%s2377 + $0x10a] sm:$0xff]
        %v2671 = vld [vmem:[%s2377 + $0x112] sm:$0xff]
        %v2672 = vld [vmem:[%s2377 + $0x122] sm:$0xff]
        %v2673 = vld [vmem:[%s2377 + $0x12a] sm:$0xff]
        %v2674 = vld [vmem:[%s2377 + $0x13a] sm:$0xff]
        %v2675 = vld [vmem:[%s2377 + $0x142] sm:$0xff]
        %v2676 = vld [vmem:[%s2377 + $0x152] sm:$0xff]
        %v2677 = vld [vmem:[%s2377 + $0x15a] sm:$0xff]
        %v2678 = vld [vmem:[%s2377 + $0x16a] sm:$0xff]
        %v2679 = vld [vmem:[%s2377 + $0x172] sm:$0xff]
        %s2680 = scalar_lea.vmem [#allocation3], 48
        %v2681 = vld [vmem:[%s2680] sm:$0xff]
        %v2682 = vld [vmem:[%s2680 + $0x8] sm:$0xff]
        %v2683 = vld [vmem:[%s2680 + $0x18] sm:$0xff]
        %v2684 = vld [vmem:[%s2680 + $0x20] sm:$0xff]
        %v2685 = vld [vmem:[%s2680 + $0x30] sm:$0xff]
        %v2686 = vld [vmem:[%s2680 + $0x38] sm:$0xff]
        %v2687 = vld [vmem:[%s2680 + $0x48] sm:$0xff]
        %v2688 = vld [vmem:[%s2680 + $0x50] sm:$0xff]
        %v2689 = vld [vmem:[%s2680 + $0x60] sm:$0xff]
        %v2690 = vld [vmem:[%s2680 + $0x68] sm:$0xff]
        %v2691 = vld [vmem:[%s2680 + $0x78] sm:$0xff]
        %v2692 = vld [vmem:[%s2680 + $0x80] sm:$0xff]
        %v2693 = vld [vmem:[%s2680 + $0x90] sm:$0xff]
        %v2694 = vld [vmem:[%s2680 + $0x98] sm:$0xff]
        %v2695 = vld [vmem:[%s2680 + $0xa8] sm:$0xff]
        %v2696 = vld [vmem:[%s2680 + $0xb0] sm:$0xff]
        %v2697 = vld [vmem:[%s2680 + $0xc0] sm:$0xff]
        %v2698 = vld [vmem:[%s2680 + $0xc8] sm:$0xff]
        %v2699 = vld [vmem:[%s2680 + $0xd8] sm:$0xff]
        %v2700 = vld [vmem:[%s2680 + $0xe0] sm:$0xff]
        %v2701 = vld [vmem:[%s2680 + $0xf0] sm:$0xff]
        %v2702 = vld [vmem:[%s2680 + $0xf8] sm:$0xff]
        %v2703 = vld [vmem:[%s2680 + $0x108] sm:$0xff]
        %v2704 = vld [vmem:[%s2680 + $0x110] sm:$0xff]
        %v2705 = vld [vmem:[%s2680 + $0x120] sm:$0xff]
        %v2706 = vld [vmem:[%s2680 + $0x128] sm:$0xff]
        %v2707 = vld [vmem:[%s2680 + $0x138] sm:$0xff]
        %v2708 = vld [vmem:[%s2680 + $0x140] sm:$0xff]
        %v2709 = vld [vmem:[%s2680 + $0x150] sm:$0xff]
        %v2710 = vld [vmem:[%s2680 + $0x158] sm:$0xff]
        %v2711 = vld [vmem:[%s2680 + $0x168] sm:$0xff]
        %v2712 = vld [vmem:[%s2680 + $0x170] sm:$0xff]
        %v2713 = vld [vmem:[%s2680 + $0x1] sm:$0xff]
        %v2714 = vld [vmem:[%s2680 + $0x9] sm:$0xff]
        %v2715 = vld [vmem:[%s2680 + $0x19] sm:$0xff]
        %v2716 = vld [vmem:[%s2680 + $0x21] sm:$0xff]
        %v2717 = vld [vmem:[%s2680 + $0x31] sm:$0xff]
        %v2718 = vld [vmem:[%s2680 + $0x39] sm:$0xff]
        %v2719 = vld [vmem:[%s2680 + $0x49] sm:$0xff]
        %v2720 = vld [vmem:[%s2680 + $0x51] sm:$0xff]
        %v2721 = vld [vmem:[%s2680 + $0x61] sm:$0xff]
        %v2722 = vld [vmem:[%s2680 + $0x69] sm:$0xff]
        %v2723 = vld [vmem:[%s2680 + $0x79] sm:$0xff]
        %v2724 = vld [vmem:[%s2680 + $0x81] sm:$0xff]
        %v2725 = vld [vmem:[%s2680 + $0x91] sm:$0xff]
        %v2726 = vld [vmem:[%s2680 + $0x99] sm:$0xff]
        %v2727 = vld [vmem:[%s2680 + $0xa9] sm:$0xff]
        %v2728 = vld [vmem:[%s2680 + $0xb1] sm:$0xff]
        %v2729 = vld [vmem:[%s2680 + $0xc1] sm:$0xff]
        %v2730 = vld [vmem:[%s2680 + $0xc9] sm:$0xff]
        %v2731 = vld [vmem:[%s2680 + $0xd9] sm:$0xff]
        %v2732 = vld [vmem:[%s2680 + $0xe1] sm:$0xff]
        %v2733 = vld [vmem:[%s2680 + $0xf1] sm:$0xff]
        %v2734 = vld [vmem:[%s2680 + $0xf9] sm:$0xff]
        %v2735 = vld [vmem:[%s2680 + $0x109] sm:$0xff]
        %v2736 = vld [vmem:[%s2680 + $0x111] sm:$0xff]
        %v2737 = vld [vmem:[%s2680 + $0x121] sm:$0xff]
        %v2738 = vld [vmem:[%s2680 + $0x129] sm:$0xff]
        %v2739 = vld [vmem:[%s2680 + $0x139] sm:$0xff]
        %v2740 = vld [vmem:[%s2680 + $0x141] sm:$0xff]
        %v2741 = vld [vmem:[%s2680 + $0x151] sm:$0xff]
        %v2742 = vld [vmem:[%s2680 + $0x159] sm:$0xff]
        %v2743 = vld [vmem:[%s2680 + $0x169] sm:$0xff]
        %v2744 = vld [vmem:[%s2680 + $0x171] sm:$0xff]
        %v2745 = vld [vmem:[%s2680 + $0x2] sm:$0xff]
        %v2746 = vld [vmem:[%s2680 + $0xa] sm:$0xff]
        %v2747 = vld [vmem:[%s2680 + $0x1a] sm:$0xff]
        %v2748 = vld [vmem:[%s2680 + $0x22] sm:$0xff]
        %v2749 = vld [vmem:[%s2680 + $0x32] sm:$0xff]
        %v2750 = vld [vmem:[%s2680 + $0x3a] sm:$0xff]
        %v2751 = vld [vmem:[%s2680 + $0x4a] sm:$0xff]
        %v2752 = vld [vmem:[%s2680 + $0x52] sm:$0xff]
        %v2753 = vld [vmem:[%s2680 + $0x62] sm:$0xff]
        %v2754 = vld [vmem:[%s2680 + $0x6a] sm:$0xff]
        %v2755 = vld [vmem:[%s2680 + $0x7a] sm:$0xff]
        %v2756 = vld [vmem:[%s2680 + $0x82] sm:$0xff]
        %v2757 = vld [vmem:[%s2680 + $0x92] sm:$0xff]
        %v2758 = vld [vmem:[%s2680 + $0x9a] sm:$0xff]
        %v2759 = vld [vmem:[%s2680 + $0xaa] sm:$0xff]
        %v2760 = vld [vmem:[%s2680 + $0xb2] sm:$0xff]
        %v2761 = vld [vmem:[%s2680 + $0xc2] sm:$0xff]
        %v2762 = vld [vmem:[%s2680 + $0xca] sm:$0xff]
        %v2763 = vld [vmem:[%s2680 + $0xda] sm:$0xff]
        %v2764 = vld [vmem:[%s2680 + $0xe2] sm:$0xff]
        %v2765 = vld [vmem:[%s2680 + $0xf2] sm:$0xff]
        %v2766 = vld [vmem:[%s2680 + $0xfa] sm:$0xff]
        %v2767 = vld [vmem:[%s2680 + $0x10a] sm:$0xff]
        %v2768 = vld [vmem:[%s2680 + $0x112] sm:$0xff]
        %v2769 = vld [vmem:[%s2680 + $0x122] sm:$0xff]
        %v2770 = vld [vmem:[%s2680 + $0x12a] sm:$0xff]
        %v2771 = vld [vmem:[%s2680 + $0x13a] sm:$0xff]
        %v2772 = vld [vmem:[%s2680 + $0x142] sm:$0xff]
        %v2773 = vld [vmem:[%s2680 + $0x152] sm:$0xff]
        %v2774 = vld [vmem:[%s2680 + $0x15a] sm:$0xff]
        %v2775 = vld [vmem:[%s2680 + $0x16a] sm:$0xff]
        %v2776 = vld [vmem:[%s2680 + $0x172] sm:$0xff]
        %2809 = vrot.lane.b32.xlu0 %v2520, 8
        %v2810 = vpop.permute.xlu0 %2809
        %2811 = vrot.lane.b32.xlu0 %v2521, 8
        %v2812 = vpop.permute.xlu0 %2811
        %2813 = vrot.lane.b32.xlu0 %v2522, 8
        %v2814 = vpop.permute.xlu0 %2813
        %2815 = vrot.lane.b32.xlu0 %v2523, 8
        %v2816 = vpop.permute.xlu0 %2815
        %2817 = vrot.lane.b32.xlu0 %v2524, 8
        %v2818 = vpop.permute.xlu0 %2817
        %2819 = vrot.lane.b32.xlu0 %v2525, 8
        %v2820 = vpop.permute.xlu0 %2819
        %2821 = vrot.lane.b32.xlu0 %v2526, 8
        %v2822 = vpop.permute.xlu0 %2821
        %2823 = vrot.lane.b32.xlu0 %v2527, 8
        %v2824 = vpop.permute.xlu0 %2823
        %2825 = vrot.lane.b32.xlu0 %v2528, 8
        %v2826 = vpop.permute.xlu0 %2825
        %2827 = vrot.lane.b32.xlu0 %v2529, 8
        %v2828 = vpop.permute.xlu0 %2827
        %2829 = vrot.lane.b32.xlu0 %v2530, 8
        %v2830 = vpop.permute.xlu0 %2829
        %2831 = vrot.lane.b32.xlu0 %v2531, 8
        %v2832 = vpop.permute.xlu0 %2831
        %2833 = vrot.lane.b32.xlu0 %v2532, 8
        %v2834 = vpop.permute.xlu0 %2833
        %2835 = vrot.lane.b32.xlu0 %v2533, 8
        %v2836 = vpop.permute.xlu0 %2835
        %2837 = vrot.lane.b32.xlu0 %v2534, 8
        %v2838 = vpop.permute.xlu0 %2837
        %2839 = vrot.lane.b32.xlu0 %v2535, 8
        %v2840 = vpop.permute.xlu0 %2839
        %2841 = vrot.lane.b32.xlu0 %v2536, 8
        %v2842 = vpop.permute.xlu0 %2841
        %2843 = vrot.lane.b32.xlu0 %v2537, 8
        %v2844 = vpop.permute.xlu0 %2843
        %2845 = vrot.lane.b32.xlu0 %v2538, 8
        %v2846 = vpop.permute.xlu0 %2845
        %2847 = vrot.lane.b32.xlu0 %v2539, 8
        %v2848 = vpop.permute.xlu0 %2847
        %2849 = vrot.lane.b32.xlu0 %v2540, 8
        %v2850 = vpop.permute.xlu0 %2849
        %2851 = vrot.lane.b32.xlu0 %v2541, 8
        %v2852 = vpop.permute.xlu0 %2851
        %2853 = vrot.lane.b32.xlu0 %v2542, 8
        %v2854 = vpop.permute.xlu0 %2853
        %2855 = vrot.lane.b32.xlu0 %v2543, 8
        %v2856 = vpop.permute.xlu0 %2855
        %2857 = vrot.lane.b32.xlu0 %v2544, 8
        %v2858 = vpop.permute.xlu0 %2857
        %2859 = vrot.lane.b32.xlu0 %v2545, 8
        %v2860 = vpop.permute.xlu0 %2859
        %2861 = vrot.lane.b32.xlu0 %v2546, 8
        %v2862 = vpop.permute.xlu0 %2861
        %2863 = vrot.lane.b32.xlu0 %v2547, 8
        %v2864 = vpop.permute.xlu0 %2863
        %2865 = vrot.lane.b32.xlu0 %v2548, 8
        %v2866 = vpop.permute.xlu0 %2865
        %2867 = vrot.lane.b32.xlu0 %v2549, 8
        %v2868 = vpop.permute.xlu0 %2867
        %2869 = vrot.lane.b32.xlu0 %v2550, 8
        %v2870 = vpop.permute.xlu0 %2869
        %2871 = vrot.lane.b32.xlu0 %v2551, 8
        %v2872 = vpop.permute.xlu0 %2871
        %2937 = vrot.lane.b32.xlu0 %v2552, 16
        %v2938 = vpop.permute.xlu0 %2937
        %2939 = vrot.lane.b32.xlu0 %v2553, 16
        %v2940 = vpop.permute.xlu0 %2939
        %2941 = vrot.lane.b32.xlu0 %v2554, 16
        %v2942 = vpop.permute.xlu0 %2941
        %2943 = vrot.lane.b32.xlu0 %v2555, 16
        %v2944 = vpop.permute.xlu0 %2943
        %2945 = vrot.lane.b32.xlu0 %v2556, 16
        %v2946 = vpop.permute.xlu0 %2945
        %2947 = vrot.lane.b32.xlu0 %v2557, 16
        %v2948 = vpop.permute.xlu0 %2947
        %2949 = vrot.lane.b32.xlu0 %v2558, 16
        %v2950 = vpop.permute.xlu0 %2949
        %2951 = vrot.lane.b32.xlu0 %v2559, 16
        %v2952 = vpop.permute.xlu0 %2951
        %2953 = vrot.lane.b32.xlu0 %v2560, 16
        %v2954 = vpop.permute.xlu0 %2953
        %2955 = vrot.lane.b32.xlu0 %v2561, 16
        %v2956 = vpop.permute.xlu0 %2955
        %2957 = vrot.lane.b32.xlu0 %v2562, 16
        %v2958 = vpop.permute.xlu0 %2957
        %2959 = vrot.lane.b32.xlu0 %v2563, 16
        %v2960 = vpop.permute.xlu0 %2959
        %2961 = vrot.lane.b32.xlu0 %v2564, 16
        %v2962 = vpop.permute.xlu0 %2961
        %2963 = vrot.lane.b32.xlu0 %v2565, 16
        %v2964 = vpop.permute.xlu0 %2963
        %2965 = vrot.lane.b32.xlu0 %v2566, 16
        %v2966 = vpop.permute.xlu0 %2965
        %2967 = vrot.lane.b32.xlu0 %v2567, 16
        %v2968 = vpop.permute.xlu0 %2967
        %2969 = vrot.lane.b32.xlu0 %v2568, 16
        %v2970 = vpop.permute.xlu0 %2969
        %2971 = vrot.lane.b32.xlu0 %v2569, 16
        %v2972 = vpop.permute.xlu0 %2971
        %2973 = vrot.lane.b32.xlu0 %v2570, 16
        %v2974 = vpop.permute.xlu0 %2973
        %2975 = vrot.lane.b32.xlu0 %v2571, 16
        %v2976 = vpop.permute.xlu0 %2975
        %2977 = vrot.lane.b32.xlu0 %v2572, 16
        %v2978 = vpop.permute.xlu0 %2977
        %2979 = vrot.lane.b32.xlu0 %v2573, 16
        %v2980 = vpop.permute.xlu0 %2979
        %2981 = vrot.lane.b32.xlu0 %v2574, 16
        %v2982 = vpop.permute.xlu0 %2981
        %2983 = vrot.lane.b32.xlu0 %v2575, 16
        %v2984 = vpop.permute.xlu0 %2983
        %2985 = vrot.lane.b32.xlu0 %v2576, 16
        %v2986 = vpop.permute.xlu0 %2985
        %2987 = vrot.lane.b32.xlu0 %v2577, 16
        %v2988 = vpop.permute.xlu0 %2987
        %2989 = vrot.lane.b32.xlu0 %v2578, 16
        %v2990 = vpop.permute.xlu0 %2989
        %2991 = vrot.lane.b32.xlu0 %v2579, 16
        %v2992 = vpop.permute.xlu0 %2991
        %2993 = vrot.lane.b32.xlu0 %v2580, 16
        %v2994 = vpop.permute.xlu0 %2993
        %2995 = vrot.lane.b32.xlu0 %v2581, 16
        %v2996 = vpop.permute.xlu0 %2995
        %2997 = vrot.lane.b32.xlu0 %v2582, 16
        %v2998 = vpop.permute.xlu0 %2997
        %2999 = vrot.lane.b32.xlu0 %v2583, 16
        %v3000 = vpop.permute.xlu0 %2999
        %3065 = vrot.lane.b32.xlu0 %v2584, 24
        %v3066 = vpop.permute.xlu0 %3065
        %3067 = vrot.lane.b32.xlu0 %v2585, 24
        %v3068 = vpop.permute.xlu0 %3067
        %3069 = vrot.lane.b32.xlu0 %v2586, 24
        %v3070 = vpop.permute.xlu0 %3069
        %3071 = vrot.lane.b32.xlu0 %v2587, 24
        %v3072 = vpop.permute.xlu0 %3071
        %3073 = vrot.lane.b32.xlu0 %v2588, 24
        %v3074 = vpop.permute.xlu0 %3073
        %3075 = vrot.lane.b32.xlu0 %v2589, 24
        %v3076 = vpop.permute.xlu0 %3075
        %3077 = vrot.lane.b32.xlu0 %v2590, 24
        %v3078 = vpop.permute.xlu0 %3077
        %3079 = vrot.lane.b32.xlu0 %v2591, 24
        %v3080 = vpop.permute.xlu0 %3079
        %3081 = vrot.lane.b32.xlu0 %v2592, 24
        %v3082 = vpop.permute.xlu0 %3081
        %3083 = vrot.lane.b32.xlu0 %v2593, 24
        %v3084 = vpop.permute.xlu0 %3083
        %3085 = vrot.lane.b32.xlu0 %v2594, 24
        %v3086 = vpop.permute.xlu0 %3085
        %3087 = vrot.lane.b32.xlu0 %v2595, 24
        %v3088 = vpop.permute.xlu0 %3087
        %3089 = vrot.lane.b32.xlu0 %v2596, 24
        %v3090 = vpop.permute.xlu0 %3089
        %3091 = vrot.lane.b32.xlu0 %v2597, 24
        %v3092 = vpop.permute.xlu0 %3091
        %3093 = vrot.lane.b32.xlu0 %v2598, 24
        %v3094 = vpop.permute.xlu0 %3093
        %3095 = vrot.lane.b32.xlu0 %v2599, 24
        %v3096 = vpop.permute.xlu0 %3095
        %3097 = vrot.lane.b32.xlu0 %v2600, 24
        %v3098 = vpop.permute.xlu0 %3097
        %3099 = vrot.lane.b32.xlu0 %v2601, 24
        %v3100 = vpop.permute.xlu0 %3099
        %3101 = vrot.lane.b32.xlu0 %v2602, 24
        %v3102 = vpop.permute.xlu0 %3101
        %3103 = vrot.lane.b32.xlu0 %v2603, 24
        %v3104 = vpop.permute.xlu0 %3103
        %3105 = vrot.lane.b32.xlu0 %v2604, 24
        %v3106 = vpop.permute.xlu0 %3105
        %3107 = vrot.lane.b32.xlu0 %v2605, 24
        %v3108 = vpop.permute.xlu0 %3107
        %3109 = vrot.lane.b32.xlu0 %v2606, 24
        %v3110 = vpop.permute.xlu0 %3109
        %3111 = vrot.lane.b32.xlu0 %v2607, 24
        %v3112 = vpop.permute.xlu0 %3111
        %3113 = vrot.lane.b32.xlu0 %v2608, 24
        %v3114 = vpop.permute.xlu0 %3113
        %3115 = vrot.lane.b32.xlu0 %v2609, 24
        %v3116 = vpop.permute.xlu0 %3115
        %3117 = vrot.lane.b32.xlu0 %v2610, 24
        %v3118 = vpop.permute.xlu0 %3117
        %3119 = vrot.lane.b32.xlu0 %v2611, 24
        %v3120 = vpop.permute.xlu0 %3119
        %3121 = vrot.lane.b32.xlu0 %v2612, 24
        %v3122 = vpop.permute.xlu0 %3121
        %3123 = vrot.lane.b32.xlu0 %v2613, 24
        %v3124 = vpop.permute.xlu0 %3123
        %3125 = vrot.lane.b32.xlu0 %v2614, 24
        %v3126 = vpop.permute.xlu0 %3125
        %3127 = vrot.lane.b32.xlu0 %v2615, 24
        %v3128 = vpop.permute.xlu0 %3127
        %3193 = vrot.lane.b32.xlu0 %v2616, 32
        %v3194 = vpop.permute.xlu0 %3193
        %3195 = vrot.lane.b32.xlu0 %v2617, 32
        %v3196 = vpop.permute.xlu0 %3195
        %3197 = vrot.lane.b32.xlu0 %v2618, 32
        %v3198 = vpop.permute.xlu0 %3197
        %3199 = vrot.lane.b32.xlu0 %v2619, 32
        %v3200 = vpop.permute.xlu0 %3199
        %3201 = vrot.lane.b32.xlu0 %v2620, 32
        %v3202 = vpop.permute.xlu0 %3201
        %3203 = vrot.lane.b32.xlu0 %v2621, 32
        %v3204 = vpop.permute.xlu0 %3203
        %3205 = vrot.lane.b32.xlu0 %v2622, 32
        %v3206 = vpop.permute.xlu0 %3205
        %3207 = vrot.lane.b32.xlu0 %v2623, 32
        %v3208 = vpop.permute.xlu0 %3207
        %3209 = vrot.lane.b32.xlu0 %v2624, 32
        %v3210 = vpop.permute.xlu0 %3209
        %3211 = vrot.lane.b32.xlu0 %v2625, 32
        %v3212 = vpop.permute.xlu0 %3211
        %3213 = vrot.lane.b32.xlu0 %v2626, 32
        %v3214 = vpop.permute.xlu0 %3213
        %3215 = vrot.lane.b32.xlu0 %v2627, 32
        %v3216 = vpop.permute.xlu0 %3215
        %3217 = vrot.lane.b32.xlu0 %v2628, 32
        %v3218 = vpop.permute.xlu0 %3217
        %3219 = vrot.lane.b32.xlu0 %v2629, 32
        %v3220 = vpop.permute.xlu0 %3219
        %3221 = vrot.lane.b32.xlu0 %v2630, 32
        %v3222 = vpop.permute.xlu0 %3221
        %3223 = vrot.lane.b32.xlu0 %v2631, 32
        %v3224 = vpop.permute.xlu0 %3223
        %3225 = vrot.lane.b32.xlu0 %v2632, 32
        %v3226 = vpop.permute.xlu0 %3225
        %3227 = vrot.lane.b32.xlu0 %v2633, 32
        %v3228 = vpop.permute.xlu0 %3227
        %3229 = vrot.lane.b32.xlu0 %v2634, 32
        %v3230 = vpop.permute.xlu0 %3229
        %3231 = vrot.lane.b32.xlu0 %v2635, 32
        %v3232 = vpop.permute.xlu0 %3231
        %3233 = vrot.lane.b32.xlu0 %v2636, 32
        %v3234 = vpop.permute.xlu0 %3233
        %3235 = vrot.lane.b32.xlu0 %v2637, 32
        %v3236 = vpop.permute.xlu0 %3235
        %3237 = vrot.lane.b32.xlu0 %v2638, 32
        %v3238 = vpop.permute.xlu0 %3237
        %3239 = vrot.lane.b32.xlu0 %v2639, 32
        %v3240 = vpop.permute.xlu0 %3239
        %3241 = vrot.lane.b32.xlu0 %v2640, 32
        %v3242 = vpop.permute.xlu0 %3241
        %3243 = vrot.lane.b32.xlu0 %v2641, 32
        %v3244 = vpop.permute.xlu0 %3243
        %3245 = vrot.lane.b32.xlu0 %v2642, 32
        %v3246 = vpop.permute.xlu0 %3245
        %3247 = vrot.lane.b32.xlu0 %v2643, 32
        %v3248 = vpop.permute.xlu0 %3247
        %3249 = vrot.lane.b32.xlu0 %v2644, 32
        %v3250 = vpop.permute.xlu0 %3249
        %3251 = vrot.lane.b32.xlu0 %v2645, 32
        %v3252 = vpop.permute.xlu0 %3251
        %3253 = vrot.lane.b32.xlu0 %v2646, 32
        %v3254 = vpop.permute.xlu0 %3253
        %3255 = vrot.lane.b32.xlu0 %v2647, 32
        %v3256 = vpop.permute.xlu0 %3255
        %3321 = vrot.lane.b32.xlu0 %v2648, 40
        %v3322 = vpop.permute.xlu0 %3321
        %3323 = vrot.lane.b32.xlu0 %v2649, 40
        %v3324 = vpop.permute.xlu0 %3323
        %3325 = vrot.lane.b32.xlu0 %v2650, 40
        %v3326 = vpop.permute.xlu0 %3325
        %3327 = vrot.lane.b32.xlu0 %v2651, 40
        %v3328 = vpop.permute.xlu0 %3327
        %3329 = vrot.lane.b32.xlu0 %v2652, 40
        %v3330 = vpop.permute.xlu0 %3329
        %3331 = vrot.lane.b32.xlu0 %v2653, 40
        %v3332 = vpop.permute.xlu0 %3331
        %3333 = vrot.lane.b32.xlu0 %v2654, 40
        %v3334 = vpop.permute.xlu0 %3333
        %3335 = vrot.lane.b32.xlu0 %v2655, 40
        %v3336 = vpop.permute.xlu0 %3335
        %3337 = vrot.lane.b32.xlu0 %v2656, 40
        %v3338 = vpop.permute.xlu0 %3337
        %3339 = vrot.lane.b32.xlu0 %v2657, 40
        %v3340 = vpop.permute.xlu0 %3339
        %3341 = vrot.lane.b32.xlu0 %v2658, 40
        %v3342 = vpop.permute.xlu0 %3341
        %3343 = vrot.lane.b32.xlu0 %v2659, 40
        %v3344 = vpop.permute.xlu0 %3343
        %3345 = vrot.lane.b32.xlu0 %v2660, 40
        %v3346 = vpop.permute.xlu0 %3345
        %3347 = vrot.lane.b32.xlu0 %v2661, 40
        %v3348 = vpop.permute.xlu0 %3347
        %3349 = vrot.lane.b32.xlu0 %v2662, 40
        %v3350 = vpop.permute.xlu0 %3349
        %3351 = vrot.lane.b32.xlu0 %v2663, 40
        %v3352 = vpop.permute.xlu0 %3351
        %3353 = vrot.lane.b32.xlu0 %v2664, 40
        %v3354 = vpop.permute.xlu0 %3353
        %3355 = vrot.lane.b32.xlu0 %v2665, 40
        %v3356 = vpop.permute.xlu0 %3355
        %3357 = vrot.lane.b32.xlu0 %v2666, 40
        %v3358 = vpop.permute.xlu0 %3357
        %3359 = vrot.lane.b32.xlu0 %v2667, 40
        %v3360 = vpop.permute.xlu0 %3359
        %3361 = vrot.lane.b32.xlu0 %v2668, 40
        %v3362 = vpop.permute.xlu0 %3361
        %3363 = vrot.lane.b32.xlu0 %v2669, 40
        %v3364 = vpop.permute.xlu0 %3363
        %3365 = vrot.lane.b32.xlu0 %v2670, 40
        %v3366 = vpop.permute.xlu0 %3365
        %3367 = vrot.lane.b32.xlu0 %v2671, 40
        %v3368 = vpop.permute.xlu0 %3367
        %3369 = vrot.lane.b32.xlu0 %v2672, 40
        %v3370 = vpop.permute.xlu0 %3369
        %3371 = vrot.lane.b32.xlu0 %v2673, 40
        %v3372 = vpop.permute.xlu0 %3371
        %3373 = vrot.lane.b32.xlu0 %v2674, 40
        %v3374 = vpop.permute.xlu0 %3373
        %3375 = vrot.lane.b32.xlu0 %v2675, 40
        %v3376 = vpop.permute.xlu0 %3375
        %3377 = vrot.lane.b32.xlu0 %v2676, 40
        %v3378 = vpop.permute.xlu0 %3377
        %3379 = vrot.lane.b32.xlu0 %v2677, 40
        %v3380 = vpop.permute.xlu0 %3379
        %3381 = vrot.lane.b32.xlu0 %v2678, 40
        %v3382 = vpop.permute.xlu0 %3381
        %3383 = vrot.lane.b32.xlu0 %v2679, 40
        %v3384 = vpop.permute.xlu0 %3383
        %3449 = vrot.lane.b32.xlu0 %v2681, 48
        %v3450 = vpop.permute.xlu0 %3449
        %3451 = vrot.lane.b32.xlu0 %v2682, 48
        %v3452 = vpop.permute.xlu0 %3451
        %3453 = vrot.lane.b32.xlu0 %v2683, 48
        %v3454 = vpop.permute.xlu0 %3453
        %3455 = vrot.lane.b32.xlu0 %v2684, 48
        %v3456 = vpop.permute.xlu0 %3455
        %3457 = vrot.lane.b32.xlu0 %v2685, 48
        %v3458 = vpop.permute.xlu0 %3457
        %3459 = vrot.lane.b32.xlu0 %v2686, 48
        %v3460 = vpop.permute.xlu0 %3459
        %3461 = vrot.lane.b32.xlu0 %v2687, 48
        %v3462 = vpop.permute.xlu0 %3461
        %3463 = vrot.lane.b32.xlu0 %v2688, 48
        %v3464 = vpop.permute.xlu0 %3463
        %3465 = vrot.lane.b32.xlu0 %v2689, 48
        %v3466 = vpop.permute.xlu0 %3465
        %3467 = vrot.lane.b32.xlu0 %v2690, 48
        %v3468 = vpop.permute.xlu0 %3467
        %3469 = vrot.lane.b32.xlu0 %v2691, 48
        %v3470 = vpop.permute.xlu0 %3469
        %3471 = vrot.lane.b32.xlu0 %v2692, 48
        %v3472 = vpop.permute.xlu0 %3471
        %3473 = vrot.lane.b32.xlu0 %v2693, 48
        %v3474 = vpop.permute.xlu0 %3473
        %3475 = vrot.lane.b32.xlu0 %v2694, 48
        %v3476 = vpop.permute.xlu0 %3475
        %3477 = vrot.lane.b32.xlu0 %v2695, 48
        %v3478 = vpop.permute.xlu0 %3477
        %3479 = vrot.lane.b32.xlu0 %v2696, 48
        %v3480 = vpop.permute.xlu0 %3479
        %3481 = vrot.lane.b32.xlu0 %v2697, 48
        %v3482 = vpop.permute.xlu0 %3481
        %3483 = vrot.lane.b32.xlu0 %v2698, 48
        %v3484 = vpop.permute.xlu0 %3483
        %3485 = vrot.lane.b32.xlu0 %v2699, 48
        %v3486 = vpop.permute.xlu0 %3485
        %3487 = vrot.lane.b32.xlu0 %v2700, 48
        %v3488 = vpop.permute.xlu0 %3487
        %3489 = vrot.lane.b32.xlu0 %v2701, 48
        %v3490 = vpop.permute.xlu0 %3489
        %3491 = vrot.lane.b32.xlu0 %v2702, 48
        %v3492 = vpop.permute.xlu0 %3491
        %3493 = vrot.lane.b32.xlu0 %v2703, 48
        %v3494 = vpop.permute.xlu0 %3493
        %3495 = vrot.lane.b32.xlu0 %v2704, 48
        %v3496 = vpop.permute.xlu0 %3495
        %3497 = vrot.lane.b32.xlu0 %v2705, 48
        %v3498 = vpop.permute.xlu0 %3497
        %3499 = vrot.lane.b32.xlu0 %v2706, 48
        %v3500 = vpop.permute.xlu0 %3499
        %3501 = vrot.lane.b32.xlu0 %v2707, 48
        %v3502 = vpop.permute.xlu0 %3501
        %3503 = vrot.lane.b32.xlu0 %v2708, 48
        %v3504 = vpop.permute.xlu0 %3503
        %3505 = vrot.lane.b32.xlu0 %v2709, 48
        %v3506 = vpop.permute.xlu0 %3505
        %3507 = vrot.lane.b32.xlu0 %v2710, 48
        %v3508 = vpop.permute.xlu0 %3507
        %3509 = vrot.lane.b32.xlu0 %v2711, 48
        %v3510 = vpop.permute.xlu0 %3509
        %3511 = vrot.lane.b32.xlu0 %v2712, 48
        %v3512 = vpop.permute.xlu0 %3511
        %3577 = vrot.lane.b32.xlu0 %v2713, 56
        %v3578 = vpop.permute.xlu0 %3577
        %3579 = vrot.lane.b32.xlu0 %v2714, 56
        %v3580 = vpop.permute.xlu0 %3579
        %3581 = vrot.lane.b32.xlu0 %v2715, 56
        %v3582 = vpop.permute.xlu0 %3581
        %3583 = vrot.lane.b32.xlu0 %v2716, 56
        %v3584 = vpop.permute.xlu0 %3583
        %3585 = vrot.lane.b32.xlu0 %v2717, 56
        %v3586 = vpop.permute.xlu0 %3585
        %3587 = vrot.lane.b32.xlu0 %v2718, 56
        %v3588 = vpop.permute.xlu0 %3587
        %3589 = vrot.lane.b32.xlu0 %v2719, 56
        %v3590 = vpop.permute.xlu0 %3589
        %3591 = vrot.lane.b32.xlu0 %v2720, 56
        %v3592 = vpop.permute.xlu0 %3591
        %3593 = vrot.lane.b32.xlu0 %v2721, 56
        %v3594 = vpop.permute.xlu0 %3593
        %3595 = vrot.lane.b32.xlu0 %v2722, 56
        %v3596 = vpop.permute.xlu0 %3595
        %3597 = vrot.lane.b32.xlu0 %v2723, 56
        %v3598 = vpop.permute.xlu0 %3597
        %3599 = vrot.lane.b32.xlu0 %v2724, 56
        %v3600 = vpop.permute.xlu0 %3599
        %3601 = vrot.lane.b32.xlu0 %v2725, 56
        %v3602 = vpop.permute.xlu0 %3601
        %3603 = vrot.lane.b32.xlu0 %v2726, 56
        %v3604 = vpop.permute.xlu0 %3603
        %3605 = vrot.lane.b32.xlu0 %v2727, 56
        %v3606 = vpop.permute.xlu0 %3605
        %3607 = vrot.lane.b32.xlu0 %v2728, 56
        %v3608 = vpop.permute.xlu0 %3607
        %3609 = vrot.lane.b32.xlu0 %v2729, 56
        %v3610 = vpop.permute.xlu0 %3609
        %3611 = vrot.lane.b32.xlu0 %v2730, 56
        %v3612 = vpop.permute.xlu0 %3611
        %3613 = vrot.lane.b32.xlu0 %v2731, 56
        %v3614 = vpop.permute.xlu0 %3613
        %3615 = vrot.lane.b32.xlu0 %v2732, 56
        %v3616 = vpop.permute.xlu0 %3615
        %3617 = vrot.lane.b32.xlu0 %v2733, 56
        %v3618 = vpop.permute.xlu0 %3617
        %3619 = vrot.lane.b32.xlu0 %v2734, 56
        %v3620 = vpop.permute.xlu0 %3619
        %3621 = vrot.lane.b32.xlu0 %v2735, 56
        %v3622 = vpop.permute.xlu0 %3621
        %3623 = vrot.lane.b32.xlu0 %v2736, 56
        %v3624 = vpop.permute.xlu0 %3623
        %3625 = vrot.lane.b32.xlu0 %v2737, 56
        %v3626 = vpop.permute.xlu0 %3625
        %3627 = vrot.lane.b32.xlu0 %v2738, 56
        %v3628 = vpop.permute.xlu0 %3627
        %3629 = vrot.lane.b32.xlu0 %v2739, 56
        %v3630 = vpop.permute.xlu0 %3629
        %3631 = vrot.lane.b32.xlu0 %v2740, 56
        %v3632 = vpop.permute.xlu0 %3631
        %3633 = vrot.lane.b32.xlu0 %v2741, 56
        %v3634 = vpop.permute.xlu0 %3633
        %3635 = vrot.lane.b32.xlu0 %v2742, 56
        %v3636 = vpop.permute.xlu0 %3635
        %3637 = vrot.lane.b32.xlu0 %v2743, 56
        %v3638 = vpop.permute.xlu0 %3637
        %3639 = vrot.lane.b32.xlu0 %v2744, 56
        %v3640 = vpop.permute.xlu0 %3639
        %3705 = vrot.lane.b32.xlu0 %v2745, 64
        %v3706 = vpop.permute.xlu0 %3705
        %3707 = vrot.lane.b32.xlu0 %v2746, 64
        %v3708 = vpop.permute.xlu0 %3707
        %3709 = vrot.lane.b32.xlu0 %v2747, 64
        %v3710 = vpop.permute.xlu0 %3709
        %3711 = vrot.lane.b32.xlu0 %v2748, 64
        %v3712 = vpop.permute.xlu0 %3711
        %3713 = vrot.lane.b32.xlu0 %v2749, 64
        %v3714 = vpop.permute.xlu0 %3713
        %3715 = vrot.lane.b32.xlu0 %v2750, 64
        %v3716 = vpop.permute.xlu0 %3715
        %3717 = vrot.lane.b32.xlu0 %v2751, 64
        %v3718 = vpop.permute.xlu0 %3717
        %3719 = vrot.lane.b32.xlu0 %v2752, 64
        %v3720 = vpop.permute.xlu0 %3719
        %3721 = vrot.lane.b32.xlu0 %v2753, 64
        %v3722 = vpop.permute.xlu0 %3721
        %3723 = vrot.lane.b32.xlu0 %v2754, 64
        %v3724 = vpop.permute.xlu0 %3723
        %3725 = vrot.lane.b32.xlu0 %v2755, 64
        %v3726 = vpop.permute.xlu0 %3725
        %3727 = vrot.lane.b32.xlu0 %v2756, 64
        %v3728 = vpop.permute.xlu0 %3727
        %3729 = vrot.lane.b32.xlu0 %v2757, 64
        %v3730 = vpop.permute.xlu0 %3729
        %3731 = vrot.lane.b32.xlu0 %v2758, 64
        %v3732 = vpop.permute.xlu0 %3731
        %3733 = vrot.lane.b32.xlu0 %v2759, 64
        %v3734 = vpop.permute.xlu0 %3733
        %3735 = vrot.lane.b32.xlu0 %v2760, 64
        %v3736 = vpop.permute.xlu0 %3735
        %3737 = vrot.lane.b32.xlu0 %v2761, 64
        %v3738 = vpop.permute.xlu0 %3737
        %3739 = vrot.lane.b32.xlu0 %v2762, 64
        %v3740 = vpop.permute.xlu0 %3739
        %3741 = vrot.lane.b32.xlu0 %v2763, 64
        %v3742 = vpop.permute.xlu0 %3741
        %3743 = vrot.lane.b32.xlu0 %v2764, 64
        %v3744 = vpop.permute.xlu0 %3743
        %3745 = vrot.lane.b32.xlu0 %v2765, 64
        %v3746 = vpop.permute.xlu0 %3745
        %3747 = vrot.lane.b32.xlu0 %v2766, 64
        %v3748 = vpop.permute.xlu0 %3747
        %3749 = vrot.lane.b32.xlu0 %v2767, 64
        %v3750 = vpop.permute.xlu0 %3749
        %3751 = vrot.lane.b32.xlu0 %v2768, 64
        %v3752 = vpop.permute.xlu0 %3751
        %3753 = vrot.lane.b32.xlu0 %v2769, 64
        %v3754 = vpop.permute.xlu0 %3753
        %3755 = vrot.lane.b32.xlu0 %v2770, 64
        %v3756 = vpop.permute.xlu0 %3755
        %3757 = vrot.lane.b32.xlu0 %v2771, 64
        %v3758 = vpop.permute.xlu0 %3757
        %3759 = vrot.lane.b32.xlu0 %v2772, 64
        %v3760 = vpop.permute.xlu0 %3759
        %3761 = vrot.lane.b32.xlu0 %v2773, 64
        %v3762 = vpop.permute.xlu0 %3761
        %3763 = vrot.lane.b32.xlu0 %v2774, 64
        %v3764 = vpop.permute.xlu0 %3763
        %3765 = vrot.lane.b32.xlu0 %v2775, 64
        %v3766 = vpop.permute.xlu0 %3765
        %3767 = vrot.lane.b32.xlu0 %v2776, 64
        %v3768 = vpop.permute.xlu0 %3767
        %v3801 = vsel %vm1658, %v2488, %v2810
        %v3802 = vsel %vm1658, %v2489, %v2812
        %v3803 = vsel %vm1658, %v2490, %v2814
        %v3804 = vsel %vm1658, %v2491, %v2816
        %v3805 = vsel %vm1658, %v2492, %v2818
        %v3806 = vsel %vm1658, %v2493, %v2820
        %v3807 = vsel %vm1658, %v2494, %v2822
        %v3808 = vsel %vm1658, %v2495, %v2824
        %v3809 = vsel %vm1658, %v2496, %v2826
        %v3810 = vsel %vm1658, %v2497, %v2828
        %v3811 = vsel %vm1658, %v2498, %v2830
        %v3812 = vsel %vm1658, %v2499, %v2832
        %v3813 = vsel %vm1658, %v2500, %v2834
        %v3814 = vsel %vm1658, %v2501, %v2836
        %v3815 = vsel %vm1658, %v2502, %v2838
        %v3816 = vsel %vm1658, %v2503, %v2840
        %v3817 = vsel %vm1658, %v2504, %v2842
        %v3818 = vsel %vm1658, %v2505, %v2844
        %v3819 = vsel %vm1658, %v2506, %v2846
        %v3820 = vsel %vm1658, %v2507, %v2848
        %v3821 = vsel %vm1658, %v2508, %v2850
        %v3822 = vsel %vm1658, %v2509, %v2852
        %v3823 = vsel %vm1658, %v2510, %v2854
        %v3824 = vsel %vm1658, %v2511, %v2856
        %v3825 = vsel %vm1658, %v2512, %v2858
        %v3826 = vsel %vm1658, %v2513, %v2860
        %v3827 = vsel %vm1658, %v2514, %v2862
        %v3828 = vsel %vm1658, %v2515, %v2864
        %v3829 = vsel %vm1658, %v2516, %v2866
        %v3830 = vsel %vm1658, %v2517, %v2868
        %v3831 = vsel %vm1658, %v2518, %v2870
        %v3832 = vsel %vm1658, %v2519, %v2872
        %v3833 = vsel %vm1724, %v3801, %v2938
        %v3834 = vsel %vm1724, %v3802, %v2940
        %v3835 = vsel %vm1724, %v3803, %v2942
        %v3836 = vsel %vm1724, %v3804, %v2944
        %v3837 = vsel %vm1724, %v3805, %v2946
        %v3838 = vsel %vm1724, %v3806, %v2948
        %v3839 = vsel %vm1724, %v3807, %v2950
        %v3840 = vsel %vm1724, %v3808, %v2952
        %v3841 = vsel %vm1724, %v3809, %v2954
        %v3842 = vsel %vm1724, %v3810, %v2956
        %v3843 = vsel %vm1724, %v3811, %v2958
        %v3844 = vsel %vm1724, %v3812, %v2960
        %v3845 = vsel %vm1724, %v3813, %v2962
        %v3846 = vsel %vm1724, %v3814, %v2964
        %v3847 = vsel %vm1724, %v3815, %v2966
        %v3848 = vsel %vm1724, %v3816, %v2968
        %v3849 = vsel %vm1724, %v3817, %v2970
        %v3850 = vsel %vm1724, %v3818, %v2972
        %v3851 = vsel %vm1724, %v3819, %v2974
        %v3852 = vsel %vm1724, %v3820, %v2976
        %v3853 = vsel %vm1724, %v3821, %v2978
        %v3854 = vsel %vm1724, %v3822, %v2980
        %v3855 = vsel %vm1724, %v3823, %v2982
        %v3856 = vsel %vm1724, %v3824, %v2984
        %v3857 = vsel %vm1724, %v3825, %v2986
        %v3858 = vsel %vm1724, %v3826, %v2988
        %v3859 = vsel %vm1724, %v3827, %v2990
        %v3860 = vsel %vm1724, %v3828, %v2992
        %v3861 = vsel %vm1724, %v3829, %v2994
        %v3862 = vsel %vm1724, %v3830, %v2996
        %v3863 = vsel %vm1724, %v3831, %v2998
        %v3864 = vsel %vm1724, %v3832, %v3000
        %v3865 = vsel %vm1790, %v3833, %v3066
        %v3866 = vsel %vm1790, %v3834, %v3068
        %v3867 = vsel %vm1790, %v3835, %v3070
        %v3868 = vsel %vm1790, %v3836, %v3072
        %v3869 = vsel %vm1790, %v3837, %v3074
        %v3870 = vsel %vm1790, %v3838, %v3076
        %v3871 = vsel %vm1790, %v3839, %v3078
        %v3872 = vsel %vm1790, %v3840, %v3080
        %v3873 = vsel %vm1790, %v3841, %v3082
        %v3874 = vsel %vm1790, %v3842, %v3084
        %v3875 = vsel %vm1790, %v3843, %v3086
        %v3876 = vsel %vm1790, %v3844, %v3088
        %v3877 = vsel %vm1790, %v3845, %v3090
        %v3878 = vsel %vm1790, %v3846, %v3092
        %v3879 = vsel %vm1790, %v3847, %v3094
        %v3880 = vsel %vm1790, %v3848, %v3096
        %v3881 = vsel %vm1790, %v3849, %v3098
        %v3882 = vsel %vm1790, %v3850, %v3100
        %v3883 = vsel %vm1790, %v3851, %v3102
        %v3884 = vsel %vm1790, %v3852, %v3104
        %v3885 = vsel %vm1790, %v3853, %v3106
        %v3886 = vsel %vm1790, %v3854, %v3108
        %v3887 = vsel %vm1790, %v3855, %v3110
        %v3888 = vsel %vm1790, %v3856, %v3112
        %v3889 = vsel %vm1790, %v3857, %v3114
        %v3890 = vsel %vm1790, %v3858, %v3116
        %v3891 = vsel %vm1790, %v3859, %v3118
        %v3892 = vsel %vm1790, %v3860, %v3120
        %v3893 = vsel %vm1790, %v3861, %v3122
        %v3894 = vsel %vm1790, %v3862, %v3124
        %v3895 = vsel %vm1790, %v3863, %v3126
        %v3896 = vsel %vm1790, %v3864, %v3128
        %v3897 = vsel %vm1856, %v3865, %v3194
        %v3898 = vsel %vm1856, %v3866, %v3196
        %v3899 = vsel %vm1856, %v3867, %v3198
        %v3900 = vsel %vm1856, %v3868, %v3200
        %v3901 = vsel %vm1856, %v3869, %v3202
        %v3902 = vsel %vm1856, %v3870, %v3204
        %v3903 = vsel %vm1856, %v3871, %v3206
        %v3904 = vsel %vm1856, %v3872, %v3208
        %v3905 = vsel %vm1856, %v3873, %v3210
        %v3906 = vsel %vm1856, %v3874, %v3212
        %v3907 = vsel %vm1856, %v3875, %v3214
        %v3908 = vsel %vm1856, %v3876, %v3216
        %v3909 = vsel %vm1856, %v3877, %v3218
        %v3910 = vsel %vm1856, %v3878, %v3220
        %v3911 = vsel %vm1856, %v3879, %v3222
        %v3912 = vsel %vm1856, %v3880, %v3224
        %v3913 = vsel %vm1856, %v3881, %v3226
        %v3914 = vsel %vm1856, %v3882, %v3228
        %v3915 = vsel %vm1856, %v3883, %v3230
        %v3916 = vsel %vm1856, %v3884, %v3232
        %v3917 = vsel %vm1856, %v3885, %v3234
        %v3918 = vsel %vm1856, %v3886, %v3236
        %v3919 = vsel %vm1856, %v3887, %v3238
        %v3920 = vsel %vm1856, %v3888, %v3240
        %v3921 = vsel %vm1856, %v3889, %v3242
        %v3922 = vsel %vm1856, %v3890, %v3244
        %v3923 = vsel %vm1856, %v3891, %v3246
        %v3924 = vsel %vm1856, %v3892, %v3248
        %v3925 = vsel %vm1856, %v3893, %v3250
        %v3926 = vsel %vm1856, %v3894, %v3252
        %v3927 = vsel %vm1856, %v3895, %v3254
        %v3928 = vsel %vm1856, %v3896, %v3256
        %vm3929 = vcmask 326656
        %v3930 = vsel %vm3929, %v3897, %v3322
        %v3931 = vsel %vm3929, %v3898, %v3324
        %v3932 = vsel %vm3929, %v3899, %v3326
        %v3933 = vsel %vm3929, %v3900, %v3328
        %v3934 = vsel %vm3929, %v3901, %v3330
        %v3935 = vsel %vm3929, %v3902, %v3332
        %v3936 = vsel %vm3929, %v3903, %v3334
        %v3937 = vsel %vm3929, %v3904, %v3336
        %v3938 = vsel %vm3929, %v3905, %v3338
        %v3939 = vsel %vm3929, %v3906, %v3340
        %v3940 = vsel %vm3929, %v3907, %v3342
        %v3941 = vsel %vm3929, %v3908, %v3344
        %v3942 = vsel %vm3929, %v3909, %v3346
        %v3943 = vsel %vm3929, %v3910, %v3348
        %v3944 = vsel %vm3929, %v3911, %v3350
        %v3945 = vsel %vm3929, %v3912, %v3352
        %v3946 = vsel %vm3929, %v3913, %v3354
        %v3947 = vsel %vm3929, %v3914, %v3356
        %v3948 = vsel %vm3929, %v3915, %v3358
        %v3949 = vsel %vm3929, %v3916, %v3360
        %v3950 = vsel %vm3929, %v3917, %v3362
        %v3951 = vsel %vm3929, %v3918, %v3364
        %v3952 = vsel %vm3929, %v3919, %v3366
        %v3953 = vsel %vm3929, %v3920, %v3368
        %v3954 = vsel %vm3929, %v3921, %v3370
        %v3955 = vsel %vm3929, %v3922, %v3372
        %v3956 = vsel %vm3929, %v3923, %v3374
        %v3957 = vsel %vm3929, %v3924, %v3376
        %v3958 = vsel %vm3929, %v3925, %v3378
        %v3959 = vsel %vm3929, %v3926, %v3380
        %v3960 = vsel %vm3929, %v3927, %v3382
        %v3961 = vsel %vm3929, %v3928, %v3384
        %vm3962 = vcmask 392192
        %v3963 = vsel %vm3962, %v3930, %v3450
        %v3964 = vsel %vm3962, %v3931, %v3452
        %v3965 = vsel %vm3962, %v3932, %v3454
        %v3966 = vsel %vm3962, %v3933, %v3456
        %v3967 = vsel %vm3962, %v3934, %v3458
        %v3968 = vsel %vm3962, %v3935, %v3460
        %v3969 = vsel %vm3962, %v3936, %v3462
        %v3970 = vsel %vm3962, %v3937, %v3464
        %v3971 = vsel %vm3962, %v3938, %v3466
        %v3972 = vsel %vm3962, %v3939, %v3468
        %v3973 = vsel %vm3962, %v3940, %v3470
        %v3974 = vsel %vm3962, %v3941, %v3472
        %v3975 = vsel %vm3962, %v3942, %v3474
        %v3976 = vsel %vm3962, %v3943, %v3476
        %v3977 = vsel %vm3962, %v3944, %v3478
        %v3978 = vsel %vm3962, %v3945, %v3480
        %v3979 = vsel %vm3962, %v3946, %v3482
        %v3980 = vsel %vm3962, %v3947, %v3484
        %v3981 = vsel %vm3962, %v3948, %v3486
        %v3982 = vsel %vm3962, %v3949, %v3488
        %v3983 = vsel %vm3962, %v3950, %v3490
        %v3984 = vsel %vm3962, %v3951, %v3492
        %v3985 = vsel %vm3962, %v3952, %v3494
        %v3986 = vsel %vm3962, %v3953, %v3496
        %v3987 = vsel %vm3962, %v3954, %v3498
        %v3988 = vsel %vm3962, %v3955, %v3500
        %v3989 = vsel %vm3962, %v3956, %v3502
        %v3990 = vsel %vm3962, %v3957, %v3504
        %v3991 = vsel %vm3962, %v3958, %v3506
        %v3992 = vsel %vm3962, %v3959, %v3508
        %v3993 = vsel %vm3962, %v3960, %v3510
        %v3994 = vsel %vm3962, %v3961, %v3512
        %vm3995 = vcmask 457728
        %v3996 = vsel %vm3995, %v3963, %v3578
        %v3997 = vsel %vm3995, %v3964, %v3580
        %v3998 = vsel %vm3995, %v3965, %v3582
        %v3999 = vsel %vm3995, %v3966, %v3584
        %v4000 = vsel %vm3995, %v3967, %v3586
        %v4001 = vsel %vm3995, %v3968, %v3588
        %v4002 = vsel %vm3995, %v3969, %v3590
        %v4003 = vsel %vm3995, %v3970, %v3592
        %v4004 = vsel %vm3995, %v3971, %v3594
        %v4005 = vsel %vm3995, %v3972, %v3596
        %v4006 = vsel %vm3995, %v3973, %v3598
        %v4007 = vsel %vm3995, %v3974, %v3600
        %v4008 = vsel %vm3995, %v3975, %v3602
        %v4009 = vsel %vm3995, %v3976, %v3604
        %v4010 = vsel %vm3995, %v3977, %v3606
        %v4011 = vsel %vm3995, %v3978, %v3608
        %v4012 = vsel %vm3995, %v3979, %v3610
        %v4013 = vsel %vm3995, %v3980, %v3612
        %v4014 = vsel %vm3995, %v3981, %v3614
        %v4015 = vsel %vm3995, %v3982, %v3616
        %v4016 = vsel %vm3995, %v3983, %v3618
        %v4017 = vsel %vm3995, %v3984, %v3620
        %v4018 = vsel %vm3995, %v3985, %v3622
        %v4019 = vsel %vm3995, %v3986, %v3624
        %v4020 = vsel %vm3995, %v3987, %v3626
        %v4021 = vsel %vm3995, %v3988, %v3628
        %v4022 = vsel %vm3995, %v3989, %v3630
        %v4023 = vsel %vm3995, %v3990, %v3632
        %v4024 = vsel %vm3995, %v3991, %v3634
        %v4025 = vsel %vm3995, %v3992, %v3636
        %v4026 = vsel %vm3995, %v3993, %v3638
        %v4027 = vsel %vm3995, %v3994, %v3640
        %vm4028 = vcmask 523264
        %v4029 = vsel %vm4028, %v3996, %v3706
        %v4030 = vsel %vm4028, %v3997, %v3708
        %v4031 = vsel %vm4028, %v3998, %v3710
        %v4032 = vsel %vm4028, %v3999, %v3712
        %v4033 = vsel %vm4028, %v4000, %v3714
        %v4034 = vsel %vm4028, %v4001, %v3716
        %v4035 = vsel %vm4028, %v4002, %v3718
        %v4036 = vsel %vm4028, %v4003, %v3720
        %v4037 = vsel %vm4028, %v4004, %v3722
        %v4038 = vsel %vm4028, %v4005, %v3724
        %v4039 = vsel %vm4028, %v4006, %v3726
        %v4040 = vsel %vm4028, %v4007, %v3728
        %v4041 = vsel %vm4028, %v4008, %v3730
        %v4042 = vsel %vm4028, %v4009, %v3732
        %v4043 = vsel %vm4028, %v4010, %v3734
        %v4044 = vsel %vm4028, %v4011, %v3736
        %v4045 = vsel %vm4028, %v4012, %v3738
        %v4046 = vsel %vm4028, %v4013, %v3740
        %v4047 = vsel %vm4028, %v4014, %v3742
        %v4048 = vsel %vm4028, %v4015, %v3744
        %v4049 = vsel %vm4028, %v4016, %v3746
        %v4050 = vsel %vm4028, %v4017, %v3748
        %v4051 = vsel %vm4028, %v4018, %v3750
        %v4052 = vsel %vm4028, %v4019, %v3752
        %v4053 = vsel %vm4028, %v4020, %v3754
        %v4054 = vsel %vm4028, %v4021, %v3756
        %v4055 = vsel %vm4028, %v4022, %v3758
        %v4056 = vsel %vm4028, %v4023, %v3760
        %v4057 = vsel %vm4028, %v4024, %v3762
        %v4058 = vsel %vm4028, %v4025, %v3764
        %v4059 = vsel %vm4028, %v4026, %v3766
        %v4060 = vsel %vm4028, %v4027, %v3768
        %v4061 = vld [vmem:[%s2] sm:$0xff]
        %v4062 = vld [vmem:[%s2 + $0x8] sm:$0xff]
        %v4063 = vld [vmem:[%s2 + $0x10] sm:$0xff]
        %v4064 = vld [vmem:[%s2 + $0x18] sm:$0xff]
        %v4065 = vld [vmem:[%s2 + $0x20] sm:$0xff]
        %v4066 = vld [vmem:[%s2 + $0x28] sm:$0xff]
        %v4067 = vld [vmem:[%s2 + $0x30] sm:$0xff]
        %v4068 = vld [vmem:[%s2 + $0x38] sm:$0xff]
        %v4069 = vld [vmem:[%s2 + $0x40] sm:$0xff]
        %vm4070 = vcmask 588800
        %v4072 = vsel %vm4070, %v4029, 0
        %v4075 = vsel %vm4070, %v4030, 0
        %v4078 = vsel %vm4070, %v4031, 0
        %v4081 = vsel %vm4070, %v4032, 0
        %v4084 = vsel %vm4070, %v4033, 0
        %v4087 = vsel %vm4070, %v4034, 0
        %v4090 = vsel %vm4070, %v4035, 0
        %v4093 = vsel %vm4070, %v4036, 0
        %v4096 = vsel %vm4070, %v4037, 0
        %v4099 = vsel %vm4070, %v4038, 0
        %v4102 = vsel %vm4070, %v4039, 0
        %v4105 = vsel %vm4070, %v4040, 0
        %v4108 = vsel %vm4070, %v4041, 0
        %v4111 = vsel %vm4070, %v4042, 0
        %v4114 = vsel %vm4070, %v4043, 0
        %v4117 = vsel %vm4070, %v4044, 0
        %v4120 = vsel %vm4070, %v4045, 0
        %v4123 = vsel %vm4070, %v4046, 0
        %v4126 = vsel %vm4070, %v4047, 0
        %v4129 = vsel %vm4070, %v4048, 0
        %v4132 = vsel %vm4070, %v4049, 0
        %v4135 = vsel %vm4070, %v4050, 0
        %v4138 = vsel %vm4070, %v4051, 0
        %v4141 = vsel %vm4070, %v4052, 0
        %v4144 = vsel %vm4070, %v4053, 0
        %v4147 = vsel %vm4070, %v4054, 0
        %v4150 = vsel %vm4070, %v4055, 0
        %v4153 = vsel %vm4070, %v4056, 0
        %v4156 = vsel %vm4070, %v4057, 0
        %v4159 = vsel %vm4070, %v4058, 0
        %v4162 = vsel %vm4070, %v4059, 0
        %v4165 = vsel %vm4070, %v4060, 0
        %4167 = vmatprep.subr.mxu0 0.0
        %4168 = vmatpush1.msra.mxu0 %v4061
        %4169 = vmatprep.subr.mxu0 0.0
        %4170 = vmatpush1.msra.mxu0 %v4062
        %4171 = vmatprep.subr.mxu0 0.0
        %4172 = vmatpush1.msra.mxu0 %v4063
        %4173 = vmatprep.subr.mxu0 0.0
        %4174 = vmatpush1.msra.mxu0 %v4064
        %4175 = vmatprep.subr.mxu0 0.0
        %4176 = vmatpush1.msra.mxu0 %v4065
        %4177 = vmatprep.subr.mxu0 0.0
        %4178 = vmatpush1.msra.mxu0 %v4066
        %4179 = vmatprep.subr.mxu0 0.0
        %4180 = vmatpush1.msra.mxu0 %v4067
        %4181 = vmatprep.subr.mxu0 0.0
        %4182 = vmatpush1.msra.mxu0 %v4068
        %4183 = vmatprep.subr.mxu0 0.0
        %4184 = vmatpush1.msra.mxu0 %v4069
        %4185 = vmatprep.subr.mxu0 0.0
        %4186 = vmatpush1.msra.mxu0 0.0
        %4187 = vmatprep.subr.mxu0 0.0
        %4188 = vmatpush1.msra.mxu0 0.0
        %4189 = vmatprep.subr.mxu0 0.0
        %4190 = vmatpush1.msra.mxu0 0.0
        %4191 = vmatprep.subr.mxu0 0.0
        %4192 = vmatpush1.msra.mxu0 0.0
        %4193 = vmatprep.subr.mxu0 0.0
        %4194 = vmatpush1.msra.mxu0 0.0
        %4195 = vmatprep.subr.mxu0 0.0
        %4196 = vmatpush1.msra.mxu0 0.0
        %4197 = vmatprep.subr.mxu0 0.0
        %4198 = vmatpush1.msra.mxu0 0.0
        %4199 = vmatprep.subr.mxu0 0.0
        %4200 = vmatpush1.msra.mxu0 0.0
        %4201 = vmatprep.subr.mxu0 0.0
        %4202 = vmatpush1.msra.mxu0 0.0
        %4203 = vmatprep.subr.mxu0 0.0
        %4204 = vmatpush1.msra.mxu0 0.0
        %4205 = vmatprep.subr.mxu0 0.0
        %4206 = vmatpush1.msra.mxu0 0.0
        %4207 = vmatprep.subr.mxu0 0.0
        %4208 = vmatpush1.msra.mxu0 0.0
        %4209 = vmatprep.subr.mxu0 0.0
        %4210 = vmatpush1.msra.mxu0 0.0
        %4211 = vmatprep.subr.mxu0 0.0
        %4212 = vmatpush1.msra.mxu0 0.0
        %4213 = vmatprep.subr.mxu0 0.0
        %4214 = vmatpush1.msra.mxu0 0.0
        %4215 = vmatprep.subr.mxu0 0.0
        %4216 = vmatpush1.msra.mxu0 0.0
        %4217 = vmatprep.subr.mxu0 0.0
        %4218 = vmatpush1.msra.mxu0 0.0
        %4219 = vmatprep.subr.mxu0 0.0
        %4220 = vmatpush1.msra.mxu0 0.0
        %4221 = vmatprep.subr.mxu0 0.0
        %4222 = vmatpush1.msra.mxu0 0.0
        %4223 = vmatprep.subr.mxu0 0.0
        %4224 = vmatpush1.msra.mxu0 0.0
        %4225 = vmatprep.subr.mxu0 0.0
        %4226 = vmatpush1.msra.mxu0 0.0
        %4227 = vmatprep.subr.mxu0 0.0
        %4228 = vmatpush1.msra.mxu0 0.0
        %4229 = vmatprep.subr.mxu0 0.0
        %4230 = vmatpush1.msra.mxu0 0.0
        %4231 = vmatprep.mubr.f32.mxu0 0.0
        %4232 = vmatmul.mubr.f32.gmra.mrb[0].mxu0 %v4072
        %v4233 = vpop.f32.mrb[0].mxu0
        %v4234 = vadd.f32 0.0, %v4233
        %v4235 = vpop.f32.mrb[0].mxu0
        %4236 = vmatprep.mubr.f32.mxu0 0.0
        %4237 = vmatmul.mubr.f32.gmra.mrb[0].mxu0 %v4075
        %v4238 = vpop.f32.mrb[0].mxu0
        %v4239 = vadd.f32 0.0, %v4238
        %v4240 = vpop.f32.mrb[0].mxu0
        %4241 = vmatprep.mubr.f32.mxu0 0.0
        %4242 = vmatmul.mubr.f32.gmra.mrb[0].mxu0 %v4078
        %v4243 = vpop.f32.mrb[0].mxu0
        %v4244 = vadd.f32 0.0, %v4243
        %v4245 = vpop.f32.mrb[0].mxu0
        %4246 = vmatprep.mubr.f32.mxu0 0.0
        %4247 = vmatmul.mubr.f32.gmra.mrb[0].mxu0 %v4081
        %v4248 = vpop.f32.mrb[0].mxu0
        %v4249 = vadd.f32 0.0, %v4248
        %v4250 = vpop.f32.mrb[0].mxu0
        %4251 = vmatprep.mubr.f32.mxu0 0.0
        %4252 = vmatmul.mubr.f32.gmra.mrb[0].mxu0 %v4084
        %v4253 = vpop.f32.mrb[0].mxu0
        %v4254 = vadd.f32 0.0, %v4253
        %v4255 = vpop.f32.mrb[0].mxu0
        %4256 = vmatprep.mubr.f32.mxu0 0.0
        %4257 = vmatmul.mubr.f32.gmra.mrb[0].mxu0 %v4087
        %v4258 = vpop.f32.mrb[0].mxu0
        %v4259 = vadd.f32 0.0, %v4258
        %v4260 = vpop.f32.mrb[0].mxu0
        %4261 = vmatprep.mubr.f32.mxu0 0.0
        %4262 = vmatmul.mubr.f32.gmra.mrb[0].mxu0 %v4090
        %v4263 = vpop.f32.mrb[0].mxu0
        %v4264 = vadd.f32 0.0, %v4263
        %v4265 = vpop.f32.mrb[0].mxu0
        %4266 = vmatprep.mubr.f32.mxu0 0.0
        %4267 = vmatmul.mubr.f32.gmra.mrb[0].mxu0 %v4093
        %v4268 = vpop.f32.mrb[0].mxu0
        %v4269 = vadd.f32 0.0, %v4268
        %v4270 = vpop.f32.mrb[0].mxu0
        %4271 = vmatprep.mubr.f32.mxu0 0.0
        %4272 = vmatmul.mubr.f32.gmra.mrb[0].mxu0 %v4096
        %v4273 = vpop.f32.mrb[0].mxu0
        %v4274 = vadd.f32 0.0, %v4273
        %v4275 = vpop.f32.mrb[0].mxu0
        %4276 = vmatprep.mubr.f32.mxu0 0.0
        %4277 = vmatmul.mubr.f32.gmra.mrb[0].mxu0 %v4099
        %v4278 = vpop.f32.mrb[0].mxu0
        %v4279 = vadd.f32 0.0, %v4278
        %v4280 = vpop.f32.mrb[0].mxu0
        %4281 = vmatprep.mubr.f32.mxu0 0.0
        %4282 = vmatmul.mubr.f32.gmra.mrb[0].mxu0 %v4102
        %v4283 = vpop.f32.mrb[0].mxu0
        %v4284 = vadd.f32 0.0, %v4283
        %v4285 = vpop.f32.mrb[0].mxu0
        %4286 = vmatprep.mubr.f32.mxu0 0.0
        %4287 = vmatmul.mubr.f32.gmra.mrb[0].mxu0 %v4105
        %v4288 = vpop.f32.mrb[0].mxu0
        %v4289 = vadd.f32 0.0, %v4288
        %v4290 = vpop.f32.mrb[0].mxu0
        %4291 = vmatprep.mubr.f32.mxu0 0.0
        %4292 = vmatmul.mubr.f32.gmra.mrb[0].mxu0 %v4108
        %v4293 = vpop.f32.mrb[0].mxu0
        %v4294 = vadd.f32 0.0, %v4293
        %v4295 = vpop.f32.mrb[0].mxu0
        %4296 = vmatprep.mubr.f32.mxu0 0.0
        %4297 = vmatmul.mubr.f32.gmra.mrb[0].mxu0 %v4111
        %v4298 = vpop.f32.mrb[0].mxu0
        %v4299 = vadd.f32 0.0, %v4298
        %v4300 = vpop.f32.mrb[0].mxu0
        %4301 = vmatprep.mubr.f32.mxu0 0.0
        %4302 = vmatmul.mubr.f32.gmra.mrb[0].mxu0 %v4114
        %v4303 = vpop.f32.mrb[0].mxu0
        %v4304 = vadd.f32 0.0, %v4303
        %v4305 = vpop.f32.mrb[0].mxu0
        %4306 = vmatprep.mubr.f32.mxu0 0.0
        %4307 = vmatmul.mubr.f32.gmra.mrb[0].mxu0 %v4117
        %v4308 = vpop.f32.mrb[0].mxu0
        %v4309 = vadd.f32 0.0, %v4308
        %v4310 = vpop.f32.mrb[0].mxu0
        %4311 = vmatprep.mubr.f32.mxu0 0.0
        %4312 = vmatmul.mubr.f32.gmra.mrb[0].mxu0 %v4120
        %v4313 = vpop.f32.mrb[0].mxu0
        %v4314 = vadd.f32 0.0, %v4313
        %v4315 = vpop.f32.mrb[0].mxu0
        %4316 = vmatprep.mubr.f32.mxu0 0.0
        %4317 = vmatmul.mubr.f32.gmra.mrb[0].mxu0 %v4123
        %v4318 = vpop.f32.mrb[0].mxu0
        %v4319 = vadd.f32 0.0, %v4318
        %v4320 = vpop.f32.mrb[0].mxu0
        %4321 = vmatprep.mubr.f32.mxu0 0.0
        %4322 = vmatmul.mubr.f32.gmra.mrb[0].mxu0 %v4126
        %v4323 = vpop.f32.mrb[0].mxu0
        %v4324 = vadd.f32 0.0, %v4323
        %v4325 = vpop.f32.mrb[0].mxu0
        %4326 = vmatprep.mubr.f32.mxu0 0.0
        %4327 = vmatmul.mubr.f32.gmra.mrb[0].mxu0 %v4129
        %v4328 = vpop.f32.mrb[0].mxu0
        %v4329 = vadd.f32 0.0, %v4328
        %v4330 = vpop.f32.mrb[0].mxu0
        %4331 = vmatprep.mubr.f32.mxu0 0.0
        %4332 = vmatmul.mubr.f32.gmra.mrb[0].mxu0 %v4132
        %v4333 = vpop.f32.mrb[0].mxu0
        %v4334 = vadd.f32 0.0, %v4333
        %v4335 = vpop.f32.mrb[0].mxu0
        %4336 = vmatprep.mubr.f32.mxu0 0.0
        %4337 = vmatmul.mubr.f32.gmra.mrb[0].mxu0 %v4135
        %v4338 = vpop.f32.mrb[0].mxu0
        %v4339 = vadd.f32 0.0, %v4338
        %v4340 = vpop.f32.mrb[0].mxu0
        %4341 = vmatprep.mubr.f32.mxu0 0.0
        %4342 = vmatmul.mubr.f32.gmra.mrb[0].mxu0 %v4138
        %v4343 = vpop.f32.mrb[0].mxu0
        %v4344 = vadd.f32 0.0, %v4343
        %v4345 = vpop.f32.mrb[0].mxu0
        %4346 = vmatprep.mubr.f32.mxu0 0.0
        %4347 = vmatmul.mubr.f32.gmra.mrb[0].mxu0 %v4141
        %v4348 = vpop.f32.mrb[0].mxu0
        %v4349 = vadd.f32 0.0, %v4348
        %v4350 = vpop.f32.mrb[0].mxu0
        %4351 = vmatprep.mubr.f32.mxu0 0.0
        %4352 = vmatmul.mubr.f32.gmra.mrb[0].mxu0 %v4144
        %v4353 = vpop.f32.mrb[0].mxu0
        %v4354 = vadd.f32 0.0, %v4353
        %v4355 = vpop.f32.mrb[0].mxu0
        %4356 = vmatprep.mubr.f32.mxu0 0.0
        %4357 = vmatmul.mubr.f32.gmra.mrb[0].mxu0 %v4147
        %v4358 = vpop.f32.mrb[0].mxu0
        %v4359 = vadd.f32 0.0, %v4358
        %v4360 = vpop.f32.mrb[0].mxu0
        %4361 = vmatprep.mubr.f32.mxu0 0.0
        %4362 = vmatmul.mubr.f32.gmra.mrb[0].mxu0 %v4150
        %v4363 = vpop.f32.mrb[0].mxu0
        %v4364 = vadd.f32 0.0, %v4363
        %v4365 = vpop.f32.mrb[0].mxu0
        %4366 = vmatprep.mubr.f32.mxu0 0.0
        %4367 = vmatmul.mubr.f32.gmra.mrb[0].mxu0 %v4153
        %v4368 = vpop.f32.mrb[0].mxu0
        %v4369 = vadd.f32 0.0, %v4368
        %v4370 = vpop.f32.mrb[0].mxu0
        %4371 = vmatprep.mubr.f32.mxu0 0.0
        %4372 = vmatmul.mubr.f32.gmra.mrb[0].mxu0 %v4156
        %v4373 = vpop.f32.mrb[0].mxu0
        %v4374 = vadd.f32 0.0, %v4373
        %v4375 = vpop.f32.mrb[0].mxu0
        %4376 = vmatprep.mubr.f32.mxu0 0.0
        %4377 = vmatmul.mubr.f32.gmra.mrb[0].mxu0 %v4159
        %v4378 = vpop.f32.mrb[0].mxu0
        %v4379 = vadd.f32 0.0, %v4378
        %v4380 = vpop.f32.mrb[0].mxu0
        %4381 = vmatprep.mubr.f32.mxu0 0.0
        %4382 = vmatmul.mubr.f32.gmra.mrb[0].mxu0 %v4162
        %v4383 = vpop.f32.mrb[0].mxu0
        %v4384 = vadd.f32 0.0, %v4383
        %v4385 = vpop.f32.mrb[0].mxu0
        %4386 = vmatprep.mubr.f32.mxu0 0.0
        %4387 = vmatmul.mubr.f32.gmra.mrb[0].mxu0 %v4165
        %v4388 = vpop.f32.mrb[0].mxu0
        %v4389 = vadd.f32 0.0, %v4388
        %v4390 = vpop.f32.mrb[0].mxu0
        %4391 = vdwg.mxu0
        %4392 = vxpose.xlu0.b32.start [1/16] %v4234, 128
        %4393 = vxpose.xlu0.b32.cont [2/16] %v4239, 128
        %4394 = vxpose.xlu0.b32.cont [3/16] %v4244, 128
        %4395 = vxpose.xlu0.b32.cont [4/16] %v4249, 128
        %4396 = vxpose.xlu0.b32.cont [5/16] %v4254, 128
        %4397 = vxpose.xlu0.b32.cont [6/16] %v4259, 128
        %4398 = vxpose.xlu0.b32.cont [7/16] %v4264, 128
        %4399 = vxpose.xlu0.b32.cont [8/16] %v4269, 128
        %4400 = vxpose.xlu0.b32.cont [9/16] %v4274, 128
        %4401 = vxpose.xlu0.b32.cont [10/16] %v4279, 128
        %4402 = vxpose.xlu0.b32.cont [11/16] %v4284, 128
        %4403 = vxpose.xlu0.b32.cont [12/16] %v4289, 128
        %4404 = vxpose.xlu0.b32.cont [13/16] %v4294, 128
        %4405 = vxpose.xlu0.b32.cont [14/16] %v4299, 128
        %4406 = vxpose.xlu0.b32.cont [15/16] %v4304, 128
        %4407 = vxpose.xlu0.b32.end [16/16] %v4309, 128
        %v4408 = vpop.trf.xlu0
        %v4409 = vpop.trf.xlu0
        %v4410 = vpop.trf.xlu0
        %v4411 = vpop.trf.xlu0
        %v4412 = vpop.trf.xlu0
        %v4413 = vpop.trf.xlu0
        %v4414 = vpop.trf.xlu0
        %v4415 = vpop.trf.xlu0
        %v4416 = vpop.trf.xlu0
        %v4417 = vpop.trf.xlu0
        %v4418 = vpop.trf.xlu0
        %v4419 = vpop.trf.xlu0
        %v4420 = vpop.trf.xlu0
        %v4421 = vpop.trf.xlu0
        %v4422 = vpop.trf.xlu0
        %v4423 = vpop.trf.xlu0
        %4424 = vxpose.xlu0.b32.start [1/16] %v4314, 128
        %4425 = vxpose.xlu0.b32.cont [2/16] %v4319, 128
        %4426 = vxpose.xlu0.b32.cont [3/16] %v4324, 128
        %4427 = vxpose.xlu0.b32.cont [4/16] %v4329, 128
        %4428 = vxpose.xlu0.b32.cont [5/16] %v4334, 128
        %4429 = vxpose.xlu0.b32.cont [6/16] %v4339, 128
        %4430 = vxpose.xlu0.b32.cont [7/16] %v4344, 128
        %4431 = vxpose.xlu0.b32.cont [8/16] %v4349, 128
        %4432 = vxpose.xlu0.b32.cont [9/16] %v4354, 128
        %4433 = vxpose.xlu0.b32.cont [10/16] %v4359, 128
        %4434 = vxpose.xlu0.b32.cont [11/16] %v4364, 128
        %4435 = vxpose.xlu0.b32.cont [12/16] %v4369, 128
        %4436 = vxpose.xlu0.b32.cont [13/16] %v4374, 128
        %4437 = vxpose.xlu0.b32.cont [14/16] %v4379, 128
        %4438 = vxpose.xlu0.b32.cont [15/16] %v4384, 128
        %4439 = vxpose.xlu0.b32.end [16/16] %v4389, 128
        %v4440 = vpop.trf.xlu0
        %v4441 = vpop.trf.xlu0
        %v4442 = vpop.trf.xlu0
        %v4443 = vpop.trf.xlu0
        %v4444 = vpop.trf.xlu0
        %v4445 = vpop.trf.xlu0
        %v4446 = vpop.trf.xlu0
        %v4447 = vpop.trf.xlu0
        %v4448 = vpop.trf.xlu0
        %v4449 = vpop.trf.xlu0
        %v4450 = vpop.trf.xlu0
        %v4451 = vpop.trf.xlu0
        %v4452 = vpop.trf.xlu0
        %v4453 = vpop.trf.xlu0
        %v4454 = vpop.trf.xlu0
        %v4455 = vpop.trf.xlu0
        %v4456 = vadd.f32 %v4408, %v4440
        %4457 = vadd.xlane.f32.xlu0 %v4456
        %v4458 = vpop.xlane.xlu0 %4457
        %v4459 = vmul.f32 %v4458, 0.00390625
        %v4460 = vmul.f32 %v4408, %v4408
        %v4461 = vmul.f32 %v4440, %v4440
        %v4462 = vadd.f32 %v4460, %v4461
        %4463 = vadd.xlane.f32.xlu0 %v4462
        %v4464 = vpop.xlane.xlu0 %4463
        %v4465 = vmul.f32 %v4464, 0.00390625
        %v4466 = vmul.f32 %v4459, %v4459
        %v4467 = vsub.f32 %v4465, %v4466
        %v4468 = vmax.f32 %v4467, 0.0
        %v4469 = vsub.f32 %v4408, %v4459
        %v4470 = vsub.f32 %v4440, %v4459
        %v4471 = vadd.f32 %v4468, 1e-05
        %v4472 = vrsqrt.pop %v4471
        %v4473 = vmul.f32 %v4469, %v4472
        %v4474 = vmul.f32 %v4470, %v4472
        %v4475 = vmul.f32 %v4473, 0.5
        %v4476 = vmul.f32 %v4474, 0.5
        %v4477 = vmul.f32 %v4473, 0.70710677
        %v4478 = vmul.f32 %v4474, 0.70710677
        %v4479 = verf.f32.pop %v4477
        %v4480 = verf.f32.pop %v4478
        %v4481 = vadd.f32 %v4479, 1.0
        %v4482 = vadd.f32 %v4480, 1.0
        %v4483 = vmul.f32 %v4475, %v4481
        %v4484 = vmul.f32 %v4476, %v4482
        %4485 = vst [vmem:[%s163] sm:$0xff] %v4483
        %4486 = vst [vmem:[%s163 + $0x8] sm:$0xff] %v4484
        %s4487 = sand.u32 %s93, 1
        %s4488 = scalar_lea.sflag [#allocation5], %s4487
        %s4489 = sand.u32 %s93, 1
        %s4490 = smul.addr %s4489, 16
        %s4491 = scalar_lea.vmem [#allocation4], %s4490
        // Predicated region
        $region33: #{tpu_custom_call.1} parent=31 // pred_check
          %p4492 = pneg %p103
        $region34: #{tpu_custom_call.1} parent=31 // pred_check_branch
          %4494 = sbr.rel (%p4492) target = $region36
        $region35: #{tpu_custom_call.1} parent=31 // pred_region
          %s4496 = ssub.s32 256, 256
          %4497 = vsyncadd %s4488, %s4496
          %s4498 = smul.addr %s17, 2
          %s4499 = smul.addr %s4498, 128
          %s4500 = scalar_lea.hbm %s3, %s4499
          %s4502 = sshll.u32 %s4491, 4
          %s4503 = int_to_ptr.vmem [resolvable:$true] %s4502
          %4505 = dma.vmem_to_hbm [thread:$0]  %s4503, 256, %s4500, %s4488
        $region36: #{tpu_custom_call.1} parent=31 // pred_fallthru
          _
      $region32: #{tpu_custom_call.1} parent=5 // pred_fallthru
        _
      %p4506 = scmp.le.s32.totalorder 2, %s12
      // Predicated region
      $region37: #{tpu_custom_call.1} parent=5 // pred_check
        %p4507 = pneg %p4506
      $region38: #{tpu_custom_call.1} parent=5 // pred_check_branch
        %4509 = sbr.rel (%p4507) target = $region40
      $region39: #{tpu_custom_call.1} parent=5 // pred_region
        %s4510 = ssub.s32 %s12, 2
        // Predicated region
        $region41: #{tpu_custom_call.1} parent=39 // pred_check
          %p4511 = pneg %p109
        $region42: #{tpu_custom_call.1} parent=39 // pred_check_branch
          %4513 = sbr.rel (%p4511) target = $region44
        $region43: #{tpu_custom_call.1} parent=39 // pred_region
          %s4514 = sand.u32 %s94, 1
          %s4515 = scalar_lea.sflag [#allocation5], %s4514
          %s4516 = sand.u32 %s94, 1
          %s4517 = smul.addr %s4516, 16
          %s4518 = scalar_lea.vmem [#allocation4], %s4517
          %4519 = dma.done %s4515, 256
        $region44: #{tpu_custom_call.1} parent=39 // pred_fallthru
          _
      $region40: #{tpu_custom_call.1} parent=5 // pred_fallthru
        _
    $region6: #{tpu_custom_call.1} parent=1 // loop_footer
      %s16 = sadd.s32 1, %s12
    $region7: #{tpu_custom_call.1} parent=1 // loop_footer_branch
      %11 = sbr.rel target = $region3
    $region8: #{tpu_custom_call.1} parent=1 // loop_exit
      _
    %4520 = vsyncpa [#allocation5], 1
    %s4521 = scalar_lea.sflag [#allocation5], 1
    %4522 = vsyncpa %s4521, 1

</llo_original>
